<compile_context>
chip_gen: v5e
topology: v5e:2x2
jax: 0.10.0
libtpu: 0.0.40
codegen_flags: <defaults>
</compile_context>

<pallas_src>
import functools

import jax
import jax.numpy as jnp
from jax.experimental import pallas as pl
from jax.experimental.pallas import tpu as pltpu

LANE = 128         # TPU lane width
SUB = 8            # sublane granularity
TILE_M_CAP = 256   # rows per grid step on the tiled fallback path
FUSE_M_CAP = 1024  # max padded M for the fully fused single-tile path
BETA = 0.25
BN_EPS = 1e-5
NEG_SLOPE = 0.1
# bf16 inputs double MXU throughput on v6e/v7x; f32 keeps parity with PyTorch.
MXU_DTYPE = jnp.float32


def _round_up(x, m):
    return (x + m - 1) // m * m


def _pick_tile(m_pad, cap=TILE_M_CAP):
    t = min(cap, m_pad)
    while m_pad % t:
        t -= SUB
    return t


# ----------------------------------------------------------------------------
# Pallas kernels
# ----------------------------------------------------------------------------
def _conv_mm_kernel(x_ref, w_ref, b_ref, o_ref, *stat_refs,
                    act, with_stats, m_true, tile_m):
    # (TILE_M, K) @ (K, Np) + (1, Np), f32 accumulation on the MXU,
    # fused bias + activation epilogue, optional per-tile BN partial stats.
    y = jnp.dot(x_ref[...], w_ref[...],
                preferred_element_type=jnp.float32) + b_ref[...]
    if act == "leaky_relu":
        y = jnp.where(y >= 0.0, y, NEG_SLOPE * y)
    elif act == "tanh":
        y = jnp.tanh(y)
    o_ref[...] = y

    if with_stats:
        stat_ref = stat_refs[0]
        n_pad = y.shape[1]
        # Mask rows that are only M-padding so they do not pollute BN stats.
        row = (pl.program_id(0) * tile_m
               + jax.lax.broadcasted_iota(jnp.int32, (tile_m, 1), 0))
        valid = (row < m_true).astype(jnp.float32)            # (TILE_M, 1)
        yv = y * valid
        s = jnp.sum(yv, axis=0, keepdims=True)                # (1, Np)
        ss = jnp.sum(yv * yv, axis=0, keepdims=True)          # (1, Np)
        rows8 = jax.lax.broadcasted_iota(jnp.int32, (SUB, n_pad), 0)
        stat = jnp.where(rows8 == 0, jnp.broadcast_to(s, (SUB, n_pad)),
                         jnp.where(rows8 == 1, jnp.broadcast_to(ss, (SUB, n_pad)),
                                   0.0))
        stat_ref[...] = stat[None]                            # (1, 8, Np)


def _conv_bn_act_kernel(x_ref, w_ref, b_ref, g_ref, bb_ref, o_ref, *,
                        m_true, eps):
    # Fully fused: conv matmul + bias, per-channel batch mean/var (padded rows
    # masked), BatchNorm affine and LeakyReLU, single pass, no HBM round-trip.
    y = jnp.dot(x_ref[...], w_ref[...],
                preferred_element_type=jnp.float32) + b_ref[...]
    m_pad = y.shape[0]
    row = jax.lax.broadcasted_iota(jnp.int32, (m_pad, 1), 0)
    valid = (row < m_true).astype(jnp.float32)                # (Mp, 1)
    yv = y * valid
    inv_m = 1.0 / float(m_true)
    mean = jnp.sum(yv, axis=0, keepdims=True) * inv_m         # (1, Np)
    var = jnp.sum(yv * yv, axis=0, keepdims=True) * inv_m - mean * mean
    scale = g_ref[...] * jax.lax.rsqrt(var + eps)
    shift = bb_ref[...] - mean * scale
    z = y * scale + shift
    o_ref[...] = jnp.where(z >= 0.0, z, NEG_SLOPE * z)


def _affine_act_kernel(x_ref, s_ref, t_ref, o_ref, *, act):
    # x*scale + shift followed by activation (BatchNorm apply, fallback path).
    y = x_ref[...] * s_ref[...] + t_ref[...]
    if act == "leaky_relu":
        y = jnp.where(y >= 0.0, y, NEG_SLOPE * y)
    elif act == "tanh":
        y = jnp.tanh(y)
    o_ref[...] = y


def _prequant_vq_kernel(x_ref, w_ref, b_ref, cb_ref, q_ref, loss_ref, *,
                        m_true, d_true):
    # Fused pre-quant conv matmul + vector quantization + MSE loss.
    x = jnp.dot(x_ref[...], w_ref[...],
                preferred_element_type=jnp.float32) + b_ref[...]   # (Mp, Dp)
    cb = cb_ref[...]                                               # (Kcb, Dp)
    n = x.shape[0]
    k = cb.shape[0]

    # Squared Euclidean distances (same argmin as torch.cdist, which sqrt's).
    x2 = jnp.sum(x * x, axis=-1, keepdims=True)                    # (N, 1)
    c2 = jnp.sum(cb * cb, axis=-1, keepdims=True).T                # (1, K)
    dist = x2 + c2 - 2.0 * jnp.dot(x, cb.T, preferred_element_type=jnp.float32)

    # First-index argmin (torch.argmin tie-breaking) via min + iota.
    min_d = jnp.min(dist, axis=-1, keepdims=True)
    iota = jax.lax.broadcasted_iota(jnp.int32, (n, k), 1)
    idx = jnp.min(jnp.where(dist <= min_d, iota, k), axis=-1, keepdims=True)

    # Gather codebook rows with a one-hot matmul (MXU-friendly gather).
    onehot = (iota == idx).astype(jnp.float32)                     # (N, K)
    q = jnp.dot(onehot, cb, preferred_element_type=jnp.float32)    # (N, Dp)
    q_ref[...] = q

    # mean((quant_input - quantized)^2); mask padded rows, padded cols are 0.
    row = jax.lax.broadcasted_iota(jnp.int32, (n, 1), 0)
    valid = (row < m_true).astype(jnp.float32)
    diff = (x - q) * valid
    sq = diff * diff
    s = jnp.sum(jnp.sum(sq, axis=1, keepdims=True), axis=0, keepdims=True)
    loss_ref[...] = s / float(m_true * d_true)


# ----------------------------------------------------------------------------
# Pallas-call wrappers
# ----------------------------------------------------------------------------
def conv_mm(patches, wmat, bias, *, act, with_stats):
    """Tiled fused matmul: patches(M,K) @ wmat(K,N) + bias, activation, stats."""
    m, k = patches.shape
    _, n = wmat.shape
    n_pad = _round_up(n, LANE)                       # lane-dense output
    tile_m = min(TILE_M_CAP, _round_up(m, SUB))
    m_pad = _round_up(m, tile_m)
    grid_m = m_pad // tile_m

    xq = jnp.pad(patches, ((0, m_pad - m), (0, 0))).astype(MXU_DTYPE)
    wq = jnp.pad(wmat, ((0, 0), (0, n_pad - n))).astype(MXU_DTYPE)
    bq = jnp.pad(bias.reshape(1, n), ((0, 0), (0, n_pad - n))).astype(jnp.float32)

    kern = functools.partial(_conv_mm_kernel, act=act, with_stats=with_stats,
                             m_true=m, tile_m=tile_m)

    in_specs = [
        pl.BlockSpec((tile_m, k), lambda i: (i, 0)),
        pl.BlockSpec((k, n_pad), lambda i: (0, 0)),
        pl.BlockSpec((1, n_pad), lambda i: (0, 0)),
    ]
    y_spec = pl.BlockSpec((tile_m, n_pad), lambda i: (i, 0))
    y_shape = jax.ShapeDtypeStruct((m_pad, n_pad), jnp.float32)

    if with_stats:
        out_specs = (y_spec, pl.BlockSpec((1, SUB, n_pad), lambda i: (i, 0, 0)))
        out_shape = (y_shape,
                     jax.ShapeDtypeStruct((grid_m, SUB, n_pad), jnp.float32))
    else:
        out_specs = y_spec
        out_shape = y_shape

    outs = pl.pallas_call(
        kern,
        grid=(grid_m,),
        in_specs=in_specs,
        out_specs=out_specs,
        out_shape=out_shape,
        compiler_params=pltpu.CompilerParams(
            dimension_semantics=("parallel",)),
    )(xq, wq, bq)

    if with_stats:
        y_pad, stats = outs
        ch_sum = jnp.sum(stats[:, 0, :n], axis=0)      # (N,)
        ch_sqsum = jnp.sum(stats[:, 1, :n], axis=0)    # (N,)
        return y_pad, (ch_sum, ch_sqsum)
    return outs, None


def affine_act(x_pad, scale_pad, shift_pad, act):
    m_pad, n_pad = x_pad.shape
    tile = _pick_tile(m_pad)
    return pl.pallas_call(
        functools.partial(_affine_act_kernel, act=act),
        grid=(m_pad // tile,),
        in_specs=[pl.BlockSpec((tile, n_pad), lambda i: (i, 0)),
                  pl.BlockSpec((1, n_pad), lambda i: (0, 0)),
                  pl.BlockSpec((1, n_pad), lambda i: (0, 0))],
        out_specs=pl.BlockSpec((tile, n_pad), lambda i: (i, 0)),
        out_shape=jax.ShapeDtypeStruct((m_pad, n_pad), jnp.float32),
        compiler_params=pltpu.CompilerParams(
            dimension_semantics=("parallel",)),
    )(x_pad, scale_pad, shift_pad)


# ----------------------------------------------------------------------------
# Conv / conv-transpose glue (im2col = data movement; hot paths are Pallas)
# ----------------------------------------------------------------------------
def _im2col(x_nhwc, kh, kw, stride, pad):
    bsz, h, wd, cin = x_nhwc.shape
    xp = jnp.pad(x_nhwc, ((0, 0), (pad, pad), (pad, pad), (0, 0)))
    ho = (h + 2 * pad - kh) // stride + 1
    wo = (wd + 2 * pad - kw) // stride + 1
    cols = [xp[:, i:i + stride * ho:stride, j:j + stride * wo:stride, :]
            for i in range(kh) for j in range(kw)]
    patches = jnp.concatenate(cols, axis=-1).reshape(bsz * ho * wo, kh * kw * cin)
    return patches, (bsz, ho, wo)


def conv2d(x_nhwc, w, b, stride, pad, act="none"):
    """w: (C_out, C_in, kH, kW) PyTorch layout; fused bias + activation."""
    cout, cin, kh, kw = w.shape
    patches, (bsz, ho, wo) = _im2col(x_nhwc, kh, kw, stride, pad)
    wm = jnp.transpose(w, (2, 3, 1, 0)).reshape(kh * kw * cin, cout)
    y_pad, _ = conv_mm(patches, wm, b, act=act, with_stats=False)
    m = bsz * ho * wo
    return y_pad[:m, :cout].reshape(bsz, ho, wo, cout)


def conv2d_bn_act(x_nhwc, w, b, gamma, beta, stride, pad, eps=BN_EPS):
    """Conv + training-mode BatchNorm2d (batch stats) + LeakyReLU.

    Single fully-fused Pallas call when the whole M axis fits one tile;
    otherwise a tiled conv(+partial stats) pass followed by a BN-apply pass.
    """
    cout, cin, kh, kw = w.shape
    patches, (bsz, ho, wo) = _im2col(x_nhwc, kh, kw, stride, pad)
    wm = jnp.transpose(w, (2, 3, 1, 0)).reshape(kh * kw * cin, cout)
    m, k = patches.shape
    n_pad = _round_up(cout, LANE)
    m_pad = _round_up(m, SUB)

    if m_pad <= FUSE_M_CAP:
        xq = jnp.pad(patches, ((0, m_pad - m), (0, 0))).astype(MXU_DTYPE)
        wq = jnp.pad(wm, ((0, 0), (0, n_pad - cout))).astype(MXU_DTYPE)
        bq = jnp.pad(b.reshape(1, cout),
                     ((0, 0), (0, n_pad - cout))).astype(jnp.float32)
        gq = jnp.pad(gamma.reshape(1, cout),
                     ((0, 0), (0, n_pad - cout))).astype(jnp.float32)
        betq = jnp.pad(beta.reshape(1, cout),
                       ((0, 0), (0, n_pad - cout))).astype(jnp.float32)
        y_pad = pl.pallas_call(
            functools.partial(_conv_bn_act_kernel, m_true=m, eps=eps),
            grid=(1,),
            in_specs=[pl.BlockSpec((m_pad, k), lambda i: (0, 0)),
                      pl.BlockSpec((k, n_pad), lambda i: (0, 0)),
                      pl.BlockSpec((1, n_pad), lambda i: (0, 0)),
                      pl.BlockSpec((1, n_pad), lambda i: (0, 0)),
                      pl.BlockSpec((1, n_pad), lambda i: (0, 0))],
            out_specs=pl.BlockSpec((m_pad, n_pad), lambda i: (0, 0)),
            out_shape=jax.ShapeDtypeStruct((m_pad, n_pad), jnp.float32),
            compiler_params=pltpu.CompilerParams(
                dimension_semantics=("arbitrary",)),
        )(xq, wq, bq, gq, betq)
        return y_pad[:m, :cout].reshape(bsz, ho, wo, cout)

    # Tiled fallback: conv (+ in-kernel BN partial stats) then BN apply + act.
    y_pad, (ch_sum, ch_sqsum) = conv_mm(patches, wm, b, act="none",
                                        with_stats=True)
    mean = ch_sum / m
    var = ch_sqsum / m - mean * mean
    scale = gamma * jax.lax.rsqrt(var + eps)
    shift = beta - mean * scale
    scale_p = jnp.pad(scale.reshape(1, cout), ((0, 0), (0, n_pad - cout)))
    shift_p = jnp.pad(shift.reshape(1, cout), ((0, 0), (0, n_pad - cout)))
    out_pad = affine_act(y_pad, scale_p, shift_p, "leaky_relu")
    return out_pad[:m, :cout].reshape(bsz, ho, wo, cout)


def prequant_vq(x_nhwc, w, b, codebook):
    """Fused pre-quant conv + vector quantization + quantization MSE loss."""
    cout, cin, kh, kw = w.shape            # cout == cb_dim
    patches, (bsz, ho, wo) = _im2col(x_nhwc, kh, kw, 1, 1)
    wm = jnp.transpose(w, (2, 3, 1, 0)).reshape(kh * kw * cin, cout)
    m, k = patches.shape
    m_pad = _round_up(m, SUB)
    d_pad = _round_up(cout, LANE)
    kcb = codebook.shape[0]

    xq = jnp.pad(patches, ((0, m_pad - m), (0, 0))).astype(MXU_DTYPE)
    wq = jnp.pad(wm, ((0, 0), (0, d_pad - cout))).astype(MXU_DTYPE)
    bq = jnp.pad(b.reshape(1, cout), ((0, 0), (0, d_pad - cout))).astype(jnp.float32)
    cbq = jnp.pad(codebook, ((0, 0), (0, d_pad - cout))).astype(jnp.float32)

    q_pad, mse = pl.pallas_call(
        functools.partial(_prequant_vq_kernel, m_true=m, d_true=cout),
        grid=(1,),
        in_specs=[pl.BlockSpec((m_pad, k), lambda i: (0, 0)),
                  pl.BlockSpec((k, d_pad), lambda i: (0, 0)),
                  pl.BlockSpec((1, d_pad), lambda i: (0, 0)),
                  pl.BlockSpec((kcb, d_pad), lambda i: (0, 0))],
        out_specs=(pl.BlockSpec((m_pad, d_pad), lambda i: (0, 0)),
                   pl.BlockSpec((1, 1), lambda i: (0, 0))),
        out_shape=(jax.ShapeDtypeStruct((m_pad, d_pad), jnp.float32),
                   jax.ShapeDtypeStruct((1, 1), jnp.float32)),
        compiler_params=pltpu.CompilerParams(
            dimension_semantics=("arbitrary",)),
    )(xq, wq, bq, cbq)

    q = q_pad[:m, :cout].reshape(bsz, ho, wo, cout)
    return q, mse[0, 0]


def _conv_transpose_as_conv_input(x_nhwc, k, stride, pad, out_pad):
    # Zero-stuff + pad so a stride-1 conv with the flipped kernel is equivalent.
    bsz, h, wd, c = x_nhwc.shape
    hd, wdd = (h - 1) * stride + 1, (wd - 1) * stride + 1
    xd = jnp.zeros((bsz, hd, wdd, c), x_nhwc.dtype)
    xd = xd.at[:, ::stride, ::stride, :].set(x_nhwc)
    p0 = k - 1 - pad
    p1 = k - 1 - pad + out_pad
    return jnp.pad(xd, ((0, 0), (p0, p1), (p0, p1), (0, 0)))


def conv_transpose2d_bn_act(x_nhwc, w_t, b, gamma, beta, stride, pad, out_pad):
    """w_t: (C_in, C_out, kH, kW) PyTorch ConvTranspose2d layout."""
    k = w_t.shape[2]
    xp = _conv_transpose_as_conv_input(x_nhwc, k, stride, pad, out_pad)
    w_conv = jnp.transpose(w_t[:, :, ::-1, ::-1], (1, 0, 2, 3))
    return conv2d_bn_act(xp, w_conv, b, gamma, beta, stride=1, pad=0)


# ----------------------------------------------------------------------------
# VQVAE forward
# ----------------------------------------------------------------------------
def vqvae_forward(x_nchw, params):
    x = jnp.transpose(x_nchw, (0, 2, 3, 1))  # NCHW -> NHWC

    # Encoder (fused conv + BN(batch stats) + LeakyReLU per layer)
    h = conv2d_bn_act(x, params["enc1_w"], params["enc1_b"],
                      params["bn1_g"], params["bn1_b"], stride=2, pad=1)
    h = conv2d_bn_act(h, params["enc2_w"], params["enc2_b"],
                      params["bn2_g"], params["bn2_b"], stride=2, pad=1)

    # Pre-quant conv fused with vector quantization (cdist+argmin+gather+loss)
    q, mse = prequant_vq(h, params["pq_w"], params["pq_b"], params["codebook"])
    # codebook_loss + beta * commitment_loss; forward value is the same MSE.
    quantized_loss = mse + BETA * mse
    # Straight-through estimator: forward value == quantized codebook vectors.

    # Post-quant conv + decoder
    h = conv2d(q, params["postq_w"], params["postq_b"], stride=1, pad=1)
    h = conv_transpose2d_bn_act(h, params["dec1_w"], params["dec1_b"],
                                params["dbn1_g"], params["dbn1_b"], 2, 1, 1)
    h = conv_transpose2d_bn_act(h, params["dec2_w"], params["dec2_b"],
                                params["dbn2_g"], params["dbn2_b"], 2, 1, 1)
    # Final conv with tanh fused into the matmul epilogue (no extra pass).
    out = conv2d(h, params["dec3_w"], params["dec3_b"], stride=1, pad=1,
                 act="tanh")

    return jnp.transpose(out, (0, 3, 1, 2)), quantized_loss  # back to NCHW


# ----------------------------------------------------------------------------
# Deterministic parameter init (shapes from the PyTorch __init__)
# ----------------------------------------------------------------------------
def init_params(key, n_cb_vectors, cb_dim, color_channels):
    enc_dims = [16, 4]
    dec_dims = [4, 16, 32]
    keys = jax.random.split(key, 16)

    def w(k, shape, s=0.1):
        return (jax.random.normal(k, shape, jnp.float32) * s).astype(jnp.float32)

    params = {
        # encoder
        "enc1_w": w(keys[0], (enc_dims[0], color_channels, 3, 3)),
        "enc1_b": jnp.zeros((enc_dims[0],), jnp.float32),
        "bn1_g": jnp.ones((enc_dims[0],), jnp.float32),
        "bn1_b": jnp.zeros((enc_dims[0],), jnp.float32),
        "enc2_w": w(keys[1], (enc_dims[1], enc_dims[0], 3, 3)),
        "enc2_b": jnp.zeros((enc_dims[1],), jnp.float32),
        "bn2_g": jnp.ones((enc_dims[1],), jnp.float32),
        "bn2_b": jnp.zeros((enc_dims[1],), jnp.float32),
        # pre/post quant convs
        "pq_w": w(keys[2], (cb_dim, enc_dims[1], 3, 3)),
        "pq_b": jnp.zeros((cb_dim,), jnp.float32),
        "postq_w": w(keys[3], (dec_dims[0], cb_dim, 3, 3)),
        "postq_b": jnp.zeros((dec_dims[0],), jnp.float32),
        # codebook (nn.Embedding ~ N(0, 1))
        "codebook": w(keys[4], (n_cb_vectors, cb_dim), s=1.0),
        # decoder (ConvTranspose2d weights are (C_in, C_out, kH, kW))
        "dec1_w": w(keys[5], (dec_dims[0], dec_dims[1], 3, 3)),
        "dec1_b": jnp.zeros((dec_dims[1],), jnp.float32),
        "dbn1_g": jnp.ones((dec_dims[1],), jnp.float32),
        "dbn1_b": jnp.zeros((dec_dims[1],), jnp.float32),
        "dec2_w": w(keys[6], (dec_dims[1], dec_dims[2], 3, 3)),
        "dec2_b": jnp.zeros((dec_dims[2],), jnp.float32),
        "dbn2_g": jnp.ones((dec_dims[2],), jnp.float32),
        "dbn2_b": jnp.zeros((dec_dims[2],), jnp.float32),
        "dec3_w": w(keys[7], (color_channels, dec_dims[2], 3, 3)),
        "dec3_b": jnp.zeros((color_channels,), jnp.float32),
    }
    return params


if __name__ == "__main__":
    n_cb_vectors, cb_dim, color_channels = 8, 8, 3
    key = jax.random.PRNGKey(0)
    k_x, k_p = jax.random.split(key)

    params = init_params(k_p, n_cb_vectors, cb_dim, color_channels)
    x = jax.random.normal(k_x, (2, color_channels, 16, 16), jnp.float32)

    fwd = jax.jit(vqvae_forward)
    decoder_output, quantized_loss = fwd(x, params)
    jax.block_until_ready((decoder_output, quantized_loss))

    assert decoder_output.shape == (2, color_channels, 16, 16)
    assert quantized_loss.shape == ()
    print("KERNEL_OK")
</pallas_src>

<mosaic_0001>
module attributes {stable_mosaic.version = 11 : i64} {
  func.func @_conv_bn_act_kernel(%arg0: i32, %arg1: memref<128x27xf32, #tpu.memory_space<vmem>>, %arg2: memref<27x128xf32, #tpu.memory_space<vmem>>, %arg3: memref<1x128xf32, #tpu.memory_space<vmem>>, %arg4: memref<1x128xf32, #tpu.memory_space<vmem>>, %arg5: memref<1x128xf32, #tpu.memory_space<vmem>>, %arg6: memref<128x128xf32, #tpu.memory_space<vmem>>) attributes {dimension_semantics = [#tpu.dimension_semantics<arbitrary>], iteration_bounds = array<i64: 1>, scalar_prefetch = 0 : i64, scratch_operands = 0 : i64, tpu.core_type = #tpu.core_type<tc>, window_params = [{pipeline_mode = #tpu.pipeline_mode<synchronous>, transform_indices = @transform_0, window_bounds = array<i64: 128, 27>}, {pipeline_mode = #tpu.pipeline_mode<synchronous>, transform_indices = @transform_1, window_bounds = array<i64: 27, 128>}, {pipeline_mode = #tpu.pipeline_mode<synchronous>, transform_indices = @transform_2, window_bounds = array<i64: 1, 128>}, {pipeline_mode = #tpu.pipeline_mode<synchronous>, transform_indices = @transform_3, window_bounds = array<i64: 1, 128>}, {pipeline_mode = #tpu.pipeline_mode<synchronous>, transform_indices = @transform_4, window_bounds = array<i64: 1, 128>}, {pipeline_mode = #tpu.pipeline_mode<synchronous>, transform_indices = @transform_5, window_bounds = array<i64: 128, 128>}]} {
    %c0 = arith.constant 0 : index
    %c0_0 = arith.constant 0 : index
    %0 = vector.load %arg1[%c0, %c0_0] : memref<128x27xf32, #tpu.memory_space<vmem>>, vector<128x27xf32>
    %c0_1 = arith.constant 0 : index
    %c0_2 = arith.constant 0 : index
    %1 = vector.load %arg2[%c0_1, %c0_2] : memref<27x128xf32, #tpu.memory_space<vmem>>, vector<27x128xf32>
    %cst = arith.constant dense<0.000000e+00> : vector<128x128xf32>
    %2 = tpu.matmul %0, %1, %cst {dimension_numbers = #tpu.dot_dimension_numbers<[1], [0], [0], [1], [0, 0, 1, 1], [], []>} : vector<128x27xf32>, vector<27x128xf32>, vector<128x128xf32> -> vector<128x128xf32>
    %c0_3 = arith.constant 0 : index
    %c0_4 = arith.constant 0 : index
    %3 = vector.load %arg3[%c0_3, %c0_4] : memref<1x128xf32, #tpu.memory_space<vmem>>, vector<1x128xf32>
    %4 = vector.broadcast %3 : vector<1x128xf32> to vector<128x128xf32>
    %5 = arith.addf %2, %4 : vector<128x128xf32>
    %6 = tpu.iota {dimensions = array<i32: 0>} : vector<128x1xi32>
    %c128_i32 = arith.constant 128 : i32
    %7 = vector.broadcast %c128_i32 : i32 to vector<128x1xi32>
    %8 = arith.cmpi slt, %6, %7 : vector<128x1xi32>
    %9 = arith.extui %8 : vector<128x1xi1> to vector<128x1xi32>
    %10 = arith.sitofp %9 : vector<128x1xi32> to vector<128x1xf32>
    %11 = vector.broadcast %10 : vector<128x1xf32> to vector<128x128xf32>
    %12 = arith.mulf %5, %11 : vector<128x128xf32>
    %cst_5 = arith.constant dense<0.000000e+00> : vector<128xf32>
    %13 = vector.multi_reduction <add>, %12, %cst_5 [0] : vector<128x128xf32> to vector<128xf32>
    %14 = vector.shape_cast %13 : vector<128xf32> to vector<1x128xf32>
    %cst_6 = arith.constant 7.812500e-03 : f32
    %15 = vector.broadcast %cst_6 : f32 to vector<1x128xf32>
    %16 = arith.mulf %14, %15 : vector<1x128xf32>
    %17 = arith.mulf %12, %12 : vector<128x128xf32>
    %cst_7 = arith.constant dense<0.000000e+00> : vector<128xf32>
    %18 = vector.multi_reduction <add>, %17, %cst_7 [0] : vector<128x128xf32> to vector<128xf32>
    %19 = vector.shape_cast %18 : vector<128xf32> to vector<1x128xf32>
    %cst_8 = arith.constant 7.812500e-03 : f32
    %20 = vector.broadcast %cst_8 : f32 to vector<1x128xf32>
    %21 = arith.mulf %19, %20 : vector<1x128xf32>
    %22 = arith.mulf %16, %16 : vector<1x128xf32>
    %23 = arith.subf %21, %22 : vector<1x128xf32>
    %c0_9 = arith.constant 0 : index
    %c0_10 = arith.constant 0 : index
    %24 = vector.load %arg4[%c0_9, %c0_10] : memref<1x128xf32, #tpu.memory_space<vmem>>, vector<1x128xf32>
    %cst_11 = arith.constant 9.99999974E-6 : f32
    %25 = vector.broadcast %cst_11 : f32 to vector<1x128xf32>
    %26 = arith.addf %23, %25 : vector<1x128xf32>
    %27 = math.rsqrt %26 : vector<1x128xf32>
    %28 = arith.mulf %24, %27 : vector<1x128xf32>
    %c0_12 = arith.constant 0 : index
    %c0_13 = arith.constant 0 : index
    %29 = vector.load %arg5[%c0_12, %c0_13] : memref<1x128xf32, #tpu.memory_space<vmem>>, vector<1x128xf32>
    %30 = arith.mulf %16, %28 : vector<1x128xf32>
    %31 = arith.subf %29, %30 : vector<1x128xf32>
    %32 = vector.broadcast %28 : vector<1x128xf32> to vector<128x128xf32>
    %33 = arith.mulf %5, %32 : vector<128x128xf32>
    %34 = vector.broadcast %31 : vector<1x128xf32> to vector<128x128xf32>
    %35 = arith.addf %33, %34 : vector<128x128xf32>
    %cst_14 = arith.constant 0.000000e+00 : f32
    %36 = vector.broadcast %cst_14 : f32 to vector<128x128xf32>
    %37 = arith.cmpf oge, %35, %36 : vector<128x128xf32>
    %cst_15 = arith.constant 1.000000e-01 : f32
    %38 = vector.broadcast %cst_15 : f32 to vector<128x128xf32>
    %39 = arith.mulf %38, %35 : vector<128x128xf32>
    %40 = arith.select %37, %35, %39 : vector<128x128xi1>, vector<128x128xf32>
    %c0_16 = arith.constant 0 : index
    %c0_17 = arith.constant 0 : index
    %41 = vector.load %arg6[%c0_16, %c0_17] : memref<128x128xf32, #tpu.memory_space<vmem>>, vector<128x128xf32>
    tpu.vector_store %arg6[%c0_16, %c0_17], %40 {strides = array<i32>} : memref<128x128xf32, #tpu.memory_space<vmem>>, vector<128x128xf32>,
    return
  }
  func.func @transform_0(%arg0: i32) -> (i32, i32) {
    %c0_i32 = arith.constant 0 : i32
    %c0_i32_0 = arith.constant 0 : i32
    %c0_i32_1 = arith.constant 0 : i32
    return %c0_i32, %c0_i32_0 : i32, i32
  }
  func.func @transform_1(%arg0: i32) -> (i32, i32) {
    %c0_i32 = arith.constant 0 : i32
    %c0_i32_0 = arith.constant 0 : i32
    %c0_i32_1 = arith.constant 0 : i32
    return %c0_i32, %c0_i32_0 : i32, i32
  }
  func.func @transform_2(%arg0: i32) -> (i32, i32) {
    %c0_i32 = arith.constant 0 : i32
    %c0_i32_0 = arith.constant 0 : i32
    %c0_i32_1 = arith.constant 0 : i32
    return %c0_i32, %c0_i32_0 : i32, i32
  }
  func.func @transform_3(%arg0: i32) -> (i32, i32) {
    %c0_i32 = arith.constant 0 : i32
    %c0_i32_0 = arith.constant 0 : i32
    %c0_i32_1 = arith.constant 0 : i32
    return %c0_i32, %c0_i32_0 : i32, i32
  }
  func.func @transform_4(%arg0: i32) -> (i32, i32) {
    %c0_i32 = arith.constant 0 : i32
    %c0_i32_0 = arith.constant 0 : i32
    %c0_i32_1 = arith.constant 0 : i32
    return %c0_i32, %c0_i32_0 : i32, i32
  }
  func.func @transform_5(%arg0: i32) -> (i32, i32) {
    %c0_i32 = arith.constant 0 : i32
    %c0_i32_0 = arith.constant 0 : i32
    %c0_i32_1 = arith.constant 0 : i32
    return %c0_i32, %c0_i32_0 : i32, i32
  }
}

module attributes {stable_mosaic.version = 11 : i64} {
  func.func @_conv_bn_act_kernel(%arg0: i32, %arg1: memref<32x144xf32, #tpu.memory_space<vmem>>, %arg2: memref<144x128xf32, #tpu.memory_space<vmem>>, %arg3: memref<1x128xf32, #tpu.memory_space<vmem>>, %arg4: memref<1x128xf32, #tpu.memory_space<vmem>>, %arg5: memref<1x128xf32, #tpu.memory_space<vmem>>, %arg6: memref<32x128xf32, #tpu.memory_space<vmem>>) attributes {dimension_semantics = [#tpu.dimension_semantics<arbitrary>], iteration_bounds = array<i64: 1>, scalar_prefetch = 0 : i64, scratch_operands = 0 : i64, tpu.core_type = #tpu.core_type<tc>, window_params = [{pipeline_mode = #tpu.pipeline_mode<synchronous>, transform_indices = @transform_0, window_bounds = array<i64: 32, 144>}, {pipeline_mode = #tpu.pipeline_mode<synchronous>, transform_indices = @transform_1, window_bounds = array<i64: 144, 128>}, {pipeline_mode = #tpu.pipeline_mode<synchronous>, transform_indices = @transform_2, window_bounds = array<i64: 1, 128>}, {pipeline_mode = #tpu.pipeline_mode<synchronous>, transform_indices = @transform_3, window_bounds = array<i64: 1, 128>}, {pipeline_mode = #tpu.pipeline_mode<synchronous>, transform_indices = @transform_4, window_bounds = array<i64: 1, 128>}, {pipeline_mode = #tpu.pipeline_mode<synchronous>, transform_indices = @transform_5, window_bounds = array<i64: 32, 128>}]} {
    %c0 = arith.constant 0 : index
    %c0_0 = arith.constant 0 : index
    %0 = vector.load %arg1[%c0, %c0_0] : memref<32x144xf32, #tpu.memory_space<vmem>>, vector<32x144xf32>
    %c0_1 = arith.constant 0 : index
    %c0_2 = arith.constant 0 : index
    %1 = vector.load %arg2[%c0_1, %c0_2] : memref<144x128xf32, #tpu.memory_space<vmem>>, vector<144x128xf32>
    %cst = arith.constant dense<0.000000e+00> : vector<32x128xf32>
    %2 = tpu.matmul %0, %1, %cst {dimension_numbers = #tpu.dot_dimension_numbers<[1], [0], [0], [1], [0, 0, 1, 1], [], []>} : vector<32x144xf32>, vector<144x128xf32>, vector<32x128xf32> -> vector<32x128xf32>
    %c0_3 = arith.constant 0 : index
    %c0_4 = arith.constant 0 : index
    %3 = vector.load %arg3[%c0_3, %c0_4] : memref<1x128xf32, #tpu.memory_space<vmem>>, vector<1x128xf32>
    %4 = vector.broadcast %3 : vector<1x128xf32> to vector<32x128xf32>
    %5 = arith.addf %2, %4 : vector<32x128xf32>
    %6 = tpu.iota {dimensions = array<i32: 0>} : vector<32x1xi32>
    %c32_i32 = arith.constant 32 : i32
    %7 = vector.broadcast %c32_i32 : i32 to vector<32x1xi32>
    %8 = arith.cmpi slt, %6, %7 : vector<32x1xi32>
    %9 = arith.extui %8 : vector<32x1xi1> to vector<32x1xi32>
    %10 = arith.sitofp %9 : vector<32x1xi32> to vector<32x1xf32>
    %11 = vector.broadcast %10 : vector<32x1xf32> to vector<32x128xf32>
    %12 = arith.mulf %5, %11 : vector<32x128xf32>
    %cst_5 = arith.constant dense<0.000000e+00> : vector<128xf32>
    %13 = vector.multi_reduction <add>, %12, %cst_5 [0] : vector<32x128xf32> to vector<128xf32>
    %14 = vector.shape_cast %13 : vector<128xf32> to vector<1x128xf32>
    %cst_6 = arith.constant 3.125000e-02 : f32
    %15 = vector.broadcast %cst_6 : f32 to vector<1x128xf32>
    %16 = arith.mulf %14, %15 : vector<1x128xf32>
    %17 = arith.mulf %12, %12 : vector<32x128xf32>
    %cst_7 = arith.constant dense<0.000000e+00> : vector<128xf32>
    %18 = vector.multi_reduction <add>, %17, %cst_7 [0] : vector<32x128xf32> to vector<128xf32>
    %19 = vector.shape_cast %18 : vector<128xf32> to vector<1x128xf32>
    %cst_8 = arith.constant 3.125000e-02 : f32
    %20 = vector.broadcast %cst_8 : f32 to vector<1x128xf32>
    %21 = arith.mulf %19, %20 : vector<1x128xf32>
    %22 = arith.mulf %16, %16 : vector<1x128xf32>
    %23 = arith.subf %21, %22 : vector<1x128xf32>
    %c0_9 = arith.constant 0 : index
    %c0_10 = arith.constant 0 : index
    %24 = vector.load %arg4[%c0_9, %c0_10] : memref<1x128xf32, #tpu.memory_space<vmem>>, vector<1x128xf32>
    %cst_11 = arith.constant 9.99999974E-6 : f32
    %25 = vector.broadcast %cst_11 : f32 to vector<1x128xf32>
    %26 = arith.addf %23, %25 : vector<1x128xf32>
    %27 = math.rsqrt %26 : vector<1x128xf32>
    %28 = arith.mulf %24, %27 : vector<1x128xf32>
    %c0_12 = arith.constant 0 : index
    %c0_13 = arith.constant 0 : index
    %29 = vector.load %arg5[%c0_12, %c0_13] : memref<1x128xf32, #tpu.memory_space<vmem>>, vector<1x128xf32>
    %30 = arith.mulf %16, %28 : vector<1x128xf32>
    %31 = arith.subf %29, %30 : vector<1x128xf32>
    %32 = vector.broadcast %28 : vector<1x128xf32> to vector<32x128xf32>
    %33 = arith.mulf %5, %32 : vector<32x128xf32>
    %34 = vector.broadcast %31 : vector<1x128xf32> to vector<32x128xf32>
    %35 = arith.addf %33, %34 : vector<32x128xf32>
    %cst_14 = arith.constant 0.000000e+00 : f32
    %36 = vector.broadcast %cst_14 : f32 to vector<32x128xf32>
    %37 = arith.cmpf oge, %35, %36 : vector<32x128xf32>
    %cst_15 = arith.constant 1.000000e-01 : f32
    %38 = vector.broadcast %cst_15 : f32 to vector<32x128xf32>
    %39 = arith.mulf %38, %35 : vector<32x128xf32>
    %40 = arith.select %37, %35, %39 : vector<32x128xi1>, vector<32x128xf32>
    %c0_16 = arith.constant 0 : index
    %c0_17 = arith.constant 0 : index
    %41 = vector.load %arg6[%c0_16, %c0_17] : memref<32x128xf32, #tpu.memory_space<vmem>>, vector<32x128xf32>
    tpu.vector_store %arg6[%c0_16, %c0_17], %40 {strides = array<i32>} : memref<32x128xf32, #tpu.memory_space<vmem>>, vector<32x128xf32>,
    return
  }
  func.func @transform_0(%arg0: i32) -> (i32, i32) {
    %c0_i32 = arith.constant 0 : i32
    %c0_i32_0 = arith.constant 0 : i32
    %c0_i32_1 = arith.constant 0 : i32
    return %c0_i32, %c0_i32_0 : i32, i32
  }
  func.func @transform_1(%arg0: i32) -> (i32, i32) {
    %c0_i32 = arith.constant 0 : i32
    %c0_i32_0 = arith.constant 0 : i32
    %c0_i32_1 = arith.constant 0 : i32
    return %c0_i32, %c0_i32_0 : i32, i32
  }
  func.func @transform_2(%arg0: i32) -> (i32, i32) {
    %c0_i32 = arith.constant 0 : i32
    %c0_i32_0 = arith.constant 0 : i32
    %c0_i32_1 = arith.constant 0 : i32
    return %c0_i32, %c0_i32_0 : i32, i32
  }
  func.func @transform_3(%arg0: i32) -> (i32, i32) {
    %c0_i32 = arith.constant 0 : i32
    %c0_i32_0 = arith.constant 0 : i32
    %c0_i32_1 = arith.constant 0 : i32
    return %c0_i32, %c0_i32_0 : i32, i32
  }
  func.func @transform_4(%arg0: i32) -> (i32, i32) {
    %c0_i32 = arith.constant 0 : i32
    %c0_i32_0 = arith.constant 0 : i32
    %c0_i32_1 = arith.constant 0 : i32
    return %c0_i32, %c0_i32_0 : i32, i32
  }
  func.func @transform_5(%arg0: i32) -> (i32, i32) {
    %c0_i32 = arith.constant 0 : i32
    %c0_i32_0 = arith.constant 0 : i32
    %c0_i32_1 = arith.constant 0 : i32
    return %c0_i32, %c0_i32_0 : i32, i32
  }
}

module attributes {stable_mosaic.version = 11 : i64} {
  func.func @_prequant_vq_kernel(%arg0: i32, %arg1: memref<32x36xf32, #tpu.memory_space<vmem>>, %arg2: memref<36x128xf32, #tpu.memory_space<vmem>>, %arg3: memref<1x128xf32, #tpu.memory_space<vmem>>, %arg4: memref<8x128xf32, #tpu.memory_space<vmem>>, %arg5: memref<32x128xf32, #tpu.memory_space<vmem>>, %arg6: memref<1x1xf32, #tpu.memory_space<vmem>>) attributes {dimension_semantics = [#tpu.dimension_semantics<arbitrary>], iteration_bounds = array<i64: 1>, scalar_prefetch = 0 : i64, scratch_operands = 0 : i64, tpu.core_type = #tpu.core_type<tc>, window_params = [{pipeline_mode = #tpu.pipeline_mode<synchronous>, transform_indices = @transform_0, window_bounds = array<i64: 32, 36>}, {pipeline_mode = #tpu.pipeline_mode<synchronous>, transform_indices = @transform_1, window_bounds = array<i64: 36, 128>}, {pipeline_mode = #tpu.pipeline_mode<synchronous>, transform_indices = @transform_2, window_bounds = array<i64: 1, 128>}, {pipeline_mode = #tpu.pipeline_mode<synchronous>, transform_indices = @transform_3, window_bounds = array<i64: 8, 128>}, {pipeline_mode = #tpu.pipeline_mode<synchronous>, transform_indices = @transform_4, window_bounds = array<i64: 32, 128>}, {pipeline_mode = #tpu.pipeline_mode<synchronous>, transform_indices = @transform_5, window_bounds = array<i64: 1, 1>}]} {
    %c0 = arith.constant 0 : index
    %c0_0 = arith.constant 0 : index
    %0 = vector.load %arg1[%c0, %c0_0] : memref<32x36xf32, #tpu.memory_space<vmem>>, vector<32x36xf32>
    %c0_1 = arith.constant 0 : index
    %c0_2 = arith.constant 0 : index
    %1 = vector.load %arg2[%c0_1, %c0_2] : memref<36x128xf32, #tpu.memory_space<vmem>>, vector<36x128xf32>
    %cst = arith.constant dense<0.000000e+00> : vector<32x128xf32>
    %2 = tpu.matmul %0, %1, %cst {dimension_numbers = #tpu.dot_dimension_numbers<[1], [0], [0], [1], [0, 0, 1, 1], [], []>} : vector<32x36xf32>, vector<36x128xf32>, vector<32x128xf32> -> vector<32x128xf32>
    %c0_3 = arith.constant 0 : index
    %c0_4 = arith.constant 0 : index
    %3 = vector.load %arg3[%c0_3, %c0_4] : memref<1x128xf32, #tpu.memory_space<vmem>>, vector<1x128xf32>
    %4 = vector.broadcast %3 : vector<1x128xf32> to vector<32x128xf32>
    %5 = arith.addf %2, %4 : vector<32x128xf32>
    %c0_5 = arith.constant 0 : index
    %c0_6 = arith.constant 0 : index
    %6 = vector.load %arg4[%c0_5, %c0_6] : memref<8x128xf32, #tpu.memory_space<vmem>>, vector<8x128xf32>
    %7 = arith.mulf %5, %5 : vector<32x128xf32>
    %cst_7 = arith.constant dense<0.000000e+00> : vector<32xf32>
    %8 = vector.multi_reduction <add>, %7, %cst_7 [1] : vector<32x128xf32> to vector<32xf32>
    %9 = vector.shape_cast %8 : vector<32xf32> to vector<32x1xf32>
    %10 = arith.mulf %6, %6 : vector<8x128xf32>
    %cst_8 = arith.constant dense<0.000000e+00> : vector<8xf32>
    %11 = vector.multi_reduction <add>, %10, %cst_8 [1] : vector<8x128xf32> to vector<8xf32>
    %12 = vector.shape_cast %11 : vector<8xf32> to vector<8x1xf32>
    %13 = tpu.transpose %12, [1, 0] : vector<8x1xf32> -> vector<1x8xf32>
    %14 = vector.broadcast %9 : vector<32x1xf32> to vector<32x8xf32>
    %15 = vector.broadcast %13 : vector<1x8xf32> to vector<32x8xf32>
    %16 = arith.addf %14, %15 : vector<32x8xf32>
    %17 = tpu.transpose %6, [1, 0] : vector<8x128xf32> -> vector<128x8xf32>
    %cst_9 = arith.constant dense<0.000000e+00> : vector<32x8xf32>
    %18 = tpu.matmul %5, %17, %cst_9 {dimension_numbers = #tpu.dot_dimension_numbers<[1], [0], [0], [1], [0, 0, 1, 1], [], []>} : vector<32x128xf32>, vector<128x8xf32>, vector<32x8xf32> -> vector<32x8xf32>
    %cst_10 = arith.constant 2.000000e+00 : f32
    %19 = vector.broadcast %cst_10 : f32 to vector<32x8xf32>
    %20 = arith.mulf %19, %18 : vector<32x8xf32>
    %21 = arith.subf %16, %20 : vector<32x8xf32>
    %cst_11 = arith.constant dense<0x7F800000> : vector<32xf32>
    %22 = vector.multi_reduction <minimumf>, %21, %cst_11 [1] : vector<32x8xf32> to vector<32xf32>
    %23 = vector.shape_cast %22 : vector<32xf32> to vector<32x1xf32>
    %24 = tpu.iota {dimensions = array<i32: 1>} : vector<32x8xi32>
    %25 = vector.broadcast %23 : vector<32x1xf32> to vector<32x8xf32>
    %26 = arith.cmpf ole, %21, %25 : vector<32x8xf32>
    %c8_i32 = arith.constant 8 : i32
    %27 = vector.broadcast %c8_i32 : i32 to vector<32x8xi32>
    %28 = arith.select %26, %24, %27 : vector<32x8xi1>, vector<32x8xi32>
    %cst_12 = arith.constant dense<2147483647> : vector<32xi32>
    %29 = vector.multi_reduction <minsi>, %28, %cst_12 [1] : vector<32x8xi32> to vector<32xi32>
    %30 = vector.shape_cast %29 : vector<32xi32> to vector<32x1xi32>
    %31 = vector.broadcast %30 : vector<32x1xi32> to vector<32x8xi32>
    %32 = arith.cmpi eq, %24, %31 : vector<32x8xi32>
    %33 = arith.extui %32 : vector<32x8xi1> to vector<32x8xi32>
    %34 = arith.sitofp %33 : vector<32x8xi32> to vector<32x8xf32>
    %cst_13 = arith.constant dense<0.000000e+00> : vector<32x128xf32>
    %35 = tpu.matmul %34, %6, %cst_13 {dimension_numbers = #tpu.dot_dimension_numbers<[1], [0], [0], [1], [0, 0, 1, 1], [], []>} : vector<32x8xf32>, vector<8x128xf32>, vector<32x128xf32> -> vector<32x128xf32>
    %c0_14 = arith.constant 0 : index
    %c0_15 = arith.constant 0 : index
    %36 = vector.load %arg5[%c0_14, %c0_15] : memref<32x128xf32, #tpu.memory_space<vmem>>, vector<32x128xf32>
    tpu.vector_store %arg5[%c0_14, %c0_15], %35 {strides = array<i32>} : memref<32x128xf32, #tpu.memory_space<vmem>>, vector<32x128xf32>,
    %37 = tpu.iota {dimensions = array<i32: 0>} : vector<32x1xi32>
    %c32_i32 = arith.constant 32 : i32
    %38 = vector.broadcast %c32_i32 : i32 to vector<32x1xi32>
    %39 = arith.cmpi slt, %37, %38 : vector<32x1xi32>
    %40 = arith.extui %39 : vector<32x1xi1> to vector<32x1xi32>
    %41 = arith.sitofp %40 : vector<32x1xi32> to vector<32x1xf32>
    %42 = arith.subf %5, %35 : vector<32x128xf32>
    %43 = vector.broadcast %41 : vector<32x1xf32> to vector<32x128xf32>
    %44 = arith.mulf %42, %43 : vector<32x128xf32>
    %45 = arith.mulf %44, %44 : vector<32x128xf32>
    %cst_16 = arith.constant dense<0.000000e+00> : vector<32xf32>
    %46 = vector.multi_reduction <add>, %45, %cst_16 [1] : vector<32x128xf32> to vector<32xf32>
    %47 = vector.shape_cast %46 : vector<32xf32> to vector<32x1xf32>
    %cst_17 = arith.constant dense<0.000000e+00> : vector<1xf32>
    %48 = vector.multi_reduction <add>, %47, %cst_17 [0] : vector<32x1xf32> to vector<1xf32>
    %49 = vector.shape_cast %48 : vector<1xf32> to vector<1x1xf32>
    %cst_18 = arith.constant 2.560000e+02 : f32
    %50 = vector.broadcast %cst_18 : f32 to vector<1x1xf32>
    %51 = arith.divf %49, %50 : vector<1x1xf32>
    %c0_19 = arith.constant 0 : index
    %c0_20 = arith.constant 0 : index
    %52 = vector.load %arg6[%c0_19, %c0_20] : memref<1x1xf32, #tpu.memory_space<vmem>>, vector<1x1xf32>
    tpu.vector_store %arg6[%c0_19, %c0_20], %51 {strides = array<i32>} : memref<1x1xf32, #tpu.memory_space<vmem>>, vector<1x1xf32>,
    return
  }
  func.func @transform_0(%arg0: i32) -> (i32, i32) {
    %c0_i32 = arith.constant 0 : i32
    %c0_i32_0 = arith.constant 0 : i32
    %c0_i32_1 = arith.constant 0 : i32
    return %c0_i32, %c0_i32_0 : i32, i32
  }
  func.func @transform_1(%arg0: i32) -> (i32, i32) {
    %c0_i32 = arith.constant 0 : i32
    %c0_i32_0 = arith.constant 0 : i32
    %c0_i32_1 = arith.constant 0 : i32
    return %c0_i32, %c0_i32_0 : i32, i32
  }
  func.func @transform_2(%arg0: i32) -> (i32, i32) {
    %c0_i32 = arith.constant 0 : i32
    %c0_i32_0 = arith.constant 0 : i32
    %c0_i32_1 = arith.constant 0 : i32
    return %c0_i32, %c0_i32_0 : i32, i32
  }
  func.func @transform_3(%arg0: i32) -> (i32, i32) {
    %c0_i32 = arith.constant 0 : i32
    %c0_i32_0 = arith.constant 0 : i32
    %c0_i32_1 = arith.constant 0 : i32
    return %c0_i32, %c0_i32_0 : i32, i32
  }
  func.func @transform_4(%arg0: i32) -> (i32, i32) {
    %c0_i32 = arith.constant 0 : i32
    %c0_i32_0 = arith.constant 0 : i32
    %c0_i32_1 = arith.constant 0 : i32
    return %c0_i32, %c0_i32_0 : i32, i32
  }
  func.func @transform_5(%arg0: i32) -> (i32, i32) {
    %c0_i32 = arith.constant 0 : i32
    %c0_i32_0 = arith.constant 0 : i32
    %c0_i32_1 = arith.constant 0 : i32
    return %c0_i32, %c0_i32_0 : i32, i32
  }
}

module attributes {stable_mosaic.version = 11 : i64} {
  func.func @_conv_mm_kernel(%arg0: i32, %arg1: memref<32x72xf32, #tpu.memory_space<vmem>>, %arg2: memref<72x128xf32, #tpu.memory_space<vmem>>, %arg3: memref<1x128xf32, #tpu.memory_space<vmem>>, %arg4: memref<32x128xf32, #tpu.memory_space<vmem>>) attributes {dimension_semantics = [#tpu.dimension_semantics<parallel>], iteration_bounds = array<i64: 1>, scalar_prefetch = 0 : i64, scratch_operands = 0 : i64, tpu.core_type = #tpu.core_type<tc>, window_params = [{transform_indices = @transform_0, window_bounds = array<i64: 32, 72>}, {pipeline_mode = #tpu.pipeline_mode<synchronous>, transform_indices = @transform_1, window_bounds = array<i64: 72, 128>}, {pipeline_mode = #tpu.pipeline_mode<synchronous>, transform_indices = @transform_2, window_bounds = array<i64: 1, 128>}, {transform_indices = @transform_3, window_bounds = array<i64: 32, 128>}]} {
    %c0 = arith.constant 0 : index
    %c0_0 = arith.constant 0 : index
    %0 = vector.load %arg1[%c0, %c0_0] : memref<32x72xf32, #tpu.memory_space<vmem>>, vector<32x72xf32>
    %c0_1 = arith.constant 0 : index
    %c0_2 = arith.constant 0 : index
    %1 = vector.load %arg2[%c0_1, %c0_2] : memref<72x128xf32, #tpu.memory_space<vmem>>, vector<72x128xf32>
    %cst = arith.constant dense<0.000000e+00> : vector<32x128xf32>
    %2 = tpu.matmul %0, %1, %cst {dimension_numbers = #tpu.dot_dimension_numbers<[1], [0], [0], [1], [0, 0, 1, 1], [], []>} : vector<32x72xf32>, vector<72x128xf32>, vector<32x128xf32> -> vector<32x128xf32>
    %c0_3 = arith.constant 0 : index
    %c0_4 = arith.constant 0 : index
    %3 = vector.load %arg3[%c0_3, %c0_4] : memref<1x128xf32, #tpu.memory_space<vmem>>, vector<1x128xf32>
    %4 = vector.broadcast %3 : vector<1x128xf32> to vector<32x128xf32>
    %5 = arith.addf %2, %4 : vector<32x128xf32>
    %c0_5 = arith.constant 0 : index
    %c0_6 = arith.constant 0 : index
    %6 = vector.load %arg4[%c0_5, %c0_6] : memref<32x128xf32, #tpu.memory_space<vmem>>, vector<32x128xf32>
    tpu.vector_store %arg4[%c0_5, %c0_6], %5 {strides = array<i32>} : memref<32x128xf32, #tpu.memory_space<vmem>>, vector<32x128xf32>,
    return
  }
  func.func @transform_0(%arg0: i32) -> (i32, i32) {
    %c0_i32 = arith.constant 0 : i32
    %c0_i32_0 = arith.constant 0 : i32
    return %arg0, %c0_i32 : i32, i32
  }
  func.func @transform_1(%arg0: i32) -> (i32, i32) {
    %c0_i32 = arith.constant 0 : i32
    %c0_i32_0 = arith.constant 0 : i32
    %c0_i32_1 = arith.constant 0 : i32
    return %c0_i32, %c0_i32_0 : i32, i32
  }
  func.func @transform_2(%arg0: i32) -> (i32, i32) {
    %c0_i32 = arith.constant 0 : i32
    %c0_i32_0 = arith.constant 0 : i32
    %c0_i32_1 = arith.constant 0 : i32
    return %c0_i32, %c0_i32_0 : i32, i32
  }
  func.func @transform_3(%arg0: i32) -> (i32, i32) {
    %c0_i32 = arith.constant 0 : i32
    %c0_i32_0 = arith.constant 0 : i32
    return %arg0, %c0_i32 : i32, i32
  }
}

module attributes {stable_mosaic.version = 11 : i64} {
  func.func @_conv_bn_act_kernel(%arg0: i32, %arg1: memref<128x36xf32, #tpu.memory_space<vmem>>, %arg2: memref<36x128xf32, #tpu.memory_space<vmem>>, %arg3: memref<1x128xf32, #tpu.memory_space<vmem>>, %arg4: memref<1x128xf32, #tpu.memory_space<vmem>>, %arg5: memref<1x128xf32, #tpu.memory_space<vmem>>, %arg6: memref<128x128xf32, #tpu.memory_space<vmem>>) attributes {dimension_semantics = [#tpu.dimension_semantics<arbitrary>], iteration_bounds = array<i64: 1>, scalar_prefetch = 0 : i64, scratch_operands = 0 : i64, tpu.core_type = #tpu.core_type<tc>, window_params = [{pipeline_mode = #tpu.pipeline_mode<synchronous>, transform_indices = @transform_0, window_bounds = array<i64: 128, 36>}, {pipeline_mode = #tpu.pipeline_mode<synchronous>, transform_indices = @transform_1, window_bounds = array<i64: 36, 128>}, {pipeline_mode = #tpu.pipeline_mode<synchronous>, transform_indices = @transform_2, window_bounds = array<i64: 1, 128>}, {pipeline_mode = #tpu.pipeline_mode<synchronous>, transform_indices = @transform_3, window_bounds = array<i64: 1, 128>}, {pipeline_mode = #tpu.pipeline_mode<synchronous>, transform_indices = @transform_4, window_bounds = array<i64: 1, 128>}, {pipeline_mode = #tpu.pipeline_mode<synchronous>, transform_indices = @transform_5, window_bounds = array<i64: 128, 128>}]} {
    %c0 = arith.constant 0 : index
    %c0_0 = arith.constant 0 : index
    %0 = vector.load %arg1[%c0, %c0_0] : memref<128x36xf32, #tpu.memory_space<vmem>>, vector<128x36xf32>
    %c0_1 = arith.constant 0 : index
    %c0_2 = arith.constant 0 : index
    %1 = vector.load %arg2[%c0_1, %c0_2] : memref<36x128xf32, #tpu.memory_space<vmem>>, vector<36x128xf32>
    %cst = arith.constant dense<0.000000e+00> : vector<128x128xf32>
    %2 = tpu.matmul %0, %1, %cst {dimension_numbers = #tpu.dot_dimension_numbers<[1], [0], [0], [1], [0, 0, 1, 1], [], []>} : vector<128x36xf32>, vector<36x128xf32>, vector<128x128xf32> -> vector<128x128xf32>
    %c0_3 = arith.constant 0 : index
    %c0_4 = arith.constant 0 : index
    %3 = vector.load %arg3[%c0_3, %c0_4] : memref<1x128xf32, #tpu.memory_space<vmem>>, vector<1x128xf32>
    %4 = vector.broadcast %3 : vector<1x128xf32> to vector<128x128xf32>
    %5 = arith.addf %2, %4 : vector<128x128xf32>
    %6 = tpu.iota {dimensions = array<i32: 0>} : vector<128x1xi32>
    %c128_i32 = arith.constant 128 : i32
    %7 = vector.broadcast %c128_i32 : i32 to vector<128x1xi32>
    %8 = arith.cmpi slt, %6, %7 : vector<128x1xi32>
    %9 = arith.extui %8 : vector<128x1xi1> to vector<128x1xi32>
    %10 = arith.sitofp %9 : vector<128x1xi32> to vector<128x1xf32>
    %11 = vector.broadcast %10 : vector<128x1xf32> to vector<128x128xf32>
    %12 = arith.mulf %5, %11 : vector<128x128xf32>
    %cst_5 = arith.constant dense<0.000000e+00> : vector<128xf32>
    %13 = vector.multi_reduction <add>, %12, %cst_5 [0] : vector<128x128xf32> to vector<128xf32>
    %14 = vector.shape_cast %13 : vector<128xf32> to vector<1x128xf32>
    %cst_6 = arith.constant 7.812500e-03 : f32
    %15 = vector.broadcast %cst_6 : f32 to vector<1x128xf32>
    %16 = arith.mulf %14, %15 : vector<1x128xf32>
    %17 = arith.mulf %12, %12 : vector<128x128xf32>
    %cst_7 = arith.constant dense<0.000000e+00> : vector<128xf32>
    %18 = vector.multi_reduction <add>, %17, %cst_7 [0] : vector<128x128xf32> to vector<128xf32>
    %19 = vector.shape_cast %18 : vector<128xf32> to vector<1x128xf32>
    %cst_8 = arith.constant 7.812500e-03 : f32
    %20 = vector.broadcast %cst_8 : f32 to vector<1x128xf32>
    %21 = arith.mulf %19, %20 : vector<1x128xf32>
    %22 = arith.mulf %16, %16 : vector<1x128xf32>
    %23 = arith.subf %21, %22 : vector<1x128xf32>
    %c0_9 = arith.constant 0 : index
    %c0_10 = arith.constant 0 : index
    %24 = vector.load %arg4[%c0_9, %c0_10] : memref<1x128xf32, #tpu.memory_space<vmem>>, vector<1x128xf32>
    %cst_11 = arith.constant 9.99999974E-6 : f32
    %25 = vector.broadcast %cst_11 : f32 to vector<1x128xf32>
    %26 = arith.addf %23, %25 : vector<1x128xf32>
    %27 = math.rsqrt %26 : vector<1x128xf32>
    %28 = arith.mulf %24, %27 : vector<1x128xf32>
    %c0_12 = arith.constant 0 : index
    %c0_13 = arith.constant 0 : index
    %29 = vector.load %arg5[%c0_12, %c0_13] : memref<1x128xf32, #tpu.memory_space<vmem>>, vector<1x128xf32>
    %30 = arith.mulf %16, %28 : vector<1x128xf32>
    %31 = arith.subf %29, %30 : vector<1x128xf32>
    %32 = vector.broadcast %28 : vector<1x128xf32> to vector<128x128xf32>
    %33 = arith.mulf %5, %32 : vector<128x128xf32>
    %34 = vector.broadcast %31 : vector<1x128xf32> to vector<128x128xf32>
    %35 = arith.addf %33, %34 : vector<128x128xf32>
    %cst_14 = arith.constant 0.000000e+00 : f32
    %36 = vector.broadcast %cst_14 : f32 to vector<128x128xf32>
    %37 = arith.cmpf oge, %35, %36 : vector<128x128xf32>
    %cst_15 = arith.constant 1.000000e-01 : f32
    %38 = vector.broadcast %cst_15 : f32 to vector<128x128xf32>
    %39 = arith.mulf %38, %35 : vector<128x128xf32>
    %40 = arith.select %37, %35, %39 : vector<128x128xi1>, vector<128x128xf32>
    %c0_16 = arith.constant 0 : index
    %c0_17 = arith.constant 0 : index
    %41 = vector.load %arg6[%c0_16, %c0_17] : memref<128x128xf32, #tpu.memory_space<vmem>>, vector<128x128xf32>
    tpu.vector_store %arg6[%c0_16, %c0_17], %40 {strides = array<i32>} : memref<128x128xf32, #tpu.memory_space<vmem>>, vector<128x128xf32>,
    return
  }
  func.func @transform_0(%arg0: i32) -> (i32, i32) {
    %c0_i32 = arith.constant 0 : i32
    %c0_i32_0 = arith.constant 0 : i32
    %c0_i32_1 = arith.constant 0 : i32
    return %c0_i32, %c0_i32_0 : i32, i32
  }
  func.func @transform_1(%arg0: i32) -> (i32, i32) {
    %c0_i32 = arith.constant 0 : i32
    %c0_i32_0 = arith.constant 0 : i32
    %c0_i32_1 = arith.constant 0 : i32
    return %c0_i32, %c0_i32_0 : i32, i32
  }
  func.func @transform_2(%arg0: i32) -> (i32, i32) {
    %c0_i32 = arith.constant 0 : i32
    %c0_i32_0 = arith.constant 0 : i32
    %c0_i32_1 = arith.constant 0 : i32
    return %c0_i32, %c0_i32_0 : i32, i32
  }
  func.func @transform_3(%arg0: i32) -> (i32, i32) {
    %c0_i32 = arith.constant 0 : i32
    %c0_i32_0 = arith.constant 0 : i32
    %c0_i32_1 = arith.constant 0 : i32
    return %c0_i32, %c0_i32_0 : i32, i32
  }
  func.func @transform_4(%arg0: i32) -> (i32, i32) {
    %c0_i32 = arith.constant 0 : i32
    %c0_i32_0 = arith.constant 0 : i32
    %c0_i32_1 = arith.constant 0 : i32
    return %c0_i32, %c0_i32_0 : i32, i32
  }
  func.func @transform_5(%arg0: i32) -> (i32, i32) {
    %c0_i32 = arith.constant 0 : i32
    %c0_i32_0 = arith.constant 0 : i32
    %c0_i32_1 = arith.constant 0 : i32
    return %c0_i32, %c0_i32_0 : i32, i32
  }
}

module attributes {stable_mosaic.version = 11 : i64} {
  func.func @_conv_bn_act_kernel(%arg0: i32, %arg1: memref<512x144xf32, #tpu.memory_space<vmem>>, %arg2: memref<144x128xf32, #tpu.memory_space<vmem>>, %arg3: memref<1x128xf32, #tpu.memory_space<vmem>>, %arg4: memref<1x128xf32, #tpu.memory_space<vmem>>, %arg5: memref<1x128xf32, #tpu.memory_space<vmem>>, %arg6: memref<512x128xf32, #tpu.memory_space<vmem>>) attributes {dimension_semantics = [#tpu.dimension_semantics<arbitrary>], iteration_bounds = array<i64: 1>, scalar_prefetch = 0 : i64, scratch_operands = 0 : i64, tpu.core_type = #tpu.core_type<tc>, window_params = [{pipeline_mode = #tpu.pipeline_mode<synchronous>, transform_indices = @transform_0, window_bounds = array<i64: 512, 144>}, {pipeline_mode = #tpu.pipeline_mode<synchronous>, transform_indices = @transform_1, window_bounds = array<i64: 144, 128>}, {pipeline_mode = #tpu.pipeline_mode<synchronous>, transform_indices = @transform_2, window_bounds = array<i64: 1, 128>}, {pipeline_mode = #tpu.pipeline_mode<synchronous>, transform_indices = @transform_3, window_bounds = array<i64: 1, 128>}, {pipeline_mode = #tpu.pipeline_mode<synchronous>, transform_indices = @transform_4, window_bounds = array<i64: 1, 128>}, {pipeline_mode = #tpu.pipeline_mode<synchronous>, transform_indices = @transform_5, window_bounds = array<i64: 512, 128>}]} {
    %c0 = arith.constant 0 : index
    %c0_0 = arith.constant 0 : index
    %0 = vector.load %arg1[%c0, %c0_0] : memref<512x144xf32, #tpu.memory_space<vmem>>, vector<512x144xf32>
    %c0_1 = arith.constant 0 : index
    %c0_2 = arith.constant 0 : index
    %1 = vector.load %arg2[%c0_1, %c0_2] : memref<144x128xf32, #tpu.memory_space<vmem>>, vector<144x128xf32>
    %cst = arith.constant dense<0.000000e+00> : vector<512x128xf32>
    %2 = tpu.matmul %0, %1, %cst {dimension_numbers = #tpu.dot_dimension_numbers<[1], [0], [0], [1], [0, 0, 1, 1], [], []>} : vector<512x144xf32>, vector<144x128xf32>, vector<512x128xf32> -> vector<512x128xf32>
    %c0_3 = arith.constant 0 : index
    %c0_4 = arith.constant 0 : index
    %3 = vector.load %arg3[%c0_3, %c0_4] : memref<1x128xf32, #tpu.memory_space<vmem>>, vector<1x128xf32>
    %4 = vector.broadcast %3 : vector<1x128xf32> to vector<512x128xf32>
    %5 = arith.addf %2, %4 : vector<512x128xf32>
    %6 = tpu.iota {dimensions = array<i32: 0>} : vector<512x1xi32>
    %c512_i32 = arith.constant 512 : i32
    %7 = vector.broadcast %c512_i32 : i32 to vector<512x1xi32>
    %8 = arith.cmpi slt, %6, %7 : vector<512x1xi32>
    %9 = arith.extui %8 : vector<512x1xi1> to vector<512x1xi32>
    %10 = arith.sitofp %9 : vector<512x1xi32> to vector<512x1xf32>
    %11 = vector.broadcast %10 : vector<512x1xf32> to vector<512x128xf32>
    %12 = arith.mulf %5, %11 : vector<512x128xf32>
    %cst_5 = arith.constant dense<0.000000e+00> : vector<128xf32>
    %13 = vector.multi_reduction <add>, %12, %cst_5 [0] : vector<512x128xf32> to vector<128xf32>
    %14 = vector.shape_cast %13 : vector<128xf32> to vector<1x128xf32>
    %cst_6 = arith.constant 0.001953125 : f32
    %15 = vector.broadcast %cst_6 : f32 to vector<1x128xf32>
    %16 = arith.mulf %14, %15 : vector<1x128xf32>
    %17 = arith.mulf %12, %12 : vector<512x128xf32>
    %cst_7 = arith.constant dense<0.000000e+00> : vector<128xf32>
    %18 = vector.multi_reduction <add>, %17, %cst_7 [0] : vector<512x128xf32> to vector<128xf32>
    %19 = vector.shape_cast %18 : vector<128xf32> to vector<1x128xf32>
    %cst_8 = arith.constant 0.001953125 : f32
    %20 = vector.broadcast %cst_8 : f32 to vector<1x128xf32>
    %21 = arith.mulf %19, %20 : vector<1x128xf32>
    %22 = arith.mulf %16, %16 : vector<1x128xf32>
    %23 = arith.subf %21, %22 : vector<1x128xf32>
    %c0_9 = arith.constant 0 : index
    %c0_10 = arith.constant 0 : index
    %24 = vector.load %arg4[%c0_9, %c0_10] : memref<1x128xf32, #tpu.memory_space<vmem>>, vector<1x128xf32>
    %cst_11 = arith.constant 9.99999974E-6 : f32
    %25 = vector.broadcast %cst_11 : f32 to vector<1x128xf32>
    %26 = arith.addf %23, %25 : vector<1x128xf32>
    %27 = math.rsqrt %26 : vector<1x128xf32>
    %28 = arith.mulf %24, %27 : vector<1x128xf32>
    %c0_12 = arith.constant 0 : index
    %c0_13 = arith.constant 0 : index
    %29 = vector.load %arg5[%c0_12, %c0_13] : memref<1x128xf32, #tpu.memory_space<vmem>>, vector<1x128xf32>
    %30 = arith.mulf %16, %28 : vector<1x128xf32>
    %31 = arith.subf %29, %30 : vector<1x128xf32>
    %32 = vector.broadcast %28 : vector<1x128xf32> to vector<512x128xf32>
    %33 = arith.mulf %5, %32 : vector<512x128xf32>
    %34 = vector.broadcast %31 : vector<1x128xf32> to vector<512x128xf32>
    %35 = arith.addf %33, %34 : vector<512x128xf32>
    %cst_14 = arith.constant 0.000000e+00 : f32
    %36 = vector.broadcast %cst_14 : f32 to vector<512x128xf32>
    %37 = arith.cmpf oge, %35, %36 : vector<512x128xf32>
    %cst_15 = arith.constant 1.000000e-01 : f32
    %38 = vector.broadcast %cst_15 : f32 to vector<512x128xf32>
    %39 = arith.mulf %38, %35 : vector<512x128xf32>
    %40 = arith.select %37, %35, %39 : vector<512x128xi1>, vector<512x128xf32>
    %c0_16 = arith.constant 0 : index
    %c0_17 = arith.constant 0 : index
    %41 = vector.load %arg6[%c0_16, %c0_17] : memref<512x128xf32, #tpu.memory_space<vmem>>, vector<512x128xf32>
    tpu.vector_store %arg6[%c0_16, %c0_17], %40 {strides = array<i32>} : memref<512x128xf32, #tpu.memory_space<vmem>>, vector<512x128xf32>,
    return
  }
  func.func @transform_0(%arg0: i32) -> (i32, i32) {
    %c0_i32 = arith.constant 0 : i32
    %c0_i32_0 = arith.constant 0 : i32
    %c0_i32_1 = arith.constant 0 : i32
    return %c0_i32, %c0_i32_0 : i32, i32
  }
  func.func @transform_1(%arg0: i32) -> (i32, i32) {
    %c0_i32 = arith.constant 0 : i32
    %c0_i32_0 = arith.constant 0 : i32
    %c0_i32_1 = arith.constant 0 : i32
    return %c0_i32, %c0_i32_0 : i32, i32
  }
  func.func @transform_2(%arg0: i32) -> (i32, i32) {
    %c0_i32 = arith.constant 0 : i32
    %c0_i32_0 = arith.constant 0 : i32
    %c0_i32_1 = arith.constant 0 : i32
    return %c0_i32, %c0_i32_0 : i32, i32
  }
  func.func @transform_3(%arg0: i32) -> (i32, i32) {
    %c0_i32 = arith.constant 0 : i32
    %c0_i32_0 = arith.constant 0 : i32
    %c0_i32_1 = arith.constant 0 : i32
    return %c0_i32, %c0_i32_0 : i32, i32
  }
  func.func @transform_4(%arg0: i32) -> (i32, i32) {
    %c0_i32 = arith.constant 0 : i32
    %c0_i32_0 = arith.constant 0 : i32
    %c0_i32_1 = arith.constant 0 : i32
    return %c0_i32, %c0_i32_0 : i32, i32
  }
  func.func @transform_5(%arg0: i32) -> (i32, i32) {
    %c0_i32 = arith.constant 0 : i32
    %c0_i32_0 = arith.constant 0 : i32
    %c0_i32_1 = arith.constant 0 : i32
    return %c0_i32, %c0_i32_0 : i32, i32
  }
}

module attributes {stable_mosaic.version = 11 : i64} {
  func.func @_conv_mm_kernel(%arg0: i32, %arg1: memref<256x288xf32, #tpu.memory_space<vmem>>, %arg2: memref<288x128xf32, #tpu.memory_space<vmem>>, %arg3: memref<1x128xf32, #tpu.memory_space<vmem>>, %arg4: memref<256x128xf32, #tpu.memory_space<vmem>>) attributes {dimension_semantics = [#tpu.dimension_semantics<parallel>], iteration_bounds = array<i64: 2>, scalar_prefetch = 0 : i64, scratch_operands = 0 : i64, tpu.core_type = #tpu.core_type<tc>, window_params = [{transform_indices = @transform_0, window_bounds = array<i64: 256, 288>}, {pipeline_mode = #tpu.pipeline_mode<synchronous>, transform_indices = @transform_1, window_bounds = array<i64: 288, 128>}, {pipeline_mode = #tpu.pipeline_mode<synchronous>, transform_indices = @transform_2, window_bounds = array<i64: 1, 128>}, {transform_indices = @transform_3, window_bounds = array<i64: 256, 128>}]} {
    %c0 = arith.constant 0 : index
    %c0_0 = arith.constant 0 : index
    %0 = vector.load %arg1[%c0, %c0_0] : memref<256x288xf32, #tpu.memory_space<vmem>>, vector<256x288xf32>
    %c0_1 = arith.constant 0 : index
    %c0_2 = arith.constant 0 : index
    %1 = vector.load %arg2[%c0_1, %c0_2] : memref<288x128xf32, #tpu.memory_space<vmem>>, vector<288x128xf32>
    %cst = arith.constant dense<0.000000e+00> : vector<256x128xf32>
    %2 = tpu.matmul %0, %1, %cst {dimension_numbers = #tpu.dot_dimension_numbers<[1], [0], [0], [1], [0, 0, 1, 1], [], []>} : vector<256x288xf32>, vector<288x128xf32>, vector<256x128xf32> -> vector<256x128xf32>
    %c0_3 = arith.constant 0 : index
    %c0_4 = arith.constant 0 : index
    %3 = vector.load %arg3[%c0_3, %c0_4] : memref<1x128xf32, #tpu.memory_space<vmem>>, vector<1x128xf32>
    %4 = vector.broadcast %3 : vector<1x128xf32> to vector<256x128xf32>
    %5 = arith.addf %2, %4 : vector<256x128xf32>
    %6 = math.tanh %5 : vector<256x128xf32>
    %c0_5 = arith.constant 0 : index
    %c0_6 = arith.constant 0 : index
    %7 = vector.load %arg4[%c0_5, %c0_6] : memref<256x128xf32, #tpu.memory_space<vmem>>, vector<256x128xf32>
    tpu.vector_store %arg4[%c0_5, %c0_6], %6 {strides = array<i32>} : memref<256x128xf32, #tpu.memory_space<vmem>>, vector<256x128xf32>,
    return
  }
  func.func @transform_0(%arg0: i32) -> (i32, i32) {
    %c0_i32 = arith.constant 0 : i32
    %c0_i32_0 = arith.constant 0 : i32
    return %arg0, %c0_i32 : i32, i32
  }
  func.func @transform_1(%arg0: i32) -> (i32, i32) {
    %c0_i32 = arith.constant 0 : i32
    %c0_i32_0 = arith.constant 0 : i32
    %c0_i32_1 = arith.constant 0 : i32
    return %c0_i32, %c0_i32_0 : i32, i32
  }
  func.func @transform_2(%arg0: i32) -> (i32, i32) {
    %c0_i32 = arith.constant 0 : i32
    %c0_i32_0 = arith.constant 0 : i32
    %c0_i32_1 = arith.constant 0 : i32
    return %c0_i32, %c0_i32_0 : i32, i32
  }
  func.func @transform_3(%arg0: i32) -> (i32, i32) {
    %c0_i32 = arith.constant 0 : i32
    %c0_i32_0 = arith.constant 0 : i32
    return %arg0, %c0_i32 : i32, i32
  }
}

</mosaic_0001>

<llo_original>
// kernel: vqvae_forward.7
$region0: #{vqvae_forward.7}
  #allocation0 [shape = 'u32[]', space=smem, size = 0x4, offset = 0x4, fixed_abs, tag = 'smem constant byte address 0x4 - core index']
  #allocation1 [shape = 'u32[72,128]{1,0:T(1,128)}', space=vmem, size = 0x9000, scoped, tag = 'internal scratch']
  %s0 = inlined_call_operand.vmem [shape: f32[128,27], index: 0, kind: input, shape index: {}]
  %s1 = inlined_call_operand.vmem [shape: f32[27,128], index: 1, kind: input, shape index: {}]
  %s2 = inlined_call_operand.vmem [shape: f32[1,128], index: 2, kind: input, shape index: {}]
  %s3 = inlined_call_operand.vmem [shape: f32[1,128], index: 3, kind: input, shape index: {}]
  %s4 = inlined_call_operand.vmem [shape: f32[1,128], index: 4, kind: input, shape index: {}]
  %s5 = inlined_call_operand.vmem [shape: f32[128,128], index: 5, kind: output, shape index: {}]
  %s6 = sld [smem:[#allocation0]]
  $region30: #{vqvae_forward.7} parent=0
    _
  %s8 = ssub.s32 1, %s6
  %s9 = scalar_select 0, %s8, %s6
  // Predicated region
  $region2: #{vqvae_forward.7} parent=0 // pred_check
    _
  $region3: #{vqvae_forward.7} parent=0 // pred_check_branch
    %11 = sbr.rel (0) target = $region5
  $region4: #{vqvae_forward.7} parent=0 // pred_region
    _
  $region5: #{vqvae_forward.7} parent=0 // pred_fallthru
    _
  // Predicated region
  $region6: #{vqvae_forward.7} parent=0 // pred_check
    _
  $region7: #{vqvae_forward.7} parent=0 // pred_check_branch
    %13 = sbr.rel (0) target = $region9
  $region8: #{vqvae_forward.7} parent=0 // pred_region
    _
  $region9: #{vqvae_forward.7} parent=0 // pred_fallthru
    _
  // Predicated region
  $region10: #{vqvae_forward.7} parent=0 // pred_check
    _
  $region11: #{vqvae_forward.7} parent=0 // pred_check_branch
    %15 = sbr.rel (0) target = $region13
  $region12: #{vqvae_forward.7} parent=0 // pred_region
    _
  $region13: #{vqvae_forward.7} parent=0 // pred_fallthru
    _
  // Predicated region
  $region14: #{vqvae_forward.7} parent=0 // pred_check
    _
  $region15: #{vqvae_forward.7} parent=0 // pred_check_branch
    %17 = sbr.rel (0) target = $region17
  $region16: #{vqvae_forward.7} parent=0 // pred_region
    _
  $region17: #{vqvae_forward.7} parent=0 // pred_fallthru
    _
  // Predicated region
  $region18: #{vqvae_forward.7} parent=0 // pred_check
    _
  $region19: #{vqvae_forward.7} parent=0 // pred_check_branch
    %19 = sbr.rel (0) target = $region21
  $region20: #{vqvae_forward.7} parent=0 // pred_region
    _
  $region21: #{vqvae_forward.7} parent=0 // pred_fallthru
    _
  %v20 = vld [vmem:[%s0] sm:$0xff]
  %v21 = vld [vmem:[%s0 + $0x8] sm:$0xff]
  %v22 = vld [vmem:[%s0 + $0x10] sm:$0xff]
  %v23 = vld [vmem:[%s0 + $0x18] sm:$0xff]
  %v24 = vld [vmem:[%s0 + $0x20] sm:$0xff]
  %v25 = vld [vmem:[%s0 + $0x28] sm:$0xff]
  %v26 = vld [vmem:[%s0 + $0x30] sm:$0xff]
  %v27 = vld [vmem:[%s0 + $0x38] sm:$0xff]
  %v28 = vld [vmem:[%s0 + $0x40] sm:$0xff]
  %v29 = vld [vmem:[%s0 + $0x48] sm:$0xff]
  %v30 = vld [vmem:[%s0 + $0x50] sm:$0xff]
  %v31 = vld [vmem:[%s0 + $0x58] sm:$0xff]
  %v32 = vld [vmem:[%s0 + $0x60] sm:$0xff]
  %v33 = vld [vmem:[%s0 + $0x68] sm:$0xff]
  %v34 = vld [vmem:[%s0 + $0x70] sm:$0xff]
  %v35 = vld [vmem:[%s0 + $0x78] sm:$0xff]
  %v36 = vld [vmem:[%s1] sm:$0xff]
  %v37 = vld [vmem:[%s1 + $0x8] sm:$0xff]
  %v38 = vld [vmem:[%s1 + $0x10] sm:$0xff]
  %v39 = vld [vmem:[%s1 + $0x18] sm:$0x7]
  %v40 = vld [vmem:[%s2] sm:$0x1]
  %v42 = vperm.slane %v40, 0
  %vm44 = vcmask 220160
  %v46 = vsel %vm44, %v20, 0
  %v49 = vsel %vm44, %v21, 0
  %v52 = vsel %vm44, %v22, 0
  %v55 = vsel %vm44, %v23, 0
  %v58 = vsel %vm44, %v24, 0
  %v61 = vsel %vm44, %v25, 0
  %v64 = vsel %vm44, %v26, 0
  %v67 = vsel %vm44, %v27, 0
  %v70 = vsel %vm44, %v28, 0
  %v73 = vsel %vm44, %v29, 0
  %v76 = vsel %vm44, %v30, 0
  %v79 = vsel %vm44, %v31, 0
  %v82 = vsel %vm44, %v32, 0
  %v85 = vsel %vm44, %v33, 0
  %v88 = vsel %vm44, %v34, 0
  %v91 = vsel %vm44, %v35, 0
  %vm93 = vcmask 1042432
  %v95 = vsel %vm93, %v39, 0
  %97 = vmatpush.msra.mxu0 0.0
  %98 = vmatpush.msra.mxu0 0.0
  %99 = vmatpush.msra.mxu0 0.0
  %100 = vmatpush.msra.mxu0 0.0
  %101 = vmatpush.msra.mxu0 0.0
  %102 = vmatpush.msra.mxu0 0.0
  %103 = vmatpush.msra.mxu0 0.0
  %104 = vmatpush.msra.mxu0 0.0
  %105 = vmatpush.msra.mxu0 0.0
  %106 = vmatpush.msra.mxu0 0.0
  %107 = vmatpush.msra.mxu0 0.0
  %108 = vmatpush.msra.mxu0 0.0
  %109 = vmatpush.msra.mxu0 %v95
  %110 = vmatpush.msra.mxu0 %v38
  %111 = vmatpush.msra.mxu0 %v37
  %112 = vmatpush.msra.mxu0 %v36
  %113 = vmatmul.f32.gmra.mxu0 %v46
  %v114 = vpop.f32.mrf.mxu0
  %v115 = vadd.f32 %v42, %v114
  %116 = vmatmul.f32.gmra.mxu0 %v49
  %v117 = vpop.f32.mrf.mxu0
  %v118 = vadd.f32 %v42, %v117
  %119 = vmatmul.f32.gmra.mxu0 %v52
  %v120 = vpop.f32.mrf.mxu0
  %v121 = vadd.f32 %v42, %v120
  %122 = vmatmul.f32.gmra.mxu0 %v55
  %v123 = vpop.f32.mrf.mxu0
  %v124 = vadd.f32 %v42, %v123
  %125 = vmatmul.f32.gmra.mxu0 %v58
  %v126 = vpop.f32.mrf.mxu0
  %v127 = vadd.f32 %v42, %v126
  %128 = vmatmul.f32.gmra.mxu0 %v61
  %v129 = vpop.f32.mrf.mxu0
  %v130 = vadd.f32 %v42, %v129
  %131 = vmatmul.f32.gmra.mxu0 %v64
  %v132 = vpop.f32.mrf.mxu0
  %v133 = vadd.f32 %v42, %v132
  %134 = vmatmul.f32.gmra.mxu0 %v67
  %v135 = vpop.f32.mrf.mxu0
  %v136 = vadd.f32 %v42, %v135
  %137 = vmatmul.f32.gmra.mxu0 %v70
  %v138 = vpop.f32.mrf.mxu0
  %v139 = vadd.f32 %v42, %v138
  %140 = vmatmul.f32.gmra.mxu0 %v73
  %v141 = vpop.f32.mrf.mxu0
  %v142 = vadd.f32 %v42, %v141
  %143 = vmatmul.f32.gmra.mxu0 %v76
  %v144 = vpop.f32.mrf.mxu0
  %v145 = vadd.f32 %v42, %v144
  %146 = vmatmul.f32.gmra.mxu0 %v79
  %v147 = vpop.f32.mrf.mxu0
  %v148 = vadd.f32 %v42, %v147
  %149 = vmatmul.f32.gmra.mxu0 %v82
  %v150 = vpop.f32.mrf.mxu0
  %v151 = vadd.f32 %v42, %v150
  %152 = vmatmul.f32.gmra.mxu0 %v85
  %v153 = vpop.f32.mrf.mxu0
  %v154 = vadd.f32 %v42, %v153
  %155 = vmatmul.f32.gmra.mxu0 %v88
  %v156 = vpop.f32.mrf.mxu0
  %v157 = vadd.f32 %v42, %v156
  %158 = vmatmul.f32.gmra.mxu0 %v91
  %v159 = vpop.f32.mrf.mxu0
  %v160 = vadd.f32 %v42, %v159
  %161 = vdwg.mxu0
  %v162 = vlaneseq
  %v163 = vshrl.u32 %v162, 7
  %v164 = vadd.s32 %v163, 8
  %v165 = vadd.s32 %v163, 16
  %v166 = vadd.s32 %v163, 24
  %v167 = vadd.s32 %v163, 32
  %v168 = vadd.s32 %v163, 40
  %v169 = vadd.s32 %v163, 48
  %v170 = vadd.s32 %v163, 56
  %v171 = vadd.s32 %v163, 64
  %v172 = vadd.s32 %v163, 72
  %v173 = vadd.s32 %v163, 80
  %v174 = vadd.s32 %v163, 88
  %v175 = vadd.s32 %v163, 96
  %v176 = vadd.s32 %v163, 104
  %v177 = vadd.s32 %v163, 112
  %v178 = vadd.s32 %v163, 120
  %vm179 = vcmp.lt.s32.totalorder %v163, 128
  %vm180 = vcmp.lt.s32.totalorder %v164, 128
  %vm181 = vcmp.lt.s32.totalorder %v165, 128
  %vm182 = vcmp.lt.s32.totalorder %v166, 128
  %vm183 = vcmp.lt.s32.totalorder %v167, 128
  %vm184 = vcmp.lt.s32.totalorder %v168, 128
  %vm185 = vcmp.lt.s32.totalorder %v169, 128
  %vm186 = vcmp.lt.s32.totalorder %v170, 128
  %vm187 = vcmp.lt.s32.totalorder %v171, 128
  %vm188 = vcmp.lt.s32.totalorder %v172, 128
  %vm189 = vcmp.lt.s32.totalorder %v173, 128
  %vm190 = vcmp.lt.s32.totalorder %v174, 128
  %vm191 = vcmp.lt.s32.totalorder %v175, 128
  %vm192 = vcmp.lt.s32.totalorder %v176, 128
  %vm193 = vcmp.lt.s32.totalorder %v177, 128
  %vm194 = vcmp.lt.s32.totalorder %v178, 128
  %v195 = vsel %vm179, 1, 0
  %v196 = vsel %vm180, 1, 0
  %v197 = vsel %vm181, 1, 0
  %v198 = vsel %vm182, 1, 0
  %v199 = vsel %vm183, 1, 0
  %v200 = vsel %vm184, 1, 0
  %v201 = vsel %vm185, 1, 0
  %v202 = vsel %vm186, 1, 0
  %v203 = vsel %vm187, 1, 0
  %v204 = vsel %vm188, 1, 0
  %v205 = vsel %vm189, 1, 0
  %v206 = vsel %vm190, 1, 0
  %v207 = vsel %vm191, 1, 0
  %v208 = vsel %vm192, 1, 0
  %v209 = vsel %vm193, 1, 0
  %v210 = vsel %vm194, 1, 0
  %v211 = vcvt.s32.f32 %v195
  %v212 = vcvt.s32.f32 %v196
  %v213 = vcvt.s32.f32 %v197
  %v214 = vcvt.s32.f32 %v198
  %v215 = vcvt.s32.f32 %v199
  %v216 = vcvt.s32.f32 %v200
  %v217 = vcvt.s32.f32 %v201
  %v218 = vcvt.s32.f32 %v202
  %v219 = vcvt.s32.f32 %v203
  %v220 = vcvt.s32.f32 %v204
  %v221 = vcvt.s32.f32 %v205
  %v222 = vcvt.s32.f32 %v206
  %v223 = vcvt.s32.f32 %v207
  %v224 = vcvt.s32.f32 %v208
  %v225 = vcvt.s32.f32 %v209
  %v226 = vcvt.s32.f32 %v210
  %v227 = vmul.f32 %v115, %v211
  %v228 = vmul.f32 %v118, %v212
  %v229 = vmul.f32 %v121, %v213
  %v230 = vmul.f32 %v124, %v214
  %v231 = vmul.f32 %v127, %v215
  %v232 = vmul.f32 %v130, %v216
  %v233 = vmul.f32 %v133, %v217
  %v234 = vmul.f32 %v136, %v218
  %v235 = vmul.f32 %v139, %v219
  %v236 = vmul.f32 %v142, %v220
  %v237 = vmul.f32 %v145, %v221
  %v238 = vmul.f32 %v148, %v222
  %v239 = vmul.f32 %v151, %v223
  %v240 = vmul.f32 %v154, %v224
  %v241 = vmul.f32 %v157, %v225
  %v242 = vmul.f32 %v160, %v226
  %v243 = vadd.f32 %v227, %v228
  %v244 = vadd.f32 %v243, %v229
  %v245 = vadd.f32 %v244, %v230
  %v246 = vadd.f32 %v245, %v231
  %v247 = vadd.f32 %v246, %v232
  %v248 = vadd.f32 %v247, %v233
  %v249 = vadd.f32 %v248, %v234
  %v250 = vadd.f32 %v249, %v235
  %v251 = vadd.f32 %v250, %v236
  %v252 = vadd.f32 %v251, %v237
  %v253 = vadd.f32 %v252, %v238
  %v254 = vadd.f32 %v253, %v239
  %v255 = vadd.f32 %v254, %v240
  %v256 = vadd.f32 %v255, %v241
  %v257 = vadd.f32 %v256, %v242
  %v258 = vrot.slane %v257, 4
  %v259 = vadd.f32 %v257, %v258
  %v260 = vrot.slane %v259, 2
  %v261 = vadd.f32 %v259, %v260
  %v262 = vrot.slane %v261, 1
  %v263 = vadd.f32 %v261, %v262
  %v264 = vmul.f32 %v263, 0.0078125
  %v265 = vmul.f32 %v227, %v227
  %v266 = vmul.f32 %v228, %v228
  %v267 = vmul.f32 %v229, %v229
  %v268 = vmul.f32 %v230, %v230
  %v269 = vmul.f32 %v231, %v231
  %v270 = vmul.f32 %v232, %v232
  %v271 = vmul.f32 %v233, %v233
  %v272 = vmul.f32 %v234, %v234
  %v273 = vmul.f32 %v235, %v235
  %v274 = vmul.f32 %v236, %v236
  %v275 = vmul.f32 %v237, %v237
  %v276 = vmul.f32 %v238, %v238
  %v277 = vmul.f32 %v239, %v239
  %v278 = vmul.f32 %v240, %v240
  %v279 = vmul.f32 %v241, %v241
  %v280 = vmul.f32 %v242, %v242
  %v281 = vadd.f32 %v265, %v266
  %v282 = vadd.f32 %v281, %v267
  %v283 = vadd.f32 %v282, %v268
  %v284 = vadd.f32 %v283, %v269
  %v285 = vadd.f32 %v284, %v270
  %v286 = vadd.f32 %v285, %v271
  %v287 = vadd.f32 %v286, %v272
  %v288 = vadd.f32 %v287, %v273
  %v289 = vadd.f32 %v288, %v274
  %v290 = vadd.f32 %v289, %v275
  %v291 = vadd.f32 %v290, %v276
  %v292 = vadd.f32 %v291, %v277
  %v293 = vadd.f32 %v292, %v278
  %v294 = vadd.f32 %v293, %v279
  %v295 = vadd.f32 %v294, %v280
  %v296 = vrot.slane %v295, 4
  %v297 = vadd.f32 %v295, %v296
  %v298 = vrot.slane %v297, 2
  %v299 = vadd.f32 %v297, %v298
  %v300 = vrot.slane %v299, 1
  %v301 = vadd.f32 %v299, %v300
  %v302 = vmul.f32 %v301, 0.0078125
  %v303 = vmul.f32 %v264, %v264
  %v304 = vsub.f32 %v302, %v303
  %v305 = vld [vmem:[%s3] sm:$0x1]
  %v306 = vadd.f32 %v304, 1e-05
  %v307 = vrsqrt.pop %v306
  %v308 = vmul.f32 %v307, %v306
  %v309 = vmul.f32 %v308, %v307
  %v310 = vmul.f32 0.5, %v309
  %v311 = vsub.f32 1.5, %v310
  %v312 = vmul.f32 %v307, %v311
  %vm313 = vweird.f32 %v306
  %vm314 = vweird.f32 %v307
  %vm315 = vmor %vm313, %vm314
  %v316 = vsel %vm315, %v307, %v312
  %v317 = vmul.f32 %v305, %v316
  %v318 = vld [vmem:[%s4] sm:$0x1]
  %v319 = vmul.f32 %v264, %v317
  %v320 = vsub.f32 %v318, %v319
  %v322 = vperm.slane %v317, 0
  %v324 = vmul.f32 %v115, %v322
  %v325 = vmul.f32 %v118, %v322
  %v326 = vmul.f32 %v121, %v322
  %v327 = vmul.f32 %v124, %v322
  %v328 = vmul.f32 %v127, %v322
  %v329 = vmul.f32 %v130, %v322
  %v330 = vmul.f32 %v133, %v322
  %v331 = vmul.f32 %v136, %v322
  %v332 = vmul.f32 %v139, %v322
  %v333 = vmul.f32 %v142, %v322
  %v334 = vmul.f32 %v145, %v322
  %v335 = vmul.f32 %v148, %v322
  %v336 = vmul.f32 %v151, %v322
  %v337 = vmul.f32 %v154, %v322
  %v338 = vmul.f32 %v157, %v322
  %v339 = vmul.f32 %v160, %v322
  %v341 = vperm.slane %v320, 0
  %v343 = vadd.f32 %v324, %v341
  %v344 = vadd.f32 %v325, %v341
  %v345 = vadd.f32 %v326, %v341
  %v346 = vadd.f32 %v327, %v341
  %v347 = vadd.f32 %v328, %v341
  %v348 = vadd.f32 %v329, %v341
  %v349 = vadd.f32 %v330, %v341
  %v350 = vadd.f32 %v331, %v341
  %v351 = vadd.f32 %v332, %v341
  %v352 = vadd.f32 %v333, %v341
  %v353 = vadd.f32 %v334, %v341
  %v354 = vadd.f32 %v335, %v341
  %v355 = vadd.f32 %v336, %v341
  %v356 = vadd.f32 %v337, %v341
  %v357 = vadd.f32 %v338, %v341
  %v358 = vadd.f32 %v339, %v341
  %vm359 = vcmp.ge.f32.partialorder %v343, 0.0
  %vm360 = vcmp.ge.f32.partialorder %v344, 0.0
  %vm361 = vcmp.ge.f32.partialorder %v345, 0.0
  %vm362 = vcmp.ge.f32.partialorder %v346, 0.0
  %vm363 = vcmp.ge.f32.partialorder %v347, 0.0
  %vm364 = vcmp.ge.f32.partialorder %v348, 0.0
  %vm365 = vcmp.ge.f32.partialorder %v349, 0.0
  %vm366 = vcmp.ge.f32.partialorder %v350, 0.0
  %vm367 = vcmp.ge.f32.partialorder %v351, 0.0
  %vm368 = vcmp.ge.f32.partialorder %v352, 0.0
  %vm369 = vcmp.ge.f32.partialorder %v353, 0.0
  %vm370 = vcmp.ge.f32.partialorder %v354, 0.0
  %vm371 = vcmp.ge.f32.partialorder %v355, 0.0
  %vm372 = vcmp.ge.f32.partialorder %v356, 0.0
  %vm373 = vcmp.ge.f32.partialorder %v357, 0.0
  %vm374 = vcmp.ge.f32.partialorder %v358, 0.0
  %v375 = vmul.f32 %v343, 0.1
  %v376 = vmul.f32 %v344, 0.1
  %v377 = vmul.f32 %v345, 0.1
  %v378 = vmul.f32 %v346, 0.1
  %v379 = vmul.f32 %v347, 0.1
  %v380 = vmul.f32 %v348, 0.1
  %v381 = vmul.f32 %v349, 0.1
  %v382 = vmul.f32 %v350, 0.1
  %v383 = vmul.f32 %v351, 0.1
  %v384 = vmul.f32 %v352, 0.1
  %v385 = vmul.f32 %v353, 0.1
  %v386 = vmul.f32 %v354, 0.1
  %v387 = vmul.f32 %v355, 0.1
  %v388 = vmul.f32 %v356, 0.1
  %v389 = vmul.f32 %v357, 0.1
  %v390 = vmul.f32 %v358, 0.1
  %v391 = vsel %vm359, %v343, %v375
  %v392 = vsel %vm360, %v344, %v376
  %v393 = vsel %vm361, %v345, %v377
  %v394 = vsel %vm362, %v346, %v378
  %v395 = vsel %vm363, %v347, %v379
  %v396 = vsel %vm364, %v348, %v380
  %v397 = vsel %vm365, %v349, %v381
  %v398 = vsel %vm366, %v350, %v382
  %v399 = vsel %vm367, %v351, %v383
  %v400 = vsel %vm368, %v352, %v384
  %v401 = vsel %vm369, %v353, %v385
  %v402 = vsel %vm370, %v354, %v386
  %v403 = vsel %vm371, %v355, %v387
  %v404 = vsel %vm372, %v356, %v388
  %v405 = vsel %vm373, %v357, %v389
  %v406 = vsel %vm374, %v358, %v390
  %407 = vst [vmem:[%s5] sm:$0xff] %v391
  %408 = vst [vmem:[%s5 + $0x8] sm:$0xff] %v392
  %409 = vst [vmem:[%s5 + $0x10] sm:$0xff] %v393
  %410 = vst [vmem:[%s5 + $0x18] sm:$0xff] %v394
  %411 = vst [vmem:[%s5 + $0x20] sm:$0xff] %v395
  %412 = vst [vmem:[%s5 + $0x28] sm:$0xff] %v396
  %413 = vst [vmem:[%s5 + $0x30] sm:$0xff] %v397
  %414 = vst [vmem:[%s5 + $0x38] sm:$0xff] %v398
  %415 = vst [vmem:[%s5 + $0x40] sm:$0xff] %v399
  %416 = vst [vmem:[%s5 + $0x48] sm:$0xff] %v400
  %417 = vst [vmem:[%s5 + $0x50] sm:$0xff] %v401
  %418 = vst [vmem:[%s5 + $0x58] sm:$0xff] %v402
  %419 = vst [vmem:[%s5 + $0x60] sm:$0xff] %v403
  %420 = vst [vmem:[%s5 + $0x68] sm:$0xff] %v404
  %421 = vst [vmem:[%s5 + $0x70] sm:$0xff] %v405
  %422 = vst [vmem:[%s5 + $0x78] sm:$0xff] %v406
  // Predicated region
  $region22: #{vqvae_forward.7} parent=0 // pred_check
    _
  $region23: #{vqvae_forward.7} parent=0 // pred_check_branch
    %424 = sbr.rel (0) target = $region25
  $region24: #{vqvae_forward.7} parent=0 // pred_region
    _
  $region25: #{vqvae_forward.7} parent=0 // pred_fallthru
    _
  // Predicated region
  $region26: #{vqvae_forward.7} parent=0 // pred_check
    _
  $region27: #{vqvae_forward.7} parent=0 // pred_check_branch
    %426 = sbr.rel (0) target = $region29
  $region28: #{vqvae_forward.7} parent=0 // pred_region
    _
  $region29: #{vqvae_forward.7} parent=0 // pred_fallthru
    _

// kernel: vqvae_forward.8
$region0: #{vqvae_forward.8}
  #allocation0 [shape = 'u32[]', space=smem, size = 0x4, offset = 0x4, fixed_abs, tag = 'smem constant byte address 0x4 - core index']
  #allocation1 [shape = 'u32[72,128]{1,0:T(1,128)}', space=vmem, size = 0x9000, scoped, tag = 'internal scratch']
  %s0 = inlined_call_operand.vmem [shape: f32[32,144], index: 0, kind: input, shape index: {}]
  %s1 = inlined_call_operand.vmem [shape: f32[144,128], index: 1, kind: input, shape index: {}]
  %s2 = inlined_call_operand.vmem [shape: f32[1,128], index: 2, kind: input, shape index: {}]
  %s3 = inlined_call_operand.vmem [shape: f32[1,128], index: 3, kind: input, shape index: {}]
  %s4 = inlined_call_operand.vmem [shape: f32[1,128], index: 4, kind: input, shape index: {}]
  %s5 = inlined_call_operand.vmem [shape: f32[32,128], index: 5, kind: output, shape index: {}]
  %s6 = sld [smem:[#allocation0]]
  $region30: #{vqvae_forward.8} parent=0
    _
  %s8 = ssub.s32 1, %s6
  %s9 = scalar_select 0, %s8, %s6
  // Predicated region
  $region2: #{vqvae_forward.8} parent=0 // pred_check
    _
  $region3: #{vqvae_forward.8} parent=0 // pred_check_branch
    %11 = sbr.rel (0) target = $region5
  $region4: #{vqvae_forward.8} parent=0 // pred_region
    _
  $region5: #{vqvae_forward.8} parent=0 // pred_fallthru
    _
  // Predicated region
  $region6: #{vqvae_forward.8} parent=0 // pred_check
    _
  $region7: #{vqvae_forward.8} parent=0 // pred_check_branch
    %13 = sbr.rel (0) target = $region9
  $region8: #{vqvae_forward.8} parent=0 // pred_region
    _
  $region9: #{vqvae_forward.8} parent=0 // pred_fallthru
    _
  // Predicated region
  $region10: #{vqvae_forward.8} parent=0 // pred_check
    _
  $region11: #{vqvae_forward.8} parent=0 // pred_check_branch
    %15 = sbr.rel (0) target = $region13
  $region12: #{vqvae_forward.8} parent=0 // pred_region
    _
  $region13: #{vqvae_forward.8} parent=0 // pred_fallthru
    _
  // Predicated region
  $region14: #{vqvae_forward.8} parent=0 // pred_check
    _
  $region15: #{vqvae_forward.8} parent=0 // pred_check_branch
    %17 = sbr.rel (0) target = $region17
  $region16: #{vqvae_forward.8} parent=0 // pred_region
    _
  $region17: #{vqvae_forward.8} parent=0 // pred_fallthru
    _
  // Predicated region
  $region18: #{vqvae_forward.8} parent=0 // pred_check
    _
  $region19: #{vqvae_forward.8} parent=0 // pred_check_branch
    %19 = sbr.rel (0) target = $region21
  $region20: #{vqvae_forward.8} parent=0 // pred_region
    _
  $region21: #{vqvae_forward.8} parent=0 // pred_fallthru
    _
  %v20 = vld [vmem:[%s0] sm:$0xff]
  %v21 = vld [vmem:[%s0 + $0x8] sm:$0xff]
  %v22 = vld [vmem:[%s0 + $0x10] sm:$0xff]
  %v23 = vld [vmem:[%s0 + $0x18] sm:$0xff]
  %v24 = vld [vmem:[%s0 + $0x20] sm:$0xff]
  %v25 = vld [vmem:[%s0 + $0x28] sm:$0xff]
  %v26 = vld [vmem:[%s0 + $0x30] sm:$0xff]
  %v27 = vld [vmem:[%s0 + $0x38] sm:$0xff]
  %v28 = vld [vmem:[%s1] sm:$0xff]
  %v29 = vld [vmem:[%s1 + $0x8] sm:$0xff]
  %v30 = vld [vmem:[%s1 + $0x10] sm:$0xff]
  %v31 = vld [vmem:[%s1 + $0x18] sm:$0xff]
  %v32 = vld [vmem:[%s1 + $0x20] sm:$0xff]
  %v33 = vld [vmem:[%s1 + $0x28] sm:$0xff]
  %v34 = vld [vmem:[%s1 + $0x30] sm:$0xff]
  %v35 = vld [vmem:[%s1 + $0x38] sm:$0xff]
  %v36 = vld [vmem:[%s1 + $0x40] sm:$0xff]
  %v37 = vld [vmem:[%s1 + $0x48] sm:$0xff]
  %v38 = vld [vmem:[%s1 + $0x50] sm:$0xff]
  %v39 = vld [vmem:[%s1 + $0x58] sm:$0xff]
  %v40 = vld [vmem:[%s1 + $0x60] sm:$0xff]
  %v41 = vld [vmem:[%s1 + $0x68] sm:$0xff]
  %v42 = vld [vmem:[%s1 + $0x70] sm:$0xff]
  %v43 = vld [vmem:[%s1 + $0x78] sm:$0xff]
  %v44 = vld [vmem:[%s1 + $0x80] sm:$0xff]
  %v45 = vld [vmem:[%s1 + $0x88] sm:$0xff]
  %v46 = vld [vmem:[%s2] sm:$0x1]
  %v48 = vperm.slane %v46, 0
  %vm50 = vcmask 130048
  %v52 = vsel %vm50, %v21, 0
  %v55 = vsel %vm50, %v23, 0
  %v58 = vsel %vm50, %v25, 0
  %v61 = vsel %vm50, %v27, 0
  %63 = vmatpush.msra.mxu0 %v43
  %64 = vmatpush.msra.mxu0 %v42
  %65 = vmatpush.msra.mxu0 %v41
  %66 = vmatpush.msra.mxu0 %v40
  %67 = vmatpush.msra.mxu0 %v39
  %68 = vmatpush.msra.mxu0 %v38
  %69 = vmatpush.msra.mxu0 %v37
  %70 = vmatpush.msra.mxu0 %v36
  %71 = vmatpush.msra.mxu0 %v35
  %72 = vmatpush.msra.mxu0 %v34
  %73 = vmatpush.msra.mxu0 %v33
  %74 = vmatpush.msra.mxu0 %v32
  %75 = vmatpush.msra.mxu0 %v31
  %76 = vmatpush.msra.mxu0 %v30
  %77 = vmatpush.msra.mxu0 %v29
  %78 = vmatpush.msra.mxu0 %v28
  %79 = vmatmul.f32.gmra.mxu0 %v20
  %v80 = vpop.f32.mrf.mxu0
  %v81 = vadd.f32 %v48, %v80
  %82 = vmatmul.f32.gmra.mxu0 %v22
  %v83 = vpop.f32.mrf.mxu0
  %v84 = vadd.f32 %v48, %v83
  %85 = vmatmul.f32.gmra.mxu0 %v24
  %v86 = vpop.f32.mrf.mxu0
  %v87 = vadd.f32 %v48, %v86
  %88 = vmatmul.f32.gmra.mxu0 %v26
  %v89 = vpop.f32.mrf.mxu0
  %v90 = vadd.f32 %v48, %v89
  %91 = vdwg.mxu0
  %92 = vmatpush.msra.mxu0 0.0
  %93 = vmatpush.msra.mxu0 0.0
  %94 = vmatpush.msra.mxu0 0.0
  %95 = vmatpush.msra.mxu0 0.0
  %96 = vmatpush.msra.mxu0 0.0
  %97 = vmatpush.msra.mxu0 0.0
  %98 = vmatpush.msra.mxu0 0.0
  %99 = vmatpush.msra.mxu0 0.0
  %100 = vmatpush.msra.mxu0 0.0
  %101 = vmatpush.msra.mxu0 0.0
  %102 = vmatpush.msra.mxu0 0.0
  %103 = vmatpush.msra.mxu0 0.0
  %104 = vmatpush.msra.mxu0 0.0
  %105 = vmatpush.msra.mxu0 0.0
  %106 = vmatpush.msra.mxu0 %v45
  %107 = vmatpush.msra.mxu0 %v44
  %108 = vmatmul.f32.gmra.mxu0 %v52
  %v109 = vpop.f32.mrf.mxu0
  %v110 = vadd.f32 %v81, %v109
  %111 = vmatmul.f32.gmra.mxu0 %v55
  %v112 = vpop.f32.mrf.mxu0
  %v113 = vadd.f32 %v84, %v112
  %114 = vmatmul.f32.gmra.mxu0 %v58
  %v115 = vpop.f32.mrf.mxu0
  %v116 = vadd.f32 %v87, %v115
  %117 = vmatmul.f32.gmra.mxu0 %v61
  %v118 = vpop.f32.mrf.mxu0
  %v119 = vadd.f32 %v90, %v118
  %120 = vdwg.mxu0
  %v121 = vlaneseq
  %v122 = vshrl.u32 %v121, 7
  %v123 = vadd.s32 %v122, 8
  %v124 = vadd.s32 %v122, 16
  %v125 = vadd.s32 %v122, 24
  %vm126 = vcmp.lt.s32.totalorder %v122, 32
  %vm127 = vcmp.lt.s32.totalorder %v123, 32
  %vm128 = vcmp.lt.s32.totalorder %v124, 32
  %vm129 = vcmp.lt.s32.totalorder %v125, 32
  %v130 = vsel %vm126, 1, 0
  %v131 = vsel %vm127, 1, 0
  %v132 = vsel %vm128, 1, 0
  %v133 = vsel %vm129, 1, 0
  %v134 = vcvt.s32.f32 %v130
  %v135 = vcvt.s32.f32 %v131
  %v136 = vcvt.s32.f32 %v132
  %v137 = vcvt.s32.f32 %v133
  %v138 = vmul.f32 %v110, %v134
  %v139 = vmul.f32 %v113, %v135
  %v140 = vmul.f32 %v116, %v136
  %v141 = vmul.f32 %v119, %v137
  %v142 = vadd.f32 %v138, %v139
  %v143 = vadd.f32 %v142, %v140
  %v144 = vadd.f32 %v143, %v141
  %v145 = vrot.slane %v144, 4
  %v146 = vadd.f32 %v144, %v145
  %v147 = vrot.slane %v146, 2
  %v148 = vadd.f32 %v146, %v147
  %v149 = vrot.slane %v148, 1
  %v150 = vadd.f32 %v148, %v149
  %v151 = vmul.f32 %v150, 0.03125
  %v152 = vmul.f32 %v138, %v138
  %v153 = vmul.f32 %v139, %v139
  %v154 = vmul.f32 %v140, %v140
  %v155 = vmul.f32 %v141, %v141
  %v156 = vadd.f32 %v152, %v153
  %v157 = vadd.f32 %v156, %v154
  %v158 = vadd.f32 %v157, %v155
  %v159 = vrot.slane %v158, 4
  %v160 = vadd.f32 %v158, %v159
  %v161 = vrot.slane %v160, 2
  %v162 = vadd.f32 %v160, %v161
  %v163 = vrot.slane %v162, 1
  %v164 = vadd.f32 %v162, %v163
  %v165 = vmul.f32 %v164, 0.03125
  %v166 = vmul.f32 %v151, %v151
  %v167 = vsub.f32 %v165, %v166
  %v168 = vld [vmem:[%s3] sm:$0x1]
  %v169 = vadd.f32 %v167, 1e-05
  %v170 = vrsqrt.pop %v169
  %v171 = vmul.f32 %v170, %v169
  %v172 = vmul.f32 %v171, %v170
  %v173 = vmul.f32 0.5, %v172
  %v174 = vsub.f32 1.5, %v173
  %v175 = vmul.f32 %v170, %v174
  %vm176 = vweird.f32 %v169
  %vm177 = vweird.f32 %v170
  %vm178 = vmor %vm176, %vm177
  %v179 = vsel %vm178, %v170, %v175
  %v180 = vmul.f32 %v168, %v179
  %v181 = vld [vmem:[%s4] sm:$0x1]
  %v182 = vmul.f32 %v151, %v180
  %v183 = vsub.f32 %v181, %v182
  %v185 = vperm.slane %v180, 0
  %v187 = vmul.f32 %v110, %v185
  %v188 = vmul.f32 %v113, %v185
  %v189 = vmul.f32 %v116, %v185
  %v190 = vmul.f32 %v119, %v185
  %v192 = vperm.slane %v183, 0
  %v194 = vadd.f32 %v187, %v192
  %v195 = vadd.f32 %v188, %v192
  %v196 = vadd.f32 %v189, %v192
  %v197 = vadd.f32 %v190, %v192
  %vm198 = vcmp.ge.f32.partialorder %v194, 0.0
  %vm199 = vcmp.ge.f32.partialorder %v195, 0.0
  %vm200 = vcmp.ge.f32.partialorder %v196, 0.0
  %vm201 = vcmp.ge.f32.partialorder %v197, 0.0
  %v202 = vmul.f32 %v194, 0.1
  %v203 = vmul.f32 %v195, 0.1
  %v204 = vmul.f32 %v196, 0.1
  %v205 = vmul.f32 %v197, 0.1
  %v206 = vsel %vm198, %v194, %v202
  %v207 = vsel %vm199, %v195, %v203
  %v208 = vsel %vm200, %v196, %v204
  %v209 = vsel %vm201, %v197, %v205
  %210 = vst [vmem:[%s5] sm:$0xff] %v206
  %211 = vst [vmem:[%s5 + $0x8] sm:$0xff] %v207
  %212 = vst [vmem:[%s5 + $0x10] sm:$0xff] %v208
  %213 = vst [vmem:[%s5 + $0x18] sm:$0xff] %v209
  // Predicated region
  $region22: #{vqvae_forward.8} parent=0 // pred_check
    _
  $region23: #{vqvae_forward.8} parent=0 // pred_check_branch
    %215 = sbr.rel (0) target = $region25
  $region24: #{vqvae_forward.8} parent=0 // pred_region
    _
  $region25: #{vqvae_forward.8} parent=0 // pred_fallthru
    _
  // Predicated region
  $region26: #{vqvae_forward.8} parent=0 // pred_check
    _
  $region27: #{vqvae_forward.8} parent=0 // pred_check_branch
    %217 = sbr.rel (0) target = $region29
  $region28: #{vqvae_forward.8} parent=0 // pred_region
    _
  $region29: #{vqvae_forward.8} parent=0 // pred_fallthru
    _

// kernel: vqvae_forward.10
$region0: #{vqvae_forward.10}
  #allocation0 [shape = 'u32[]', space=smem, size = 0x4, offset = 0x4, fixed_abs, tag = 'smem constant byte address 0x4 - core index']
  #allocation1 [shape = 'u32[72,128]{1,0:T(1,128)}', space=vmem, size = 0x9000, scoped, tag = 'internal scratch']
  %s0 = inlined_call_operand.vmem [shape: f32[32,72], index: 0, kind: input, shape index: {}]
  %s1 = inlined_call_operand.vmem [shape: f32[72,128], index: 1, kind: input, shape index: {}]
  %s2 = inlined_call_operand.vmem [shape: f32[1,128], index: 2, kind: input, shape index: {}]
  %s3 = inlined_call_operand.vmem [shape: f32[32,128], index: 3, kind: output, shape index: {}]
  %s4 = sld [smem:[#allocation0]]
  $region22: #{vqvae_forward.10} parent=0
    _
  %s6 = ssub.s32 1, %s4
  %s7 = scalar_select 0, %s6, %s4
  // Predicated region
  $region2: #{vqvae_forward.10} parent=0 // pred_check
    _
  $region3: #{vqvae_forward.10} parent=0 // pred_check_branch
    %9 = sbr.rel (0) target = $region5
  $region4: #{vqvae_forward.10} parent=0 // pred_region
    _
  $region5: #{vqvae_forward.10} parent=0 // pred_fallthru
    _
  // Predicated region
  $region6: #{vqvae_forward.10} parent=0 // pred_check
    _
  $region7: #{vqvae_forward.10} parent=0 // pred_check_branch
    %11 = sbr.rel (0) target = $region9
  $region8: #{vqvae_forward.10} parent=0 // pred_region
    _
  $region9: #{vqvae_forward.10} parent=0 // pred_fallthru
    _
  // Predicated region
  $region10: #{vqvae_forward.10} parent=0 // pred_check
    _
  $region11: #{vqvae_forward.10} parent=0 // pred_check_branch
    %13 = sbr.rel (0) target = $region13
  $region12: #{vqvae_forward.10} parent=0 // pred_region
    _
  $region13: #{vqvae_forward.10} parent=0 // pred_fallthru
    _
  %v14 = vld [vmem:[%s0] sm:$0xff]
  %v15 = vld [vmem:[%s0 + $0x8] sm:$0xff]
  %v16 = vld [vmem:[%s0 + $0x10] sm:$0xff]
  %v17 = vld [vmem:[%s0 + $0x18] sm:$0xff]
  %v18 = vld [vmem:[%s1] sm:$0xff]
  %v19 = vld [vmem:[%s1 + $0x8] sm:$0xff]
  %v20 = vld [vmem:[%s1 + $0x10] sm:$0xff]
  %v21 = vld [vmem:[%s1 + $0x18] sm:$0xff]
  %v22 = vld [vmem:[%s1 + $0x20] sm:$0xff]
  %v23 = vld [vmem:[%s1 + $0x28] sm:$0xff]
  %v24 = vld [vmem:[%s1 + $0x30] sm:$0xff]
  %v25 = vld [vmem:[%s1 + $0x38] sm:$0xff]
  %v26 = vld [vmem:[%s1 + $0x40] sm:$0xff]
  %v27 = vld [vmem:[%s2] sm:$0x1]
  %v29 = vperm.slane %v27, 0
  %vm31 = vcmask 588800
  %v33 = vsel %vm31, %v14, 0
  %v36 = vsel %vm31, %v15, 0
  %v39 = vsel %vm31, %v16, 0
  %v42 = vsel %vm31, %v17, 0
  %44 = vmatpush.msra.mxu0 0.0
  %45 = vmatpush.msra.mxu0 0.0
  %46 = vmatpush.msra.mxu0 0.0
  %47 = vmatpush.msra.mxu0 0.0
  %48 = vmatpush.msra.mxu0 0.0
  %49 = vmatpush.msra.mxu0 0.0
  %50 = vmatpush.msra.mxu0 0.0
  %51 = vmatpush.msra.mxu0 %v26
  %52 = vmatpush.msra.mxu0 %v25
  %53 = vmatpush.msra.mxu0 %v24
  %54 = vmatpush.msra.mxu0 %v23
  %55 = vmatpush.msra.mxu0 %v22
  %56 = vmatpush.msra.mxu0 %v21
  %57 = vmatpush.msra.mxu0 %v20
  %58 = vmatpush.msra.mxu0 %v19
  %59 = vmatpush.msra.mxu0 %v18
  %60 = vmatmul.f32.gmra.mxu0 %v33
  %v61 = vpop.f32.mrf.mxu0
  %v62 = vadd.f32 %v29, %v61
  %63 = vmatmul.f32.gmra.mxu0 %v36
  %v64 = vpop.f32.mrf.mxu0
  %v65 = vadd.f32 %v29, %v64
  %66 = vmatmul.f32.gmra.mxu0 %v39
  %v67 = vpop.f32.mrf.mxu0
  %v68 = vadd.f32 %v29, %v67
  %69 = vmatmul.f32.gmra.mxu0 %v42
  %v70 = vpop.f32.mrf.mxu0
  %v71 = vadd.f32 %v29, %v70
  %72 = vdwg.mxu0
  %73 = vst [vmem:[%s3] sm:$0xff] %v62
  %74 = vst [vmem:[%s3 + $0x8] sm:$0xff] %v65
  %75 = vst [vmem:[%s3 + $0x10] sm:$0xff] %v68
  %76 = vst [vmem:[%s3 + $0x18] sm:$0xff] %v71
  // Predicated region
  $region14: #{vqvae_forward.10} parent=0 // pred_check
    _
  $region15: #{vqvae_forward.10} parent=0 // pred_check_branch
    %78 = sbr.rel (0) target = $region17
  $region16: #{vqvae_forward.10} parent=0 // pred_region
    _
  $region17: #{vqvae_forward.10} parent=0 // pred_fallthru
    _
  // Predicated region
  $region18: #{vqvae_forward.10} parent=0 // pred_check
    _
  $region19: #{vqvae_forward.10} parent=0 // pred_check_branch
    %80 = sbr.rel (0) target = $region21
  $region20: #{vqvae_forward.10} parent=0 // pred_region
    _
  $region21: #{vqvae_forward.10} parent=0 // pred_fallthru
    _

// kernel: vqvae_forward.9
$region0: #{vqvae_forward.9}
  #allocation0 [shape = 'u32[]', space=smem, size = 0x4, offset = 0x4, fixed_abs, tag = 'smem constant byte address 0x4 - core index']
  #allocation1 [shape = 'u32[72,128]{1,0:T(1,128)}', space=vmem, size = 0x9000, scoped, tag = 'internal scratch']
  %s0 = inlined_call_operand.vmem [shape: f32[32,36], index: 0, kind: input, shape index: {}]
  %s1 = inlined_call_operand.vmem [shape: f32[36,128], index: 1, kind: input, shape index: {}]
  %s2 = inlined_call_operand.vmem [shape: f32[1,128], index: 2, kind: input, shape index: {}]
  %s3 = inlined_call_operand.vmem [shape: f32[8,128], index: 3, kind: input, shape index: {}]
  %s4 = inlined_call_operand.vmem [shape: f32[32,128], index: 4, kind: output, shape index: {0}]
  %s5 = inlined_call_operand.hbm [shape: f32[1,1], index: 5, kind: output, shape index: {1}]
  %6 = xla_tuple %s4, %s5
  %s7 = sld [smem:[#allocation0]]
  $region34: #{vqvae_forward.9} parent=0
    _
  %s9 = ssub.s32 1, %s7
  %s10 = scalar_select 0, %s9, %s7
  $region1: #{vqvae_forward.9} parent=0
    #allocation2 [shape = 'u8[512]{0}', space=vmem, size = 0x400, scoped, tag = 'output window, operand 1, single buffered']
    #allocation3 [shape = 's32[1]{0}', space=sflag, size = 0x4, scoped, tag = 'scoped memory for vqvae_forward.9']
    %11 = vsyncpa [#allocation3], 0
    // Predicated region
    $region2: #{vqvae_forward.9} parent=1 // pred_check
      _
    $region3: #{vqvae_forward.9} parent=1 // pred_check_branch
      %13 = sbr.rel (0) target = $region5
    $region4: #{vqvae_forward.9} parent=1 // pred_region
      _
    $region5: #{vqvae_forward.9} parent=1 // pred_fallthru
      _
    // Predicated region
    $region6: #{vqvae_forward.9} parent=1 // pred_check
      _
    $region7: #{vqvae_forward.9} parent=1 // pred_check_branch
      %15 = sbr.rel (0) target = $region9
    $region8: #{vqvae_forward.9} parent=1 // pred_region
      _
    $region9: #{vqvae_forward.9} parent=1 // pred_fallthru
      _
    // Predicated region
    $region10: #{vqvae_forward.9} parent=1 // pred_check
      _
    $region11: #{vqvae_forward.9} parent=1 // pred_check_branch
      %17 = sbr.rel (0) target = $region13
    $region12: #{vqvae_forward.9} parent=1 // pred_region
      _
    $region13: #{vqvae_forward.9} parent=1 // pred_fallthru
      _
    // Predicated region
    $region14: #{vqvae_forward.9} parent=1 // pred_check
      _
    $region15: #{vqvae_forward.9} parent=1 // pred_check_branch
      %19 = sbr.rel (0) target = $region17
    $region16: #{vqvae_forward.9} parent=1 // pred_region
      _
    $region17: #{vqvae_forward.9} parent=1 // pred_fallthru
      _
    %v20 = vld [vmem:[%s0] sm:$0xff]
    %v21 = vld [vmem:[%s0 + $0x8] sm:$0xff]
    %v22 = vld [vmem:[%s0 + $0x10] sm:$0xff]
    %v23 = vld [vmem:[%s0 + $0x18] sm:$0xff]
    %v24 = vld [vmem:[%s1] sm:$0xff]
    %v25 = vld [vmem:[%s1 + $0x8] sm:$0xff]
    %v26 = vld [vmem:[%s1 + $0x10] sm:$0xff]
    %v27 = vld [vmem:[%s1 + $0x18] sm:$0xff]
    %v28 = vld [vmem:[%s1 + $0x20] sm:$0xf]
    %v29 = vld [vmem:[%s2] sm:$0x1]
    %v31 = vperm.slane %v29, 0
    %vm33 = vcmask 293888
    %v35 = vsel %vm33, %v20, 0
    %v38 = vsel %vm33, %v21, 0
    %v41 = vsel %vm33, %v22, 0
    %v44 = vsel %vm33, %v23, 0
    %vm46 = vcmask 1043456
    %v48 = vsel %vm46, %v28, 0
    %50 = vmatpush.msra.mxu0 0.0
    %51 = vmatpush.msra.mxu0 0.0
    %52 = vmatpush.msra.mxu0 0.0
    %53 = vmatpush.msra.mxu0 0.0
    %54 = vmatpush.msra.mxu0 0.0
    %55 = vmatpush.msra.mxu0 0.0
    %56 = vmatpush.msra.mxu0 0.0
    %57 = vmatpush.msra.mxu0 0.0
    %58 = vmatpush.msra.mxu0 0.0
    %59 = vmatpush.msra.mxu0 0.0
    %60 = vmatpush.msra.mxu0 0.0
    %61 = vmatpush.msra.mxu0 %v48
    %62 = vmatpush.msra.mxu0 %v27
    %63 = vmatpush.msra.mxu0 %v26
    %64 = vmatpush.msra.mxu0 %v25
    %65 = vmatpush.msra.mxu0 %v24
    %66 = vmatmul.f32.gmra.mxu0 %v35
    %v67 = vpop.f32.mrf.mxu0
    %v68 = vadd.f32 %v31, %v67
    %69 = vmatmul.f32.gmra.mxu0 %v38
    %v70 = vpop.f32.mrf.mxu0
    %v71 = vadd.f32 %v31, %v70
    %72 = vmatmul.f32.gmra.mxu0 %v41
    %v73 = vpop.f32.mrf.mxu0
    %v74 = vadd.f32 %v31, %v73
    %75 = vmatmul.f32.gmra.mxu0 %v44
    %v76 = vpop.f32.mrf.mxu0
    %v77 = vadd.f32 %v31, %v76
    %78 = vdwg.mxu0
    %v79 = vld [vmem:[%s3] sm:$0xff]
    %v80 = vmul.f32 %v68, %v68
    %v81 = vmul.f32 %v71, %v71
    %v82 = vmul.f32 %v74, %v74
    %v83 = vmul.f32 %v77, %v77
    %84 = vadd.xlane.f32.xlu0 %v80
    %v85 = vpop.xlane.xlu0 %84
    %86 = vadd.xlane.f32.xlu0 %v81
    %v87 = vpop.xlane.xlu0 %86
    %88 = vadd.xlane.f32.xlu0 %v82
    %v89 = vpop.xlane.xlu0 %88
    %90 = vadd.xlane.f32.xlu0 %v83
    %v91 = vpop.xlane.xlu0 %90
    %v92 = vmul.f32 %v79, %v79
    %93 = vadd.xlane.f32.xlu0 %v92
    %v94 = vpop.xlane.xlu0 %93
    %95 = vxpose.xlu0.b32.start [1/16] %v94, 128
    %96 = vxpose.xlu0.b32.cont [2/16] 0.0, 128
    %97 = vxpose.xlu0.b32.cont [3/16] 0.0, 128
    %98 = vxpose.xlu0.b32.cont [4/16] 0.0, 128
    %99 = vxpose.xlu0.b32.cont [5/16] 0.0, 128
    %100 = vxpose.xlu0.b32.cont [6/16] 0.0, 128
    %101 = vxpose.xlu0.b32.cont [7/16] 0.0, 128
    %102 = vxpose.xlu0.b32.cont [8/16] 0.0, 128
    %103 = vxpose.xlu0.b32.cont [9/16] 0.0, 128
    %104 = vxpose.xlu0.b32.cont [10/16] 0.0, 128
    %105 = vxpose.xlu0.b32.cont [11/16] 0.0, 128
    %106 = vxpose.xlu0.b32.cont [12/16] 0.0, 128
    %107 = vxpose.xlu0.b32.cont [13/16] 0.0, 128
    %108 = vxpose.xlu0.b32.cont [14/16] 0.0, 128
    %109 = vxpose.xlu0.b32.cont [15/16] 0.0, 128
    %110 = vxpose.xlu0.b32.end [16/16] 0.0, 128
    %v111 = vpop.trf.xlu0
    %v112 = vpop.trf.xlu0
    %v113 = vpop.trf.xlu0
    %v114 = vpop.trf.xlu0
    %v115 = vpop.trf.xlu0
    %v116 = vpop.trf.xlu0
    %v117 = vpop.trf.xlu0
    %v118 = vpop.trf.xlu0
    %v119 = vpop.trf.xlu0
    %v120 = vpop.trf.xlu0
    %v121 = vpop.trf.xlu0
    %v122 = vpop.trf.xlu0
    %v123 = vpop.trf.xlu0
    %v124 = vpop.trf.xlu0
    %v125 = vpop.trf.xlu0
    %v126 = vpop.trf.xlu0
    %v127 = vperm.slane %v111, 0
    %v128 = vadd.f32 %v85, %v127
    %v129 = vadd.f32 %v87, %v127
    %v130 = vadd.f32 %v89, %v127
    %v131 = vadd.f32 %v91, %v127
    %132 = vmatpush.xpose.msra.mxu0 0.0
    %133 = vmatpush.xpose.msra.mxu0 0.0
    %134 = vmatpush.xpose.msra.mxu0 0.0
    %135 = vmatpush.xpose.msra.mxu0 0.0
    %136 = vmatpush.xpose.msra.mxu0 0.0
    %137 = vmatpush.xpose.msra.mxu0 0.0
    %138 = vmatpush.xpose.msra.mxu0 0.0
    %139 = vmatpush.xpose.msra.mxu0 0.0
    %140 = vmatpush.xpose.msra.mxu0 0.0
    %141 = vmatpush.xpose.msra.mxu0 0.0
    %142 = vmatpush.xpose.msra.mxu0 0.0
    %143 = vmatpush.xpose.msra.mxu0 0.0
    %144 = vmatpush.xpose.msra.mxu0 0.0
    %145 = vmatpush.xpose.msra.mxu0 0.0
    %146 = vmatpush.xpose.msra.mxu0 0.0
    %147 = vmatpush.xpose.msra.mxu0 %v79
    %148 = vmatmul.f32.gmra.mxu0 %v68
    %v149 = vpop.f32.mrf.mxu0
    %v150 = vadd.f32 0.0, %v149
    %151 = vmatmul.f32.gmra.mxu0 %v71
    %v152 = vpop.f32.mrf.mxu0
    %v153 = vadd.f32 0.0, %v152
    %154 = vmatmul.f32.gmra.mxu0 %v74
    %v155 = vpop.f32.mrf.mxu0
    %v156 = vadd.f32 0.0, %v155
    %157 = vmatmul.f32.gmra.mxu0 %v77
    %v158 = vpop.f32.mrf.mxu0
    %v159 = vadd.f32 0.0, %v158
    %160 = vdwg.mxu0
    %v161 = vmul.f32 %v150, 2.0
    %v162 = vmul.f32 %v153, 2.0
    %v163 = vmul.f32 %v156, 2.0
    %v164 = vmul.f32 %v159, 2.0
    %v165 = vsub.f32 %v128, %v161
    %v166 = vsub.f32 %v129, %v162
    %v167 = vsub.f32 %v130, %v163
    %v168 = vsub.f32 %v131, %v164
    %vm169 = vcmask 64512
    %v170 = vsel %vm169, %v165, inf
    %171 = vmin.xlane.f32.xlu0 %v170
    %v172 = vpop.xlane.xlu0 %171
    %v173 = vsel %vm169, %v166, inf
    %174 = vmin.xlane.f32.xlu0 %v173
    %v175 = vpop.xlane.xlu0 %174
    %v176 = vsel %vm169, %v167, inf
    %177 = vmin.xlane.f32.xlu0 %v176
    %v178 = vpop.xlane.xlu0 %177
    %v179 = vsel %vm169, %v168, inf
    %180 = vmin.xlane.f32.xlu0 %v179
    %v181 = vpop.xlane.xlu0 %180
    %v182 = vlaneseq
    %v183 = vand.u32 %v182, 127
    %vm184 = vcmp.le.f32.partialorder %v165, %v172
    %vm185 = vcmp.le.f32.partialorder %v166, %v175
    %vm186 = vcmp.le.f32.partialorder %v167, %v178
    %vm187 = vcmp.le.f32.partialorder %v168, %v181
    %v188 = vsel %vm184, %v183, 8
    %v189 = vsel %vm185, %v183, 8
    %v190 = vsel %vm186, %v183, 8
    %v191 = vsel %vm187, %v183, 8
    %v192 = vsel %vm169, %v188, 2147483647
    %v193 = vand.u32 %v192, 65535
    %v194 = vshra.s32 %v192, 16
    %v195 = vcvt.s32.f32 %v193
    %v196 = vcvt.s32.f32 %v194
    %197 = vmin.xlane.f32.xlu0 %v196
    %v198 = vpop.xlane.xlu0 %197
    %vm199 = vcmp.eq.f32.partialorder %v196, %v198
    %v200 = vsel %vm199, %v195, inf
    %201 = vmin.xlane.f32.xlu0 %v200
    %v202 = vpop.xlane.xlu0 %201
    %v203 = vcvt.f32.s32 %v202
    %v204 = vcvt.f32.s32 %v198
    %v205 = vshll.u32 %v204, 16
    %v206 = vadd.s32 %v205, %v203
    %v207 = vsel %vm169, %v189, 2147483647
    %v208 = vand.u32 %v207, 65535
    %v209 = vshra.s32 %v207, 16
    %v210 = vcvt.s32.f32 %v208
    %v211 = vcvt.s32.f32 %v209
    %212 = vmin.xlane.f32.xlu0 %v211
    %v213 = vpop.xlane.xlu0 %212
    %vm214 = vcmp.eq.f32.partialorder %v211, %v213
    %v215 = vsel %vm214, %v210, inf
    %216 = vmin.xlane.f32.xlu0 %v215
    %v217 = vpop.xlane.xlu0 %216
    %v218 = vcvt.f32.s32 %v217
    %v219 = vcvt.f32.s32 %v213
    %v220 = vshll.u32 %v219, 16
    %v221 = vadd.s32 %v220, %v218
    %v222 = vsel %vm169, %v190, 2147483647
    %v223 = vand.u32 %v222, 65535
    %v224 = vshra.s32 %v222, 16
    %v225 = vcvt.s32.f32 %v223
    %v226 = vcvt.s32.f32 %v224
    %227 = vmin.xlane.f32.xlu0 %v226
    %v228 = vpop.xlane.xlu0 %227
    %vm229 = vcmp.eq.f32.partialorder %v226, %v228
    %v230 = vsel %vm229, %v225, inf
    %231 = vmin.xlane.f32.xlu0 %v230
    %v232 = vpop.xlane.xlu0 %231
    %v233 = vcvt.f32.s32 %v232
    %v234 = vcvt.f32.s32 %v228
    %v235 = vshll.u32 %v234, 16
    %v236 = vadd.s32 %v235, %v233
    %v237 = vsel %vm169, %v191, 2147483647
    %v238 = vand.u32 %v237, 65535
    %v239 = vshra.s32 %v237, 16
    %v240 = vcvt.s32.f32 %v238
    %v241 = vcvt.s32.f32 %v239
    %242 = vmin.xlane.f32.xlu0 %v241
    %v243 = vpop.xlane.xlu0 %242
    %vm244 = vcmp.eq.f32.partialorder %v241, %v243
    %v245 = vsel %vm244, %v240, inf
    %246 = vmin.xlane.f32.xlu0 %v245
    %v247 = vpop.xlane.xlu0 %246
    %v248 = vcvt.f32.s32 %v247
    %v249 = vcvt.f32.s32 %v243
    %v250 = vshll.u32 %v249, 16
    %v251 = vadd.s32 %v250, %v248
    %vm252 = vcmp.eq.s32.totalorder %v183, %v206
    %vm253 = vcmp.eq.s32.totalorder %v183, %v221
    %vm254 = vcmp.eq.s32.totalorder %v183, %v236
    %vm255 = vcmp.eq.s32.totalorder %v183, %v251
    %v256 = vsel %vm252, 1, 0
    %v257 = vsel %vm253, 1, 0
    %v258 = vsel %vm254, 1, 0
    %v259 = vsel %vm255, 1, 0
    %v260 = vcvt.s32.f32 %v256
    %v261 = vcvt.s32.f32 %v257
    %v262 = vcvt.s32.f32 %v258
    %v263 = vcvt.s32.f32 %v259
    %v265 = vsel %vm169, %v260, 0
    %v268 = vsel %vm169, %v261, 0
    %v271 = vsel %vm169, %v262, 0
    %v274 = vsel %vm169, %v263, 0
    %276 = vmatpush.msra.mxu0 0.0
    %277 = vmatpush.msra.mxu0 0.0
    %278 = vmatpush.msra.mxu0 0.0
    %279 = vmatpush.msra.mxu0 0.0
    %280 = vmatpush.msra.mxu0 0.0
    %281 = vmatpush.msra.mxu0 0.0
    %282 = vmatpush.msra.mxu0 0.0
    %283 = vmatpush.msra.mxu0 0.0
    %284 = vmatpush.msra.mxu0 0.0
    %285 = vmatpush.msra.mxu0 0.0
    %286 = vmatpush.msra.mxu0 0.0
    %287 = vmatpush.msra.mxu0 0.0
    %288 = vmatpush.msra.mxu0 0.0
    %289 = vmatpush.msra.mxu0 0.0
    %290 = vmatpush.msra.mxu0 0.0
    %291 = vmatpush.msra.mxu0 %v79
    %292 = vmatmul.f32.gmra.mxu0 %v265
    %v293 = vpop.f32.mrf.mxu0
    %v294 = vadd.f32 0.0, %v293
    %295 = vmatmul.f32.gmra.mxu0 %v268
    %v296 = vpop.f32.mrf.mxu0
    %v297 = vadd.f32 0.0, %v296
    %298 = vmatmul.f32.gmra.mxu0 %v271
    %v299 = vpop.f32.mrf.mxu0
    %v300 = vadd.f32 0.0, %v299
    %301 = vmatmul.f32.gmra.mxu0 %v274
    %v302 = vpop.f32.mrf.mxu0
    %v303 = vadd.f32 0.0, %v302
    %304 = vdwg.mxu0
    %305 = vst [vmem:[%s4] sm:$0xff] %v294
    %306 = vst [vmem:[%s4 + $0x8] sm:$0xff] %v297
    %307 = vst [vmem:[%s4 + $0x10] sm:$0xff] %v300
    %308 = vst [vmem:[%s4 + $0x18] sm:$0xff] %v303
    %v309 = vlaneseq
    %v310 = vshrl.u32 %v309, 7
    %v311 = vadd.s32 %v310, 8
    %v312 = vadd.s32 %v310, 16
    %v313 = vadd.s32 %v310, 24
    %vm314 = vcmp.lt.s32.totalorder %v310, 32
    %vm315 = vcmp.lt.s32.totalorder %v311, 32
    %vm316 = vcmp.lt.s32.totalorder %v312, 32
    %vm317 = vcmp.lt.s32.totalorder %v313, 32
    %v318 = vsel %vm314, 1, 0
    %v319 = vsel %vm315, 1, 0
    %v320 = vsel %vm316, 1, 0
    %v321 = vsel %vm317, 1, 0
    %v322 = vcvt.s32.f32 %v318
    %v323 = vcvt.s32.f32 %v319
    %v324 = vcvt.s32.f32 %v320
    %v325 = vcvt.s32.f32 %v321
    %v326 = vsub.f32 %v68, %v294
    %v327 = vsub.f32 %v71, %v297
    %v328 = vsub.f32 %v74, %v300
    %v329 = vsub.f32 %v77, %v303
    %v330 = vmul.f32 %v326, %v322
    %v331 = vmul.f32 %v327, %v323
    %v332 = vmul.f32 %v328, %v324
    %v333 = vmul.f32 %v329, %v325
    %v334 = vmul.f32 %v330, %v330
    %v335 = vmul.f32 %v331, %v331
    %v336 = vmul.f32 %v332, %v332
    %v337 = vmul.f32 %v333, %v333
    %338 = vadd.xlane.f32.xlu0 %v334
    %v339 = vpop.xlane.xlu0 %338
    %340 = vadd.xlane.f32.xlu0 %v335
    %v341 = vpop.xlane.xlu0 %340
    %342 = vadd.xlane.f32.xlu0 %v336
    %v343 = vpop.xlane.xlu0 %342
    %344 = vadd.xlane.f32.xlu0 %v337
    %v345 = vpop.xlane.xlu0 %344
    %v346 = vadd.f32 %v339, %v341
    %v347 = vadd.f32 %v346, %v343
    %v348 = vadd.f32 %v347, %v345
    %v349 = vrot.slane %v348, 4
    %v350 = vadd.f32 %v348, %v349
    %v351 = vrot.slane %v350, 2
    %v352 = vadd.f32 %v350, %v351
    %v353 = vrot.slane %v352, 1
    %v354 = vadd.f32 %v352, %v353
    %v355 = vrcp.pop 256.0
    %v356 = vmul.f32 256.0, %v355
    %v357 = vsub.f32 1.0, %v356
    %v358 = vmul.f32 %v355, %v357
    %v359 = vadd.f32 %v355, %v358
    %vm360 = vweird.f32 %v355
    %v361 = vsel %vm360, %v355, %v359
    %v362 = vmul.f32 %v354, %v361
    %vm363 = vcmask 0
    %364 = vst.msk [vmem:[#allocation2] sm:$0x1] %vm363, %v362
    // Predicated region
    $region18: #{vqvae_forward.9} parent=1 // pred_check
      _
    $region19: #{vqvae_forward.9} parent=1 // pred_check_branch
      %366 = sbr.rel (0) target = $region21
    $region20: #{vqvae_forward.9} parent=1 // pred_region
      _
    $region21: #{vqvae_forward.9} parent=1 // pred_fallthru
      _
    // Predicated region
    $region22: #{vqvae_forward.9} parent=1 // pred_check
      _
    $region23: #{vqvae_forward.9} parent=1 // pred_check_branch
      %368 = sbr.rel (0) target = $region25
    $region24: #{vqvae_forward.9} parent=1 // pred_region
      %370 = vsyncadd [#allocation3], 0
      %s372 = sshll.u32 [#allocation2], 4
      %s373 = int_to_ptr.vmem [resolvable:$true] %s372
      %s374 = sshll.u32 %s5, 4
      %s375 = int_to_ptr.hbm [resolvable:$true] %s374
      %377 = dma.vmem_to_hbm [thread:$0]  %s373, 16, %s375, [#allocation3]
    $region25: #{vqvae_forward.9} parent=1 // pred_fallthru
      _
    // Predicated region
    $region26: #{vqvae_forward.9} parent=1 // pred_check
      _
    $region27: #{vqvae_forward.9} parent=1 // pred_check_branch
      %379 = sbr.rel (0) target = $region29
    $region28: #{vqvae_forward.9} parent=1 // pred_region
      _
    $region29: #{vqvae_forward.9} parent=1 // pred_fallthru
      _
    // Predicated region
    $region30: #{vqvae_forward.9} parent=1 // pred_check
      _
    $region31: #{vqvae_forward.9} parent=1 // pred_check_branch
      %381 = sbr.rel (0) target = $region33
    $region32: #{vqvae_forward.9} parent=1 // pred_region
      %383 = dma.done [#allocation3], 16
    $region33: #{vqvae_forward.9} parent=1 // pred_fallthru
      _
    %384 = vsyncpa [#allocation3], 1

// kernel: vqvae_forward.11
$region0: #{vqvae_forward.11}
  #allocation0 [shape = 'u32[]', space=smem, size = 0x4, offset = 0x4, fixed_abs, tag = 'smem constant byte address 0x4 - core index']
  #allocation1 [shape = 'u32[72,128]{1,0:T(1,128)}', space=vmem, size = 0x9000, scoped, tag = 'internal scratch']
  %s0 = inlined_call_operand.vmem [shape: f32[128,36], index: 0, kind: input, shape index: {}]
  %s1 = inlined_call_operand.vmem [shape: f32[36,128], index: 1, kind: input, shape index: {}]
  %s2 = inlined_call_operand.vmem [shape: f32[1,128], index: 2, kind: input, shape index: {}]
  %s3 = inlined_call_operand.vmem [shape: f32[1,128], index: 3, kind: input, shape index: {}]
  %s4 = inlined_call_operand.vmem [shape: f32[1,128], index: 4, kind: input, shape index: {}]
  %s5 = inlined_call_operand.vmem [shape: f32[128,128], index: 5, kind: output, shape index: {}]
  %s6 = sld [smem:[#allocation0]]
  $region30: #{vqvae_forward.11} parent=0
    _
  %s8 = ssub.s32 1, %s6
  %s9 = scalar_select 0, %s8, %s6
  // Predicated region
  $region2: #{vqvae_forward.11} parent=0 // pred_check
    _
  $region3: #{vqvae_forward.11} parent=0 // pred_check_branch
    %11 = sbr.rel (0) target = $region5
  $region4: #{vqvae_forward.11} parent=0 // pred_region
    _
  $region5: #{vqvae_forward.11} parent=0 // pred_fallthru
    _
  // Predicated region
  $region6: #{vqvae_forward.11} parent=0 // pred_check
    _
  $region7: #{vqvae_forward.11} parent=0 // pred_check_branch
    %13 = sbr.rel (0) target = $region9
  $region8: #{vqvae_forward.11} parent=0 // pred_region
    _
  $region9: #{vqvae_forward.11} parent=0 // pred_fallthru
    _
  // Predicated region
  $region10: #{vqvae_forward.11} parent=0 // pred_check
    _
  $region11: #{vqvae_forward.11} parent=0 // pred_check_branch
    %15 = sbr.rel (0) target = $region13
  $region12: #{vqvae_forward.11} parent=0 // pred_region
    _
  $region13: #{vqvae_forward.11} parent=0 // pred_fallthru
    _
  // Predicated region
  $region14: #{vqvae_forward.11} parent=0 // pred_check
    _
  $region15: #{vqvae_forward.11} parent=0 // pred_check_branch
    %17 = sbr.rel (0) target = $region17
  $region16: #{vqvae_forward.11} parent=0 // pred_region
    _
  $region17: #{vqvae_forward.11} parent=0 // pred_fallthru
    _
  // Predicated region
  $region18: #{vqvae_forward.11} parent=0 // pred_check
    _
  $region19: #{vqvae_forward.11} parent=0 // pred_check_branch
    %19 = sbr.rel (0) target = $region21
  $region20: #{vqvae_forward.11} parent=0 // pred_region
    _
  $region21: #{vqvae_forward.11} parent=0 // pred_fallthru
    _
  %v20 = vld [vmem:[%s0] sm:$0xff]
  %v21 = vld [vmem:[%s0 + $0x8] sm:$0xff]
  %v22 = vld [vmem:[%s0 + $0x10] sm:$0xff]
  %v23 = vld [vmem:[%s0 + $0x18] sm:$0xff]
  %v24 = vld [vmem:[%s0 + $0x20] sm:$0xff]
  %v25 = vld [vmem:[%s0 + $0x28] sm:$0xff]
  %v26 = vld [vmem:[%s0 + $0x30] sm:$0xff]
  %v27 = vld [vmem:[%s0 + $0x38] sm:$0xff]
  %v28 = vld [vmem:[%s0 + $0x40] sm:$0xff]
  %v29 = vld [vmem:[%s0 + $0x48] sm:$0xff]
  %v30 = vld [vmem:[%s0 + $0x50] sm:$0xff]
  %v31 = vld [vmem:[%s0 + $0x58] sm:$0xff]
  %v32 = vld [vmem:[%s0 + $0x60] sm:$0xff]
  %v33 = vld [vmem:[%s0 + $0x68] sm:$0xff]
  %v34 = vld [vmem:[%s0 + $0x70] sm:$0xff]
  %v35 = vld [vmem:[%s0 + $0x78] sm:$0xff]
  %v36 = vld [vmem:[%s1] sm:$0xff]
  %v37 = vld [vmem:[%s1 + $0x8] sm:$0xff]
  %v38 = vld [vmem:[%s1 + $0x10] sm:$0xff]
  %v39 = vld [vmem:[%s1 + $0x18] sm:$0xff]
  %v40 = vld [vmem:[%s1 + $0x20] sm:$0xf]
  %v41 = vld [vmem:[%s2] sm:$0x1]
  %v43 = vperm.slane %v41, 0
  %vm45 = vcmask 293888
  %v47 = vsel %vm45, %v20, 0
  %v50 = vsel %vm45, %v21, 0
  %v53 = vsel %vm45, %v22, 0
  %v56 = vsel %vm45, %v23, 0
  %v59 = vsel %vm45, %v24, 0
  %v62 = vsel %vm45, %v25, 0
  %v65 = vsel %vm45, %v26, 0
  %v68 = vsel %vm45, %v27, 0
  %v71 = vsel %vm45, %v28, 0
  %v74 = vsel %vm45, %v29, 0
  %v77 = vsel %vm45, %v30, 0
  %v80 = vsel %vm45, %v31, 0
  %v83 = vsel %vm45, %v32, 0
  %v86 = vsel %vm45, %v33, 0
  %v89 = vsel %vm45, %v34, 0
  %v92 = vsel %vm45, %v35, 0
  %vm94 = vcmask 1043456
  %v96 = vsel %vm94, %v40, 0
  %98 = vmatpush.msra.mxu0 0.0
  %99 = vmatpush.msra.mxu0 0.0
  %100 = vmatpush.msra.mxu0 0.0
  %101 = vmatpush.msra.mxu0 0.0
  %102 = vmatpush.msra.mxu0 0.0
  %103 = vmatpush.msra.mxu0 0.0
  %104 = vmatpush.msra.mxu0 0.0
  %105 = vmatpush.msra.mxu0 0.0
  %106 = vmatpush.msra.mxu0 0.0
  %107 = vmatpush.msra.mxu0 0.0
  %108 = vmatpush.msra.mxu0 0.0
  %109 = vmatpush.msra.mxu0 %v96
  %110 = vmatpush.msra.mxu0 %v39
  %111 = vmatpush.msra.mxu0 %v38
  %112 = vmatpush.msra.mxu0 %v37
  %113 = vmatpush.msra.mxu0 %v36
  %114 = vmatmul.f32.gmra.mxu0 %v47
  %v115 = vpop.f32.mrf.mxu0
  %v116 = vadd.f32 %v43, %v115
  %117 = vmatmul.f32.gmra.mxu0 %v50
  %v118 = vpop.f32.mrf.mxu0
  %v119 = vadd.f32 %v43, %v118
  %120 = vmatmul.f32.gmra.mxu0 %v53
  %v121 = vpop.f32.mrf.mxu0
  %v122 = vadd.f32 %v43, %v121
  %123 = vmatmul.f32.gmra.mxu0 %v56
  %v124 = vpop.f32.mrf.mxu0
  %v125 = vadd.f32 %v43, %v124
  %126 = vmatmul.f32.gmra.mxu0 %v59
  %v127 = vpop.f32.mrf.mxu0
  %v128 = vadd.f32 %v43, %v127
  %129 = vmatmul.f32.gmra.mxu0 %v62
  %v130 = vpop.f32.mrf.mxu0
  %v131 = vadd.f32 %v43, %v130
  %132 = vmatmul.f32.gmra.mxu0 %v65
  %v133 = vpop.f32.mrf.mxu0
  %v134 = vadd.f32 %v43, %v133
  %135 = vmatmul.f32.gmra.mxu0 %v68
  %v136 = vpop.f32.mrf.mxu0
  %v137 = vadd.f32 %v43, %v136
  %138 = vmatmul.f32.gmra.mxu0 %v71
  %v139 = vpop.f32.mrf.mxu0
  %v140 = vadd.f32 %v43, %v139
  %141 = vmatmul.f32.gmra.mxu0 %v74
  %v142 = vpop.f32.mrf.mxu0
  %v143 = vadd.f32 %v43, %v142
  %144 = vmatmul.f32.gmra.mxu0 %v77
  %v145 = vpop.f32.mrf.mxu0
  %v146 = vadd.f32 %v43, %v145
  %147 = vmatmul.f32.gmra.mxu0 %v80
  %v148 = vpop.f32.mrf.mxu0
  %v149 = vadd.f32 %v43, %v148
  %150 = vmatmul.f32.gmra.mxu0 %v83
  %v151 = vpop.f32.mrf.mxu0
  %v152 = vadd.f32 %v43, %v151
  %153 = vmatmul.f32.gmra.mxu0 %v86
  %v154 = vpop.f32.mrf.mxu0
  %v155 = vadd.f32 %v43, %v154
  %156 = vmatmul.f32.gmra.mxu0 %v89
  %v157 = vpop.f32.mrf.mxu0
  %v158 = vadd.f32 %v43, %v157
  %159 = vmatmul.f32.gmra.mxu0 %v92
  %v160 = vpop.f32.mrf.mxu0
  %v161 = vadd.f32 %v43, %v160
  %162 = vdwg.mxu0
  %v163 = vlaneseq
  %v164 = vshrl.u32 %v163, 7
  %v165 = vadd.s32 %v164, 8
  %v166 = vadd.s32 %v164, 16
  %v167 = vadd.s32 %v164, 24
  %v168 = vadd.s32 %v164, 32
  %v169 = vadd.s32 %v164, 40
  %v170 = vadd.s32 %v164, 48
  %v171 = vadd.s32 %v164, 56
  %v172 = vadd.s32 %v164, 64
  %v173 = vadd.s32 %v164, 72
  %v174 = vadd.s32 %v164, 80
  %v175 = vadd.s32 %v164, 88
  %v176 = vadd.s32 %v164, 96
  %v177 = vadd.s32 %v164, 104
  %v178 = vadd.s32 %v164, 112
  %v179 = vadd.s32 %v164, 120
  %vm180 = vcmp.lt.s32.totalorder %v164, 128
  %vm181 = vcmp.lt.s32.totalorder %v165, 128
  %vm182 = vcmp.lt.s32.totalorder %v166, 128
  %vm183 = vcmp.lt.s32.totalorder %v167, 128
  %vm184 = vcmp.lt.s32.totalorder %v168, 128
  %vm185 = vcmp.lt.s32.totalorder %v169, 128
  %vm186 = vcmp.lt.s32.totalorder %v170, 128
  %vm187 = vcmp.lt.s32.totalorder %v171, 128
  %vm188 = vcmp.lt.s32.totalorder %v172, 128
  %vm189 = vcmp.lt.s32.totalorder %v173, 128
  %vm190 = vcmp.lt.s32.totalorder %v174, 128
  %vm191 = vcmp.lt.s32.totalorder %v175, 128
  %vm192 = vcmp.lt.s32.totalorder %v176, 128
  %vm193 = vcmp.lt.s32.totalorder %v177, 128
  %vm194 = vcmp.lt.s32.totalorder %v178, 128
  %vm195 = vcmp.lt.s32.totalorder %v179, 128
  %v196 = vsel %vm180, 1, 0
  %v197 = vsel %vm181, 1, 0
  %v198 = vsel %vm182, 1, 0
  %v199 = vsel %vm183, 1, 0
  %v200 = vsel %vm184, 1, 0
  %v201 = vsel %vm185, 1, 0
  %v202 = vsel %vm186, 1, 0
  %v203 = vsel %vm187, 1, 0
  %v204 = vsel %vm188, 1, 0
  %v205 = vsel %vm189, 1, 0
  %v206 = vsel %vm190, 1, 0
  %v207 = vsel %vm191, 1, 0
  %v208 = vsel %vm192, 1, 0
  %v209 = vsel %vm193, 1, 0
  %v210 = vsel %vm194, 1, 0
  %v211 = vsel %vm195, 1, 0
  %v212 = vcvt.s32.f32 %v196
  %v213 = vcvt.s32.f32 %v197
  %v214 = vcvt.s32.f32 %v198
  %v215 = vcvt.s32.f32 %v199
  %v216 = vcvt.s32.f32 %v200
  %v217 = vcvt.s32.f32 %v201
  %v218 = vcvt.s32.f32 %v202
  %v219 = vcvt.s32.f32 %v203
  %v220 = vcvt.s32.f32 %v204
  %v221 = vcvt.s32.f32 %v205
  %v222 = vcvt.s32.f32 %v206
  %v223 = vcvt.s32.f32 %v207
  %v224 = vcvt.s32.f32 %v208
  %v225 = vcvt.s32.f32 %v209
  %v226 = vcvt.s32.f32 %v210
  %v227 = vcvt.s32.f32 %v211
  %v228 = vmul.f32 %v116, %v212
  %v229 = vmul.f32 %v119, %v213
  %v230 = vmul.f32 %v122, %v214
  %v231 = vmul.f32 %v125, %v215
  %v232 = vmul.f32 %v128, %v216
  %v233 = vmul.f32 %v131, %v217
  %v234 = vmul.f32 %v134, %v218
  %v235 = vmul.f32 %v137, %v219
  %v236 = vmul.f32 %v140, %v220
  %v237 = vmul.f32 %v143, %v221
  %v238 = vmul.f32 %v146, %v222
  %v239 = vmul.f32 %v149, %v223
  %v240 = vmul.f32 %v152, %v224
  %v241 = vmul.f32 %v155, %v225
  %v242 = vmul.f32 %v158, %v226
  %v243 = vmul.f32 %v161, %v227
  %v244 = vadd.f32 %v228, %v229
  %v245 = vadd.f32 %v244, %v230
  %v246 = vadd.f32 %v245, %v231
  %v247 = vadd.f32 %v246, %v232
  %v248 = vadd.f32 %v247, %v233
  %v249 = vadd.f32 %v248, %v234
  %v250 = vadd.f32 %v249, %v235
  %v251 = vadd.f32 %v250, %v236
  %v252 = vadd.f32 %v251, %v237
  %v253 = vadd.f32 %v252, %v238
  %v254 = vadd.f32 %v253, %v239
  %v255 = vadd.f32 %v254, %v240
  %v256 = vadd.f32 %v255, %v241
  %v257 = vadd.f32 %v256, %v242
  %v258 = vadd.f32 %v257, %v243
  %v259 = vrot.slane %v258, 4
  %v260 = vadd.f32 %v258, %v259
  %v261 = vrot.slane %v260, 2
  %v262 = vadd.f32 %v260, %v261
  %v263 = vrot.slane %v262, 1
  %v264 = vadd.f32 %v262, %v263
  %v265 = vmul.f32 %v264, 0.0078125
  %v266 = vmul.f32 %v228, %v228
  %v267 = vmul.f32 %v229, %v229
  %v268 = vmul.f32 %v230, %v230
  %v269 = vmul.f32 %v231, %v231
  %v270 = vmul.f32 %v232, %v232
  %v271 = vmul.f32 %v233, %v233
  %v272 = vmul.f32 %v234, %v234
  %v273 = vmul.f32 %v235, %v235
  %v274 = vmul.f32 %v236, %v236
  %v275 = vmul.f32 %v237, %v237
  %v276 = vmul.f32 %v238, %v238
  %v277 = vmul.f32 %v239, %v239
  %v278 = vmul.f32 %v240, %v240
  %v279 = vmul.f32 %v241, %v241
  %v280 = vmul.f32 %v242, %v242
  %v281 = vmul.f32 %v243, %v243
  %v282 = vadd.f32 %v266, %v267
  %v283 = vadd.f32 %v282, %v268
  %v284 = vadd.f32 %v283, %v269
  %v285 = vadd.f32 %v284, %v270
  %v286 = vadd.f32 %v285, %v271
  %v287 = vadd.f32 %v286, %v272
  %v288 = vadd.f32 %v287, %v273
  %v289 = vadd.f32 %v288, %v274
  %v290 = vadd.f32 %v289, %v275
  %v291 = vadd.f32 %v290, %v276
  %v292 = vadd.f32 %v291, %v277
  %v293 = vadd.f32 %v292, %v278
  %v294 = vadd.f32 %v293, %v279
  %v295 = vadd.f32 %v294, %v280
  %v296 = vadd.f32 %v295, %v281
  %v297 = vrot.slane %v296, 4
  %v298 = vadd.f32 %v296, %v297
  %v299 = vrot.slane %v298, 2
  %v300 = vadd.f32 %v298, %v299
  %v301 = vrot.slane %v300, 1
  %v302 = vadd.f32 %v300, %v301
  %v303 = vmul.f32 %v302, 0.0078125
  %v304 = vmul.f32 %v265, %v265
  %v305 = vsub.f32 %v303, %v304
  %v306 = vld [vmem:[%s3] sm:$0x1]
  %v307 = vadd.f32 %v305, 1e-05
  %v308 = vrsqrt.pop %v307
  %v309 = vmul.f32 %v308, %v307
  %v310 = vmul.f32 %v309, %v308
  %v311 = vmul.f32 0.5, %v310
  %v312 = vsub.f32 1.5, %v311
  %v313 = vmul.f32 %v308, %v312
  %vm314 = vweird.f32 %v307
  %vm315 = vweird.f32 %v308
  %vm316 = vmor %vm314, %vm315
  %v317 = vsel %vm316, %v308, %v313
  %v318 = vmul.f32 %v306, %v317
  %v319 = vld [vmem:[%s4] sm:$0x1]
  %v320 = vmul.f32 %v265, %v318
  %v321 = vsub.f32 %v319, %v320
  %v323 = vperm.slane %v318, 0
  %v325 = vmul.f32 %v116, %v323
  %v326 = vmul.f32 %v119, %v323
  %v327 = vmul.f32 %v122, %v323
  %v328 = vmul.f32 %v125, %v323
  %v329 = vmul.f32 %v128, %v323
  %v330 = vmul.f32 %v131, %v323
  %v331 = vmul.f32 %v134, %v323
  %v332 = vmul.f32 %v137, %v323
  %v333 = vmul.f32 %v140, %v323
  %v334 = vmul.f32 %v143, %v323
  %v335 = vmul.f32 %v146, %v323
  %v336 = vmul.f32 %v149, %v323
  %v337 = vmul.f32 %v152, %v323
  %v338 = vmul.f32 %v155, %v323
  %v339 = vmul.f32 %v158, %v323
  %v340 = vmul.f32 %v161, %v323
  %v342 = vperm.slane %v321, 0
  %v344 = vadd.f32 %v325, %v342
  %v345 = vadd.f32 %v326, %v342
  %v346 = vadd.f32 %v327, %v342
  %v347 = vadd.f32 %v328, %v342
  %v348 = vadd.f32 %v329, %v342
  %v349 = vadd.f32 %v330, %v342
  %v350 = vadd.f32 %v331, %v342
  %v351 = vadd.f32 %v332, %v342
  %v352 = vadd.f32 %v333, %v342
  %v353 = vadd.f32 %v334, %v342
  %v354 = vadd.f32 %v335, %v342
  %v355 = vadd.f32 %v336, %v342
  %v356 = vadd.f32 %v337, %v342
  %v357 = vadd.f32 %v338, %v342
  %v358 = vadd.f32 %v339, %v342
  %v359 = vadd.f32 %v340, %v342
  %vm360 = vcmp.ge.f32.partialorder %v344, 0.0
  %vm361 = vcmp.ge.f32.partialorder %v345, 0.0
  %vm362 = vcmp.ge.f32.partialorder %v346, 0.0
  %vm363 = vcmp.ge.f32.partialorder %v347, 0.0
  %vm364 = vcmp.ge.f32.partialorder %v348, 0.0
  %vm365 = vcmp.ge.f32.partialorder %v349, 0.0
  %vm366 = vcmp.ge.f32.partialorder %v350, 0.0
  %vm367 = vcmp.ge.f32.partialorder %v351, 0.0
  %vm368 = vcmp.ge.f32.partialorder %v352, 0.0
  %vm369 = vcmp.ge.f32.partialorder %v353, 0.0
  %vm370 = vcmp.ge.f32.partialorder %v354, 0.0
  %vm371 = vcmp.ge.f32.partialorder %v355, 0.0
  %vm372 = vcmp.ge.f32.partialorder %v356, 0.0
  %vm373 = vcmp.ge.f32.partialorder %v357, 0.0
  %vm374 = vcmp.ge.f32.partialorder %v358, 0.0
  %vm375 = vcmp.ge.f32.partialorder %v359, 0.0
  %v376 = vmul.f32 %v344, 0.1
  %v377 = vmul.f32 %v345, 0.1
  %v378 = vmul.f32 %v346, 0.1
  %v379 = vmul.f32 %v347, 0.1
  %v380 = vmul.f32 %v348, 0.1
  %v381 = vmul.f32 %v349, 0.1
  %v382 = vmul.f32 %v350, 0.1
  %v383 = vmul.f32 %v351, 0.1
  %v384 = vmul.f32 %v352, 0.1
  %v385 = vmul.f32 %v353, 0.1
  %v386 = vmul.f32 %v354, 0.1
  %v387 = vmul.f32 %v355, 0.1
  %v388 = vmul.f32 %v356, 0.1
  %v389 = vmul.f32 %v357, 0.1
  %v390 = vmul.f32 %v358, 0.1
  %v391 = vmul.f32 %v359, 0.1
  %v392 = vsel %vm360, %v344, %v376
  %v393 = vsel %vm361, %v345, %v377
  %v394 = vsel %vm362, %v346, %v378
  %v395 = vsel %vm363, %v347, %v379
  %v396 = vsel %vm364, %v348, %v380
  %v397 = vsel %vm365, %v349, %v381
  %v398 = vsel %vm366, %v350, %v382
  %v399 = vsel %vm367, %v351, %v383
  %v400 = vsel %vm368, %v352, %v384
  %v401 = vsel %vm369, %v353, %v385
  %v402 = vsel %vm370, %v354, %v386
  %v403 = vsel %vm371, %v355, %v387
  %v404 = vsel %vm372, %v356, %v388
  %v405 = vsel %vm373, %v357, %v389
  %v406 = vsel %vm374, %v358, %v390
  %v407 = vsel %vm375, %v359, %v391
  %408 = vst [vmem:[%s5] sm:$0xff] %v392
  %409 = vst [vmem:[%s5 + $0x8] sm:$0xff] %v393
  %410 = vst [vmem:[%s5 + $0x10] sm:$0xff] %v394
  %411 = vst [vmem:[%s5 + $0x18] sm:$0xff] %v395
  %412 = vst [vmem:[%s5 + $0x20] sm:$0xff] %v396
  %413 = vst [vmem:[%s5 + $0x28] sm:$0xff] %v397
  %414 = vst [vmem:[%s5 + $0x30] sm:$0xff] %v398
  %415 = vst [vmem:[%s5 + $0x38] sm:$0xff] %v399
  %416 = vst [vmem:[%s5 + $0x40] sm:$0xff] %v400
  %417 = vst [vmem:[%s5 + $0x48] sm:$0xff] %v401
  %418 = vst [vmem:[%s5 + $0x50] sm:$0xff] %v402
  %419 = vst [vmem:[%s5 + $0x58] sm:$0xff] %v403
  %420 = vst [vmem:[%s5 + $0x60] sm:$0xff] %v404
  %421 = vst [vmem:[%s5 + $0x68] sm:$0xff] %v405
  %422 = vst [vmem:[%s5 + $0x70] sm:$0xff] %v406
  %423 = vst [vmem:[%s5 + $0x78] sm:$0xff] %v407
  // Predicated region
  $region22: #{vqvae_forward.11} parent=0 // pred_check
    _
  $region23: #{vqvae_forward.11} parent=0 // pred_check_branch
    %425 = sbr.rel (0) target = $region25
  $region24: #{vqvae_forward.11} parent=0 // pred_region
    _
  $region25: #{vqvae_forward.11} parent=0 // pred_fallthru
    _
  // Predicated region
  $region26: #{vqvae_forward.11} parent=0 // pred_check
    _
  $region27: #{vqvae_forward.11} parent=0 // pred_check_branch
    %427 = sbr.rel (0) target = $region29
  $region28: #{vqvae_forward.11} parent=0 // pred_region
    _
  $region29: #{vqvae_forward.11} parent=0 // pred_fallthru
    _

// kernel: vqvae_forward.12
$region0: #{vqvae_forward.12}
  #allocation0 [shape = 'u32[]', space=smem, size = 0x4, offset = 0x4, fixed_abs, tag = 'smem constant byte address 0x4 - core index']
  #allocation1 [shape = 'u32[72,128]{1,0:T(1,128)}', space=vmem, size = 0x9000, scoped, tag = 'internal scratch']
  %s0 = inlined_call_operand.vmem [shape: f32[512,144], index: 0, kind: input, shape index: {}]
  %s1 = inlined_call_operand.vmem [shape: f32[144,128], index: 1, kind: input, shape index: {}]
  %s2 = inlined_call_operand.vmem [shape: f32[1,128], index: 2, kind: input, shape index: {}]
  %s3 = inlined_call_operand.vmem [shape: f32[1,128], index: 3, kind: input, shape index: {}]
  %s4 = inlined_call_operand.vmem [shape: f32[1,128], index: 4, kind: input, shape index: {}]
  %s5 = inlined_call_operand.vmem [shape: f32[512,128], index: 5, kind: output, shape index: {}]
  %s6 = sld [smem:[#allocation0]]
  $region30: #{vqvae_forward.12} parent=0
    _
  %s8 = ssub.s32 1, %s6
  %s9 = scalar_select 0, %s8, %s6
  // Predicated region
  $region2: #{vqvae_forward.12} parent=0 // pred_check
    _
  $region3: #{vqvae_forward.12} parent=0 // pred_check_branch
    %11 = sbr.rel (0) target = $region5
  $region4: #{vqvae_forward.12} parent=0 // pred_region
    _
  $region5: #{vqvae_forward.12} parent=0 // pred_fallthru
    _
  // Predicated region
  $region6: #{vqvae_forward.12} parent=0 // pred_check
    _
  $region7: #{vqvae_forward.12} parent=0 // pred_check_branch
    %13 = sbr.rel (0) target = $region9
  $region8: #{vqvae_forward.12} parent=0 // pred_region
    _
  $region9: #{vqvae_forward.12} parent=0 // pred_fallthru
    _
  // Predicated region
  $region10: #{vqvae_forward.12} parent=0 // pred_check
    _
  $region11: #{vqvae_forward.12} parent=0 // pred_check_branch
    %15 = sbr.rel (0) target = $region13
  $region12: #{vqvae_forward.12} parent=0 // pred_region
    _
  $region13: #{vqvae_forward.12} parent=0 // pred_fallthru
    _
  // Predicated region
  $region14: #{vqvae_forward.12} parent=0 // pred_check
    _
  $region15: #{vqvae_forward.12} parent=0 // pred_check_branch
    %17 = sbr.rel (0) target = $region17
  $region16: #{vqvae_forward.12} parent=0 // pred_region
    _
  $region17: #{vqvae_forward.12} parent=0 // pred_fallthru
    _
  // Predicated region
  $region18: #{vqvae_forward.12} parent=0 // pred_check
    _
  $region19: #{vqvae_forward.12} parent=0 // pred_check_branch
    %19 = sbr.rel (0) target = $region21
  $region20: #{vqvae_forward.12} parent=0 // pred_region
    _
  $region21: #{vqvae_forward.12} parent=0 // pred_fallthru
    _
  %v20 = vld [vmem:[%s0] sm:$0xff]
  %v21 = vld [vmem:[%s0 + $0x8] sm:$0xff]
  %v22 = vld [vmem:[%s0 + $0x10] sm:$0xff]
  %v23 = vld [vmem:[%s0 + $0x18] sm:$0xff]
  %v24 = vld [vmem:[%s0 + $0x20] sm:$0xff]
  %v25 = vld [vmem:[%s0 + $0x28] sm:$0xff]
  %v26 = vld [vmem:[%s0 + $0x30] sm:$0xff]
  %v27 = vld [vmem:[%s0 + $0x38] sm:$0xff]
  %v28 = vld [vmem:[%s0 + $0x40] sm:$0xff]
  %v29 = vld [vmem:[%s0 + $0x48] sm:$0xff]
  %v30 = vld [vmem:[%s0 + $0x50] sm:$0xff]
  %v31 = vld [vmem:[%s0 + $0x58] sm:$0xff]
  %v32 = vld [vmem:[%s0 + $0x60] sm:$0xff]
  %v33 = vld [vmem:[%s0 + $0x68] sm:$0xff]
  %v34 = vld [vmem:[%s0 + $0x70] sm:$0xff]
  %v35 = vld [vmem:[%s0 + $0x78] sm:$0xff]
  %v36 = vld [vmem:[%s0 + $0x80] sm:$0xff]
  %v37 = vld [vmem:[%s0 + $0x88] sm:$0xff]
  %v38 = vld [vmem:[%s0 + $0x90] sm:$0xff]
  %v39 = vld [vmem:[%s0 + $0x98] sm:$0xff]
  %v40 = vld [vmem:[%s0 + $0xa0] sm:$0xff]
  %v41 = vld [vmem:[%s0 + $0xa8] sm:$0xff]
  %v42 = vld [vmem:[%s0 + $0xb0] sm:$0xff]
  %v43 = vld [vmem:[%s0 + $0xb8] sm:$0xff]
  %v44 = vld [vmem:[%s0 + $0xc0] sm:$0xff]
  %v45 = vld [vmem:[%s0 + $0xc8] sm:$0xff]
  %v46 = vld [vmem:[%s0 + $0xd0] sm:$0xff]
  %v47 = vld [vmem:[%s0 + $0xd8] sm:$0xff]
  %v48 = vld [vmem:[%s0 + $0xe0] sm:$0xff]
  %v49 = vld [vmem:[%s0 + $0xe8] sm:$0xff]
  %v50 = vld [vmem:[%s0 + $0xf0] sm:$0xff]
  %v51 = vld [vmem:[%s0 + $0xf8] sm:$0xff]
  %v52 = vld [vmem:[%s0 + $0x100] sm:$0xff]
  %v53 = vld [vmem:[%s0 + $0x108] sm:$0xff]
  %v54 = vld [vmem:[%s0 + $0x110] sm:$0xff]
  %v55 = vld [vmem:[%s0 + $0x118] sm:$0xff]
  %v56 = vld [vmem:[%s0 + $0x120] sm:$0xff]
  %v57 = vld [vmem:[%s0 + $0x128] sm:$0xff]
  %v58 = vld [vmem:[%s0 + $0x130] sm:$0xff]
  %v59 = vld [vmem:[%s0 + $0x138] sm:$0xff]
  %v60 = vld [vmem:[%s0 + $0x140] sm:$0xff]
  %v61 = vld [vmem:[%s0 + $0x148] sm:$0xff]
  %v62 = vld [vmem:[%s0 + $0x150] sm:$0xff]
  %v63 = vld [vmem:[%s0 + $0x158] sm:$0xff]
  %v64 = vld [vmem:[%s0 + $0x160] sm:$0xff]
  %v65 = vld [vmem:[%s0 + $0x168] sm:$0xff]
  %v66 = vld [vmem:[%s0 + $0x170] sm:$0xff]
  %v67 = vld [vmem:[%s0 + $0x178] sm:$0xff]
  %v68 = vld [vmem:[%s0 + $0x180] sm:$0xff]
  %v69 = vld [vmem:[%s0 + $0x188] sm:$0xff]
  %v70 = vld [vmem:[%s0 + $0x190] sm:$0xff]
  %v71 = vld [vmem:[%s0 + $0x198] sm:$0xff]
  %v72 = vld [vmem:[%s0 + $0x1a0] sm:$0xff]
  %v73 = vld [vmem:[%s0 + $0x1a8] sm:$0xff]
  %v74 = vld [vmem:[%s0 + $0x1b0] sm:$0xff]
  %v75 = vld [vmem:[%s0 + $0x1b8] sm:$0xff]
  %v76 = vld [vmem:[%s0 + $0x1c0] sm:$0xff]
  %v77 = vld [vmem:[%s0 + $0x1c8] sm:$0xff]
  %v78 = vld [vmem:[%s0 + $0x1d0] sm:$0xff]
  %v79 = vld [vmem:[%s0 + $0x1d8] sm:$0xff]
  %v80 = vld [vmem:[%s0 + $0x1e0] sm:$0xff]
  %v81 = vld [vmem:[%s0 + $0x1e8] sm:$0xff]
  %v82 = vld [vmem:[%s0 + $0x1f0] sm:$0xff]
  %v83 = vld [vmem:[%s0 + $0x1f8] sm:$0xff]
  %v84 = vld [vmem:[%s0 + $0x200] sm:$0xff]
  %v85 = vld [vmem:[%s0 + $0x208] sm:$0xff]
  %v86 = vld [vmem:[%s0 + $0x210] sm:$0xff]
  %v87 = vld [vmem:[%s0 + $0x218] sm:$0xff]
  %v88 = vld [vmem:[%s0 + $0x220] sm:$0xff]
  %v89 = vld [vmem:[%s0 + $0x228] sm:$0xff]
  %v90 = vld [vmem:[%s0 + $0x230] sm:$0xff]
  %v91 = vld [vmem:[%s0 + $0x238] sm:$0xff]
  %v92 = vld [vmem:[%s0 + $0x240] sm:$0xff]
  %v93 = vld [vmem:[%s0 + $0x248] sm:$0xff]
  %v94 = vld [vmem:[%s0 + $0x250] sm:$0xff]
  %v95 = vld [vmem:[%s0 + $0x258] sm:$0xff]
  %v96 = vld [vmem:[%s0 + $0x260] sm:$0xff]
  %v97 = vld [vmem:[%s0 + $0x268] sm:$0xff]
  %v98 = vld [vmem:[%s0 + $0x270] sm:$0xff]
  %v99 = vld [vmem:[%s0 + $0x278] sm:$0xff]
  %v100 = vld [vmem:[%s0 + $0x280] sm:$0xff]
  %v101 = vld [vmem:[%s0 + $0x288] sm:$0xff]
  %v102 = vld [vmem:[%s0 + $0x290] sm:$0xff]
  %v103 = vld [vmem:[%s0 + $0x298] sm:$0xff]
  %v104 = vld [vmem:[%s0 + $0x2a0] sm:$0xff]
  %v105 = vld [vmem:[%s0 + $0x2a8] sm:$0xff]
  %v106 = vld [vmem:[%s0 + $0x2b0] sm:$0xff]
  %v107 = vld [vmem:[%s0 + $0x2b8] sm:$0xff]
  %v108 = vld [vmem:[%s0 + $0x2c0] sm:$0xff]
  %v109 = vld [vmem:[%s0 + $0x2c8] sm:$0xff]
  %v110 = vld [vmem:[%s0 + $0x2d0] sm:$0xff]
  %v111 = vld [vmem:[%s0 + $0x2d8] sm:$0xff]
  %v112 = vld [vmem:[%s0 + $0x2e0] sm:$0xff]
  %v113 = vld [vmem:[%s0 + $0x2e8] sm:$0xff]
  %v114 = vld [vmem:[%s0 + $0x2f0] sm:$0xff]
  %v115 = vld [vmem:[%s0 + $0x2f8] sm:$0xff]
  %v116 = vld [vmem:[%s0 + $0x300] sm:$0xff]
  %v117 = vld [vmem:[%s0 + $0x308] sm:$0xff]
  %v118 = vld [vmem:[%s0 + $0x310] sm:$0xff]
  %v119 = vld [vmem:[%s0 + $0x318] sm:$0xff]
  %v120 = vld [vmem:[%s0 + $0x320] sm:$0xff]
  %v121 = vld [vmem:[%s0 + $0x328] sm:$0xff]
  %v122 = vld [vmem:[%s0 + $0x330] sm:$0xff]
  %v123 = vld [vmem:[%s0 + $0x338] sm:$0xff]
  %v124 = vld [vmem:[%s0 + $0x340] sm:$0xff]
  %v125 = vld [vmem:[%s0 + $0x348] sm:$0xff]
  %v126 = vld [vmem:[%s0 + $0x350] sm:$0xff]
  %v127 = vld [vmem:[%s0 + $0x358] sm:$0xff]
  %v128 = vld [vmem:[%s0 + $0x360] sm:$0xff]
  %v129 = vld [vmem:[%s0 + $0x368] sm:$0xff]
  %v130 = vld [vmem:[%s0 + $0x370] sm:$0xff]
  %v131 = vld [vmem:[%s0 + $0x378] sm:$0xff]
  %v132 = vld [vmem:[%s0 + $0x380] sm:$0xff]
  %v133 = vld [vmem:[%s0 + $0x388] sm:$0xff]
  %v134 = vld [vmem:[%s0 + $0x390] sm:$0xff]
  %v135 = vld [vmem:[%s0 + $0x398] sm:$0xff]
  %v136 = vld [vmem:[%s0 + $0x3a0] sm:$0xff]
  %v137 = vld [vmem:[%s0 + $0x3a8] sm:$0xff]
  %v138 = vld [vmem:[%s0 + $0x3b0] sm:$0xff]
  %v139 = vld [vmem:[%s0 + $0x3b8] sm:$0xff]
  %v140 = vld [vmem:[%s0 + $0x3c0] sm:$0xff]
  %v141 = vld [vmem:[%s0 + $0x3c8] sm:$0xff]
  %v142 = vld [vmem:[%s0 + $0x3d0] sm:$0xff]
  %v143 = vld [vmem:[%s0 + $0x3d8] sm:$0xff]
  %v144 = vld [vmem:[%s0 + $0x3e0] sm:$0xff]
  %v145 = vld [vmem:[%s0 + $0x3e8] sm:$0xff]
  %v146 = vld [vmem:[%s0 + $0x3f0] sm:$0xff]
  %v147 = vld [vmem:[%s0 + $0x3f8] sm:$0xff]
  %v148 = vld [vmem:[%s1] sm:$0xff]
  %v149 = vld [vmem:[%s1 + $0x8] sm:$0xff]
  %v150 = vld [vmem:[%s1 + $0x10] sm:$0xff]
  %v151 = vld [vmem:[%s1 + $0x18] sm:$0xff]
  %v152 = vld [vmem:[%s1 + $0x20] sm:$0xff]
  %v153 = vld [vmem:[%s1 + $0x28] sm:$0xff]
  %v154 = vld [vmem:[%s1 + $0x30] sm:$0xff]
  %v155 = vld [vmem:[%s1 + $0x38] sm:$0xff]
  %v156 = vld [vmem:[%s1 + $0x40] sm:$0xff]
  %v157 = vld [vmem:[%s1 + $0x48] sm:$0xff]
  %v158 = vld [vmem:[%s1 + $0x50] sm:$0xff]
  %v159 = vld [vmem:[%s1 + $0x58] sm:$0xff]
  %v160 = vld [vmem:[%s1 + $0x60] sm:$0xff]
  %v161 = vld [vmem:[%s1 + $0x68] sm:$0xff]
  %v162 = vld [vmem:[%s1 + $0x70] sm:$0xff]
  %v163 = vld [vmem:[%s1 + $0x78] sm:$0xff]
  %v164 = vld [vmem:[%s1 + $0x80] sm:$0xff]
  %v165 = vld [vmem:[%s1 + $0x88] sm:$0xff]
  %v166 = vld [vmem:[%s2] sm:$0x1]
  %v168 = vperm.slane %v166, 0
  %vm170 = vcmask 130048
  %v172 = vsel %vm170, %v21, 0
  %v175 = vsel %vm170, %v23, 0
  %v178 = vsel %vm170, %v25, 0
  %v181 = vsel %vm170, %v27, 0
  %v184 = vsel %vm170, %v29, 0
  %v187 = vsel %vm170, %v31, 0
  %v190 = vsel %vm170, %v33, 0
  %v193 = vsel %vm170, %v35, 0
  %v196 = vsel %vm170, %v37, 0
  %v199 = vsel %vm170, %v39, 0
  %v202 = vsel %vm170, %v41, 0
  %v205 = vsel %vm170, %v43, 0
  %v208 = vsel %vm170, %v45, 0
  %v211 = vsel %vm170, %v47, 0
  %v214 = vsel %vm170, %v49, 0
  %v217 = vsel %vm170, %v51, 0
  %v220 = vsel %vm170, %v53, 0
  %v223 = vsel %vm170, %v55, 0
  %v226 = vsel %vm170, %v57, 0
  %v229 = vsel %vm170, %v59, 0
  %v232 = vsel %vm170, %v61, 0
  %v235 = vsel %vm170, %v63, 0
  %v238 = vsel %vm170, %v65, 0
  %v241 = vsel %vm170, %v67, 0
  %v244 = vsel %vm170, %v69, 0
  %v247 = vsel %vm170, %v71, 0
  %v250 = vsel %vm170, %v73, 0
  %v253 = vsel %vm170, %v75, 0
  %v256 = vsel %vm170, %v77, 0
  %v259 = vsel %vm170, %v79, 0
  %v262 = vsel %vm170, %v81, 0
  %v265 = vsel %vm170, %v83, 0
  %v268 = vsel %vm170, %v85, 0
  %v271 = vsel %vm170, %v87, 0
  %v274 = vsel %vm170, %v89, 0
  %v277 = vsel %vm170, %v91, 0
  %v280 = vsel %vm170, %v93, 0
  %v283 = vsel %vm170, %v95, 0
  %v286 = vsel %vm170, %v97, 0
  %v289 = vsel %vm170, %v99, 0
  %v292 = vsel %vm170, %v101, 0
  %v295 = vsel %vm170, %v103, 0
  %v298 = vsel %vm170, %v105, 0
  %v301 = vsel %vm170, %v107, 0
  %v304 = vsel %vm170, %v109, 0
  %v307 = vsel %vm170, %v111, 0
  %v310 = vsel %vm170, %v113, 0
  %v313 = vsel %vm170, %v115, 0
  %v316 = vsel %vm170, %v117, 0
  %v319 = vsel %vm170, %v119, 0
  %v322 = vsel %vm170, %v121, 0
  %v325 = vsel %vm170, %v123, 0
  %v328 = vsel %vm170, %v125, 0
  %v331 = vsel %vm170, %v127, 0
  %v334 = vsel %vm170, %v129, 0
  %v337 = vsel %vm170, %v131, 0
  %v340 = vsel %vm170, %v133, 0
  %v343 = vsel %vm170, %v135, 0
  %v346 = vsel %vm170, %v137, 0
  %v349 = vsel %vm170, %v139, 0
  %v352 = vsel %vm170, %v141, 0
  %v355 = vsel %vm170, %v143, 0
  %v358 = vsel %vm170, %v145, 0
  %v361 = vsel %vm170, %v147, 0
  %363 = vmatpush.msra.mxu0 %v163
  %364 = vmatpush.msra.mxu0 %v162
  %365 = vmatpush.msra.mxu0 %v161
  %366 = vmatpush.msra.mxu0 %v160
  %367 = vmatpush.msra.mxu0 %v159
  %368 = vmatpush.msra.mxu0 %v158
  %369 = vmatpush.msra.mxu0 %v157
  %370 = vmatpush.msra.mxu0 %v156
  %371 = vmatpush.msra.mxu0 %v155
  %372 = vmatpush.msra.mxu0 %v154
  %373 = vmatpush.msra.mxu0 %v153
  %374 = vmatpush.msra.mxu0 %v152
  %375 = vmatpush.msra.mxu0 %v151
  %376 = vmatpush.msra.mxu0 %v150
  %377 = vmatpush.msra.mxu0 %v149
  %378 = vmatpush.msra.mxu0 %v148
  %379 = vmatmul.f32.gmra.mxu0 %v20
  %v380 = vpop.f32.mrf.mxu0
  %v381 = vadd.f32 %v168, %v380
  %382 = vmatmul.f32.gmra.mxu0 %v22
  %v383 = vpop.f32.mrf.mxu0
  %v384 = vadd.f32 %v168, %v383
  %385 = vmatmul.f32.gmra.mxu0 %v24
  %v386 = vpop.f32.mrf.mxu0
  %v387 = vadd.f32 %v168, %v386
  %388 = vmatmul.f32.gmra.mxu0 %v26
  %v389 = vpop.f32.mrf.mxu0
  %v390 = vadd.f32 %v168, %v389
  %391 = vmatmul.f32.gmra.mxu0 %v28
  %v392 = vpop.f32.mrf.mxu0
  %v393 = vadd.f32 %v168, %v392
  %394 = vmatmul.f32.gmra.mxu0 %v30
  %v395 = vpop.f32.mrf.mxu0
  %v396 = vadd.f32 %v168, %v395
  %397 = vmatmul.f32.gmra.mxu0 %v32
  %v398 = vpop.f32.mrf.mxu0
  %v399 = vadd.f32 %v168, %v398
  %400 = vmatmul.f32.gmra.mxu0 %v34
  %v401 = vpop.f32.mrf.mxu0
  %v402 = vadd.f32 %v168, %v401
  %403 = vmatmul.f32.gmra.mxu0 %v36
  %v404 = vpop.f32.mrf.mxu0
  %v405 = vadd.f32 %v168, %v404
  %406 = vmatmul.f32.gmra.mxu0 %v38
  %v407 = vpop.f32.mrf.mxu0
  %v408 = vadd.f32 %v168, %v407
  %409 = vmatmul.f32.gmra.mxu0 %v40
  %v410 = vpop.f32.mrf.mxu0
  %v411 = vadd.f32 %v168, %v410
  %412 = vmatmul.f32.gmra.mxu0 %v42
  %v413 = vpop.f32.mrf.mxu0
  %v414 = vadd.f32 %v168, %v413
  %415 = vmatmul.f32.gmra.mxu0 %v44
  %v416 = vpop.f32.mrf.mxu0
  %v417 = vadd.f32 %v168, %v416
  %418 = vmatmul.f32.gmra.mxu0 %v46
  %v419 = vpop.f32.mrf.mxu0
  %v420 = vadd.f32 %v168, %v419
  %421 = vmatmul.f32.gmra.mxu0 %v48
  %v422 = vpop.f32.mrf.mxu0
  %v423 = vadd.f32 %v168, %v422
  %424 = vmatmul.f32.gmra.mxu0 %v50
  %v425 = vpop.f32.mrf.mxu0
  %v426 = vadd.f32 %v168, %v425
  %427 = vmatmul.f32.gmra.mxu0 %v52
  %v428 = vpop.f32.mrf.mxu0
  %v429 = vadd.f32 %v168, %v428
  %430 = vmatmul.f32.gmra.mxu0 %v54
  %v431 = vpop.f32.mrf.mxu0
  %v432 = vadd.f32 %v168, %v431
  %433 = vmatmul.f32.gmra.mxu0 %v56
  %v434 = vpop.f32.mrf.mxu0
  %v435 = vadd.f32 %v168, %v434
  %436 = vmatmul.f32.gmra.mxu0 %v58
  %v437 = vpop.f32.mrf.mxu0
  %v438 = vadd.f32 %v168, %v437
  %439 = vmatmul.f32.gmra.mxu0 %v60
  %v440 = vpop.f32.mrf.mxu0
  %v441 = vadd.f32 %v168, %v440
  %442 = vmatmul.f32.gmra.mxu0 %v62
  %v443 = vpop.f32.mrf.mxu0
  %v444 = vadd.f32 %v168, %v443
  %445 = vmatmul.f32.gmra.mxu0 %v64
  %v446 = vpop.f32.mrf.mxu0
  %v447 = vadd.f32 %v168, %v446
  %448 = vmatmul.f32.gmra.mxu0 %v66
  %v449 = vpop.f32.mrf.mxu0
  %v450 = vadd.f32 %v168, %v449
  %451 = vmatmul.f32.gmra.mxu0 %v68
  %v452 = vpop.f32.mrf.mxu0
  %v453 = vadd.f32 %v168, %v452
  %454 = vmatmul.f32.gmra.mxu0 %v70
  %v455 = vpop.f32.mrf.mxu0
  %v456 = vadd.f32 %v168, %v455
  %457 = vmatmul.f32.gmra.mxu0 %v72
  %v458 = vpop.f32.mrf.mxu0
  %v459 = vadd.f32 %v168, %v458
  %460 = vmatmul.f32.gmra.mxu0 %v74
  %v461 = vpop.f32.mrf.mxu0
  %v462 = vadd.f32 %v168, %v461
  %463 = vmatmul.f32.gmra.mxu0 %v76
  %v464 = vpop.f32.mrf.mxu0
  %v465 = vadd.f32 %v168, %v464
  %466 = vmatmul.f32.gmra.mxu0 %v78
  %v467 = vpop.f32.mrf.mxu0
  %v468 = vadd.f32 %v168, %v467
  %469 = vmatmul.f32.gmra.mxu0 %v80
  %v470 = vpop.f32.mrf.mxu0
  %v471 = vadd.f32 %v168, %v470
  %472 = vmatmul.f32.gmra.mxu0 %v82
  %v473 = vpop.f32.mrf.mxu0
  %v474 = vadd.f32 %v168, %v473
  %475 = vmatmul.f32.gmra.mxu0 %v84
  %v476 = vpop.f32.mrf.mxu0
  %v477 = vadd.f32 %v168, %v476
  %478 = vmatmul.f32.gmra.mxu0 %v86
  %v479 = vpop.f32.mrf.mxu0
  %v480 = vadd.f32 %v168, %v479
  %481 = vmatmul.f32.gmra.mxu0 %v88
  %v482 = vpop.f32.mrf.mxu0
  %v483 = vadd.f32 %v168, %v482
  %484 = vmatmul.f32.gmra.mxu0 %v90
  %v485 = vpop.f32.mrf.mxu0
  %v486 = vadd.f32 %v168, %v485
  %487 = vmatmul.f32.gmra.mxu0 %v92
  %v488 = vpop.f32.mrf.mxu0
  %v489 = vadd.f32 %v168, %v488
  %490 = vmatmul.f32.gmra.mxu0 %v94
  %v491 = vpop.f32.mrf.mxu0
  %v492 = vadd.f32 %v168, %v491
  %493 = vmatmul.f32.gmra.mxu0 %v96
  %v494 = vpop.f32.mrf.mxu0
  %v495 = vadd.f32 %v168, %v494
  %496 = vmatmul.f32.gmra.mxu0 %v98
  %v497 = vpop.f32.mrf.mxu0
  %v498 = vadd.f32 %v168, %v497
  %499 = vmatmul.f32.gmra.mxu0 %v100
  %v500 = vpop.f32.mrf.mxu0
  %v501 = vadd.f32 %v168, %v500
  %502 = vmatmul.f32.gmra.mxu0 %v102
  %v503 = vpop.f32.mrf.mxu0
  %v504 = vadd.f32 %v168, %v503
  %505 = vmatmul.f32.gmra.mxu0 %v104
  %v506 = vpop.f32.mrf.mxu0
  %v507 = vadd.f32 %v168, %v506
  %508 = vmatmul.f32.gmra.mxu0 %v106
  %v509 = vpop.f32.mrf.mxu0
  %v510 = vadd.f32 %v168, %v509
  %511 = vmatmul.f32.gmra.mxu0 %v108
  %v512 = vpop.f32.mrf.mxu0
  %v513 = vadd.f32 %v168, %v512
  %514 = vmatmul.f32.gmra.mxu0 %v110
  %v515 = vpop.f32.mrf.mxu0
  %v516 = vadd.f32 %v168, %v515
  %517 = vmatmul.f32.gmra.mxu0 %v112
  %v518 = vpop.f32.mrf.mxu0
  %v519 = vadd.f32 %v168, %v518
  %520 = vmatmul.f32.gmra.mxu0 %v114
  %v521 = vpop.f32.mrf.mxu0
  %v522 = vadd.f32 %v168, %v521
  %523 = vmatmul.f32.gmra.mxu0 %v116
  %v524 = vpop.f32.mrf.mxu0
  %v525 = vadd.f32 %v168, %v524
  %526 = vmatmul.f32.gmra.mxu0 %v118
  %v527 = vpop.f32.mrf.mxu0
  %v528 = vadd.f32 %v168, %v527
  %529 = vmatmul.f32.gmra.mxu0 %v120
  %v530 = vpop.f32.mrf.mxu0
  %v531 = vadd.f32 %v168, %v530
  %532 = vmatmul.f32.gmra.mxu0 %v122
  %v533 = vpop.f32.mrf.mxu0
  %v534 = vadd.f32 %v168, %v533
  %535 = vmatmul.f32.gmra.mxu0 %v124
  %v536 = vpop.f32.mrf.mxu0
  %v537 = vadd.f32 %v168, %v536
  %538 = vmatmul.f32.gmra.mxu0 %v126
  %v539 = vpop.f32.mrf.mxu0
  %v540 = vadd.f32 %v168, %v539
  %541 = vmatmul.f32.gmra.mxu0 %v128
  %v542 = vpop.f32.mrf.mxu0
  %v543 = vadd.f32 %v168, %v542
  %544 = vmatmul.f32.gmra.mxu0 %v130
  %v545 = vpop.f32.mrf.mxu0
  %v546 = vadd.f32 %v168, %v545
  %547 = vmatmul.f32.gmra.mxu0 %v132
  %v548 = vpop.f32.mrf.mxu0
  %v549 = vadd.f32 %v168, %v548
  %550 = vmatmul.f32.gmra.mxu0 %v134
  %v551 = vpop.f32.mrf.mxu0
  %v552 = vadd.f32 %v168, %v551
  %553 = vmatmul.f32.gmra.mxu0 %v136
  %v554 = vpop.f32.mrf.mxu0
  %v555 = vadd.f32 %v168, %v554
  %556 = vmatmul.f32.gmra.mxu0 %v138
  %v557 = vpop.f32.mrf.mxu0
  %v558 = vadd.f32 %v168, %v557
  %559 = vmatmul.f32.gmra.mxu0 %v140
  %v560 = vpop.f32.mrf.mxu0
  %v561 = vadd.f32 %v168, %v560
  %562 = vmatmul.f32.gmra.mxu0 %v142
  %v563 = vpop.f32.mrf.mxu0
  %v564 = vadd.f32 %v168, %v563
  %565 = vmatmul.f32.gmra.mxu0 %v144
  %v566 = vpop.f32.mrf.mxu0
  %v567 = vadd.f32 %v168, %v566
  %568 = vmatmul.f32.gmra.mxu0 %v146
  %v569 = vpop.f32.mrf.mxu0
  %v570 = vadd.f32 %v168, %v569
  %571 = vdwg.mxu0
  %572 = vmatpush.msra.mxu0 0.0
  %573 = vmatpush.msra.mxu0 0.0
  %574 = vmatpush.msra.mxu0 0.0
  %575 = vmatpush.msra.mxu0 0.0
  %576 = vmatpush.msra.mxu0 0.0
  %577 = vmatpush.msra.mxu0 0.0
  %578 = vmatpush.msra.mxu0 0.0
  %579 = vmatpush.msra.mxu0 0.0
  %580 = vmatpush.msra.mxu0 0.0
  %581 = vmatpush.msra.mxu0 0.0
  %582 = vmatpush.msra.mxu0 0.0
  %583 = vmatpush.msra.mxu0 0.0
  %584 = vmatpush.msra.mxu0 0.0
  %585 = vmatpush.msra.mxu0 0.0
  %586 = vmatpush.msra.mxu0 %v165
  %587 = vmatpush.msra.mxu0 %v164
  %588 = vmatmul.f32.gmra.mxu0 %v172
  %v589 = vpop.f32.mrf.mxu0
  %v590 = vadd.f32 %v381, %v589
  %591 = vmatmul.f32.gmra.mxu0 %v175
  %v592 = vpop.f32.mrf.mxu0
  %v593 = vadd.f32 %v384, %v592
  %594 = vmatmul.f32.gmra.mxu0 %v178
  %v595 = vpop.f32.mrf.mxu0
  %v596 = vadd.f32 %v387, %v595
  %597 = vmatmul.f32.gmra.mxu0 %v181
  %v598 = vpop.f32.mrf.mxu0
  %v599 = vadd.f32 %v390, %v598
  %600 = vmatmul.f32.gmra.mxu0 %v184
  %v601 = vpop.f32.mrf.mxu0
  %v602 = vadd.f32 %v393, %v601
  %603 = vmatmul.f32.gmra.mxu0 %v187
  %v604 = vpop.f32.mrf.mxu0
  %v605 = vadd.f32 %v396, %v604
  %606 = vmatmul.f32.gmra.mxu0 %v190
  %v607 = vpop.f32.mrf.mxu0
  %v608 = vadd.f32 %v399, %v607
  %609 = vmatmul.f32.gmra.mxu0 %v193
  %v610 = vpop.f32.mrf.mxu0
  %v611 = vadd.f32 %v402, %v610
  %612 = vmatmul.f32.gmra.mxu0 %v196
  %v613 = vpop.f32.mrf.mxu0
  %v614 = vadd.f32 %v405, %v613
  %615 = vmatmul.f32.gmra.mxu0 %v199
  %v616 = vpop.f32.mrf.mxu0
  %v617 = vadd.f32 %v408, %v616
  %618 = vmatmul.f32.gmra.mxu0 %v202
  %v619 = vpop.f32.mrf.mxu0
  %v620 = vadd.f32 %v411, %v619
  %621 = vmatmul.f32.gmra.mxu0 %v205
  %v622 = vpop.f32.mrf.mxu0
  %v623 = vadd.f32 %v414, %v622
  %624 = vmatmul.f32.gmra.mxu0 %v208
  %v625 = vpop.f32.mrf.mxu0
  %v626 = vadd.f32 %v417, %v625
  %627 = vmatmul.f32.gmra.mxu0 %v211
  %v628 = vpop.f32.mrf.mxu0
  %v629 = vadd.f32 %v420, %v628
  %630 = vmatmul.f32.gmra.mxu0 %v214
  %v631 = vpop.f32.mrf.mxu0
  %v632 = vadd.f32 %v423, %v631
  %633 = vmatmul.f32.gmra.mxu0 %v217
  %v634 = vpop.f32.mrf.mxu0
  %v635 = vadd.f32 %v426, %v634
  %636 = vmatmul.f32.gmra.mxu0 %v220
  %v637 = vpop.f32.mrf.mxu0
  %v638 = vadd.f32 %v429, %v637
  %639 = vmatmul.f32.gmra.mxu0 %v223
  %v640 = vpop.f32.mrf.mxu0
  %v641 = vadd.f32 %v432, %v640
  %642 = vmatmul.f32.gmra.mxu0 %v226
  %v643 = vpop.f32.mrf.mxu0
  %v644 = vadd.f32 %v435, %v643
  %645 = vmatmul.f32.gmra.mxu0 %v229
  %v646 = vpop.f32.mrf.mxu0
  %v647 = vadd.f32 %v438, %v646
  %648 = vmatmul.f32.gmra.mxu0 %v232
  %v649 = vpop.f32.mrf.mxu0
  %v650 = vadd.f32 %v441, %v649
  %651 = vmatmul.f32.gmra.mxu0 %v235
  %v652 = vpop.f32.mrf.mxu0
  %v653 = vadd.f32 %v444, %v652
  %654 = vmatmul.f32.gmra.mxu0 %v238
  %v655 = vpop.f32.mrf.mxu0
  %v656 = vadd.f32 %v447, %v655
  %657 = vmatmul.f32.gmra.mxu0 %v241
  %v658 = vpop.f32.mrf.mxu0
  %v659 = vadd.f32 %v450, %v658
  %660 = vmatmul.f32.gmra.mxu0 %v244
  %v661 = vpop.f32.mrf.mxu0
  %v662 = vadd.f32 %v453, %v661
  %663 = vmatmul.f32.gmra.mxu0 %v247
  %v664 = vpop.f32.mrf.mxu0
  %v665 = vadd.f32 %v456, %v664
  %666 = vmatmul.f32.gmra.mxu0 %v250
  %v667 = vpop.f32.mrf.mxu0
  %v668 = vadd.f32 %v459, %v667
  %669 = vmatmul.f32.gmra.mxu0 %v253
  %v670 = vpop.f32.mrf.mxu0
  %v671 = vadd.f32 %v462, %v670
  %672 = vmatmul.f32.gmra.mxu0 %v256
  %v673 = vpop.f32.mrf.mxu0
  %v674 = vadd.f32 %v465, %v673
  %675 = vmatmul.f32.gmra.mxu0 %v259
  %v676 = vpop.f32.mrf.mxu0
  %v677 = vadd.f32 %v468, %v676
  %678 = vmatmul.f32.gmra.mxu0 %v262
  %v679 = vpop.f32.mrf.mxu0
  %v680 = vadd.f32 %v471, %v679
  %681 = vmatmul.f32.gmra.mxu0 %v265
  %v682 = vpop.f32.mrf.mxu0
  %v683 = vadd.f32 %v474, %v682
  %684 = vmatmul.f32.gmra.mxu0 %v268
  %v685 = vpop.f32.mrf.mxu0
  %v686 = vadd.f32 %v477, %v685
  %687 = vmatmul.f32.gmra.mxu0 %v271
  %v688 = vpop.f32.mrf.mxu0
  %v689 = vadd.f32 %v480, %v688
  %690 = vmatmul.f32.gmra.mxu0 %v274
  %v691 = vpop.f32.mrf.mxu0
  %v692 = vadd.f32 %v483, %v691
  %693 = vmatmul.f32.gmra.mxu0 %v277
  %v694 = vpop.f32.mrf.mxu0
  %v695 = vadd.f32 %v486, %v694
  %696 = vmatmul.f32.gmra.mxu0 %v280
  %v697 = vpop.f32.mrf.mxu0
  %v698 = vadd.f32 %v489, %v697
  %699 = vmatmul.f32.gmra.mxu0 %v283
  %v700 = vpop.f32.mrf.mxu0
  %v701 = vadd.f32 %v492, %v700
  %702 = vmatmul.f32.gmra.mxu0 %v286
  %v703 = vpop.f32.mrf.mxu0
  %v704 = vadd.f32 %v495, %v703
  %705 = vmatmul.f32.gmra.mxu0 %v289
  %v706 = vpop.f32.mrf.mxu0
  %v707 = vadd.f32 %v498, %v706
  %708 = vmatmul.f32.gmra.mxu0 %v292
  %v709 = vpop.f32.mrf.mxu0
  %v710 = vadd.f32 %v501, %v709
  %711 = vmatmul.f32.gmra.mxu0 %v295
  %v712 = vpop.f32.mrf.mxu0
  %v713 = vadd.f32 %v504, %v712
  %714 = vmatmul.f32.gmra.mxu0 %v298
  %v715 = vpop.f32.mrf.mxu0
  %v716 = vadd.f32 %v507, %v715
  %717 = vmatmul.f32.gmra.mxu0 %v301
  %v718 = vpop.f32.mrf.mxu0
  %v719 = vadd.f32 %v510, %v718
  %720 = vmatmul.f32.gmra.mxu0 %v304
  %v721 = vpop.f32.mrf.mxu0
  %v722 = vadd.f32 %v513, %v721
  %723 = vmatmul.f32.gmra.mxu0 %v307
  %v724 = vpop.f32.mrf.mxu0
  %v725 = vadd.f32 %v516, %v724
  %726 = vmatmul.f32.gmra.mxu0 %v310
  %v727 = vpop.f32.mrf.mxu0
  %v728 = vadd.f32 %v519, %v727
  %729 = vmatmul.f32.gmra.mxu0 %v313
  %v730 = vpop.f32.mrf.mxu0
  %v731 = vadd.f32 %v522, %v730
  %732 = vmatmul.f32.gmra.mxu0 %v316
  %v733 = vpop.f32.mrf.mxu0
  %v734 = vadd.f32 %v525, %v733
  %735 = vmatmul.f32.gmra.mxu0 %v319
  %v736 = vpop.f32.mrf.mxu0
  %v737 = vadd.f32 %v528, %v736
  %738 = vmatmul.f32.gmra.mxu0 %v322
  %v739 = vpop.f32.mrf.mxu0
  %v740 = vadd.f32 %v531, %v739
  %741 = vmatmul.f32.gmra.mxu0 %v325
  %v742 = vpop.f32.mrf.mxu0
  %v743 = vadd.f32 %v534, %v742
  %744 = vmatmul.f32.gmra.mxu0 %v328
  %v745 = vpop.f32.mrf.mxu0
  %v746 = vadd.f32 %v537, %v745
  %747 = vmatmul.f32.gmra.mxu0 %v331
  %v748 = vpop.f32.mrf.mxu0
  %v749 = vadd.f32 %v540, %v748
  %750 = vmatmul.f32.gmra.mxu0 %v334
  %v751 = vpop.f32.mrf.mxu0
  %v752 = vadd.f32 %v543, %v751
  %753 = vmatmul.f32.gmra.mxu0 %v337
  %v754 = vpop.f32.mrf.mxu0
  %v755 = vadd.f32 %v546, %v754
  %756 = vmatmul.f32.gmra.mxu0 %v340
  %v757 = vpop.f32.mrf.mxu0
  %v758 = vadd.f32 %v549, %v757
  %759 = vmatmul.f32.gmra.mxu0 %v343
  %v760 = vpop.f32.mrf.mxu0
  %v761 = vadd.f32 %v552, %v760
  %762 = vmatmul.f32.gmra.mxu0 %v346
  %v763 = vpop.f32.mrf.mxu0
  %v764 = vadd.f32 %v555, %v763
  %765 = vmatmul.f32.gmra.mxu0 %v349
  %v766 = vpop.f32.mrf.mxu0
  %v767 = vadd.f32 %v558, %v766
  %768 = vmatmul.f32.gmra.mxu0 %v352
  %v769 = vpop.f32.mrf.mxu0
  %v770 = vadd.f32 %v561, %v769
  %771 = vmatmul.f32.gmra.mxu0 %v355
  %v772 = vpop.f32.mrf.mxu0
  %v773 = vadd.f32 %v564, %v772
  %774 = vmatmul.f32.gmra.mxu0 %v358
  %v775 = vpop.f32.mrf.mxu0
  %v776 = vadd.f32 %v567, %v775
  %777 = vmatmul.f32.gmra.mxu0 %v361
  %v778 = vpop.f32.mrf.mxu0
  %v779 = vadd.f32 %v570, %v778
  %780 = vdwg.mxu0
  %v781 = vlaneseq
  %v782 = vshrl.u32 %v781, 7
  %v783 = vadd.s32 %v782, 8
  %v784 = vadd.s32 %v782, 16
  %v785 = vadd.s32 %v782, 24
  %v786 = vadd.s32 %v782, 32
  %v787 = vadd.s32 %v782, 40
  %v788 = vadd.s32 %v782, 48
  %v789 = vadd.s32 %v782, 56
  %v790 = vadd.s32 %v782, 64
  %v791 = vadd.s32 %v782, 72
  %v792 = vadd.s32 %v782, 80
  %v793 = vadd.s32 %v782, 88
  %v794 = vadd.s32 %v782, 96
  %v795 = vadd.s32 %v782, 104
  %v796 = vadd.s32 %v782, 112
  %v797 = vadd.s32 %v782, 120
  %v798 = vadd.s32 %v782, 128
  %v799 = vadd.s32 %v782, 136
  %v800 = vadd.s32 %v782, 144
  %v801 = vadd.s32 %v782, 152
  %v802 = vadd.s32 %v782, 160
  %v803 = vadd.s32 %v782, 168
  %v804 = vadd.s32 %v782, 176
  %v805 = vadd.s32 %v782, 184
  %v806 = vadd.s32 %v782, 192
  %v807 = vadd.s32 %v782, 200
  %v808 = vadd.s32 %v782, 208
  %v809 = vadd.s32 %v782, 216
  %v810 = vadd.s32 %v782, 224
  %v811 = vadd.s32 %v782, 232
  %v812 = vadd.s32 %v782, 240
  %v813 = vadd.s32 %v782, 248
  %v814 = vadd.s32 %v782, 256
  %v815 = vadd.s32 %v782, 264
  %v816 = vadd.s32 %v782, 272
  %v817 = vadd.s32 %v782, 280
  %v818 = vadd.s32 %v782, 288
  %v819 = vadd.s32 %v782, 296
  %v820 = vadd.s32 %v782, 304
  %v821 = vadd.s32 %v782, 312
  %v822 = vadd.s32 %v782, 320
  %v823 = vadd.s32 %v782, 328
  %v824 = vadd.s32 %v782, 336
  %v825 = vadd.s32 %v782, 344
  %v826 = vadd.s32 %v782, 352
  %v827 = vadd.s32 %v782, 360
  %v828 = vadd.s32 %v782, 368
  %v829 = vadd.s32 %v782, 376
  %v830 = vadd.s32 %v782, 384
  %v831 = vadd.s32 %v782, 392
  %v832 = vadd.s32 %v782, 400
  %v833 = vadd.s32 %v782, 408
  %v834 = vadd.s32 %v782, 416
  %v835 = vadd.s32 %v782, 424
  %v836 = vadd.s32 %v782, 432
  %v837 = vadd.s32 %v782, 440
  %v838 = vadd.s32 %v782, 448
  %v839 = vadd.s32 %v782, 456
  %v840 = vadd.s32 %v782, 464
  %v841 = vadd.s32 %v782, 472
  %v842 = vadd.s32 %v782, 480
  %v843 = vadd.s32 %v782, 488
  %v844 = vadd.s32 %v782, 496
  %v845 = vadd.s32 %v782, 504
  %vm846 = vcmp.lt.s32.totalorder %v782, 512
  %vm847 = vcmp.lt.s32.totalorder %v783, 512
  %vm848 = vcmp.lt.s32.totalorder %v784, 512
  %vm849 = vcmp.lt.s32.totalorder %v785, 512
  %vm850 = vcmp.lt.s32.totalorder %v786, 512
  %vm851 = vcmp.lt.s32.totalorder %v787, 512
  %vm852 = vcmp.lt.s32.totalorder %v788, 512
  %vm853 = vcmp.lt.s32.totalorder %v789, 512
  %vm854 = vcmp.lt.s32.totalorder %v790, 512
  %vm855 = vcmp.lt.s32.totalorder %v791, 512
  %vm856 = vcmp.lt.s32.totalorder %v792, 512
  %vm857 = vcmp.lt.s32.totalorder %v793, 512
  %vm858 = vcmp.lt.s32.totalorder %v794, 512
  %vm859 = vcmp.lt.s32.totalorder %v795, 512
  %vm860 = vcmp.lt.s32.totalorder %v796, 512
  %vm861 = vcmp.lt.s32.totalorder %v797, 512
  %vm862 = vcmp.lt.s32.totalorder %v798, 512
  %vm863 = vcmp.lt.s32.totalorder %v799, 512
  %vm864 = vcmp.lt.s32.totalorder %v800, 512
  %vm865 = vcmp.lt.s32.totalorder %v801, 512
  %vm866 = vcmp.lt.s32.totalorder %v802, 512
  %vm867 = vcmp.lt.s32.totalorder %v803, 512
  %vm868 = vcmp.lt.s32.totalorder %v804, 512
  %vm869 = vcmp.lt.s32.totalorder %v805, 512
  %vm870 = vcmp.lt.s32.totalorder %v806, 512
  %vm871 = vcmp.lt.s32.totalorder %v807, 512
  %vm872 = vcmp.lt.s32.totalorder %v808, 512
  %vm873 = vcmp.lt.s32.totalorder %v809, 512
  %vm874 = vcmp.lt.s32.totalorder %v810, 512
  %vm875 = vcmp.lt.s32.totalorder %v811, 512
  %vm876 = vcmp.lt.s32.totalorder %v812, 512
  %vm877 = vcmp.lt.s32.totalorder %v813, 512
  %vm878 = vcmp.lt.s32.totalorder %v814, 512
  %vm879 = vcmp.lt.s32.totalorder %v815, 512
  %vm880 = vcmp.lt.s32.totalorder %v816, 512
  %vm881 = vcmp.lt.s32.totalorder %v817, 512
  %vm882 = vcmp.lt.s32.totalorder %v818, 512
  %vm883 = vcmp.lt.s32.totalorder %v819, 512
  %vm884 = vcmp.lt.s32.totalorder %v820, 512
  %vm885 = vcmp.lt.s32.totalorder %v821, 512
  %vm886 = vcmp.lt.s32.totalorder %v822, 512
  %vm887 = vcmp.lt.s32.totalorder %v823, 512
  %vm888 = vcmp.lt.s32.totalorder %v824, 512
  %vm889 = vcmp.lt.s32.totalorder %v825, 512
  %vm890 = vcmp.lt.s32.totalorder %v826, 512
  %vm891 = vcmp.lt.s32.totalorder %v827, 512
  %vm892 = vcmp.lt.s32.totalorder %v828, 512
  %vm893 = vcmp.lt.s32.totalorder %v829, 512
  %vm894 = vcmp.lt.s32.totalorder %v830, 512
  %vm895 = vcmp.lt.s32.totalorder %v831, 512
  %vm896 = vcmp.lt.s32.totalorder %v832, 512
  %vm897 = vcmp.lt.s32.totalorder %v833, 512
  %vm898 = vcmp.lt.s32.totalorder %v834, 512
  %vm899 = vcmp.lt.s32.totalorder %v835, 512
  %vm900 = vcmp.lt.s32.totalorder %v836, 512
  %vm901 = vcmp.lt.s32.totalorder %v837, 512
  %vm902 = vcmp.lt.s32.totalorder %v838, 512
  %vm903 = vcmp.lt.s32.totalorder %v839, 512
  %vm904 = vcmp.lt.s32.totalorder %v840, 512
  %vm905 = vcmp.lt.s32.totalorder %v841, 512
  %vm906 = vcmp.lt.s32.totalorder %v842, 512
  %vm907 = vcmp.lt.s32.totalorder %v843, 512
  %vm908 = vcmp.lt.s32.totalorder %v844, 512
  %vm909 = vcmp.lt.s32.totalorder %v845, 512
  %v910 = vsel %vm846, 1, 0
  %v911 = vsel %vm847, 1, 0
  %v912 = vsel %vm848, 1, 0
  %v913 = vsel %vm849, 1, 0
  %v914 = vsel %vm850, 1, 0
  %v915 = vsel %vm851, 1, 0
  %v916 = vsel %vm852, 1, 0
  %v917 = vsel %vm853, 1, 0
  %v918 = vsel %vm854, 1, 0
  %v919 = vsel %vm855, 1, 0
  %v920 = vsel %vm856, 1, 0
  %v921 = vsel %vm857, 1, 0
  %v922 = vsel %vm858, 1, 0
  %v923 = vsel %vm859, 1, 0
  %v924 = vsel %vm860, 1, 0
  %v925 = vsel %vm861, 1, 0
  %v926 = vsel %vm862, 1, 0
  %v927 = vsel %vm863, 1, 0
  %v928 = vsel %vm864, 1, 0
  %v929 = vsel %vm865, 1, 0
  %v930 = vsel %vm866, 1, 0
  %v931 = vsel %vm867, 1, 0
  %v932 = vsel %vm868, 1, 0
  %v933 = vsel %vm869, 1, 0
  %v934 = vsel %vm870, 1, 0
  %v935 = vsel %vm871, 1, 0
  %v936 = vsel %vm872, 1, 0
  %v937 = vsel %vm873, 1, 0
  %v938 = vsel %vm874, 1, 0
  %v939 = vsel %vm875, 1, 0
  %v940 = vsel %vm876, 1, 0
  %v941 = vsel %vm877, 1, 0
  %v942 = vsel %vm878, 1, 0
  %v943 = vsel %vm879, 1, 0
  %v944 = vsel %vm880, 1, 0
  %v945 = vsel %vm881, 1, 0
  %v946 = vsel %vm882, 1, 0
  %v947 = vsel %vm883, 1, 0
  %v948 = vsel %vm884, 1, 0
  %v949 = vsel %vm885, 1, 0
  %v950 = vsel %vm886, 1, 0
  %v951 = vsel %vm887, 1, 0
  %v952 = vsel %vm888, 1, 0
  %v953 = vsel %vm889, 1, 0
  %v954 = vsel %vm890, 1, 0
  %v955 = vsel %vm891, 1, 0
  %v956 = vsel %vm892, 1, 0
  %v957 = vsel %vm893, 1, 0
  %v958 = vsel %vm894, 1, 0
  %v959 = vsel %vm895, 1, 0
  %v960 = vsel %vm896, 1, 0
  %v961 = vsel %vm897, 1, 0
  %v962 = vsel %vm898, 1, 0
  %v963 = vsel %vm899, 1, 0
  %v964 = vsel %vm900, 1, 0
  %v965 = vsel %vm901, 1, 0
  %v966 = vsel %vm902, 1, 0
  %v967 = vsel %vm903, 1, 0
  %v968 = vsel %vm904, 1, 0
  %v969 = vsel %vm905, 1, 0
  %v970 = vsel %vm906, 1, 0
  %v971 = vsel %vm907, 1, 0
  %v972 = vsel %vm908, 1, 0
  %v973 = vsel %vm909, 1, 0
  %v974 = vcvt.s32.f32 %v910
  %v975 = vcvt.s32.f32 %v911
  %v976 = vcvt.s32.f32 %v912
  %v977 = vcvt.s32.f32 %v913
  %v978 = vcvt.s32.f32 %v914
  %v979 = vcvt.s32.f32 %v915
  %v980 = vcvt.s32.f32 %v916
  %v981 = vcvt.s32.f32 %v917
  %v982 = vcvt.s32.f32 %v918
  %v983 = vcvt.s32.f32 %v919
  %v984 = vcvt.s32.f32 %v920
  %v985 = vcvt.s32.f32 %v921
  %v986 = vcvt.s32.f32 %v922
  %v987 = vcvt.s32.f32 %v923
  %v988 = vcvt.s32.f32 %v924
  %v989 = vcvt.s32.f32 %v925
  %v990 = vcvt.s32.f32 %v926
  %v991 = vcvt.s32.f32 %v927
  %v992 = vcvt.s32.f32 %v928
  %v993 = vcvt.s32.f32 %v929
  %v994 = vcvt.s32.f32 %v930
  %v995 = vcvt.s32.f32 %v931
  %v996 = vcvt.s32.f32 %v932
  %v997 = vcvt.s32.f32 %v933
  %v998 = vcvt.s32.f32 %v934
  %v999 = vcvt.s32.f32 %v935
  %v1000 = vcvt.s32.f32 %v936
  %v1001 = vcvt.s32.f32 %v937
  %v1002 = vcvt.s32.f32 %v938
  %v1003 = vcvt.s32.f32 %v939
  %v1004 = vcvt.s32.f32 %v940
  %v1005 = vcvt.s32.f32 %v941
  %v1006 = vcvt.s32.f32 %v942
  %v1007 = vcvt.s32.f32 %v943
  %v1008 = vcvt.s32.f32 %v944
  %v1009 = vcvt.s32.f32 %v945
  %v1010 = vcvt.s32.f32 %v946
  %v1011 = vcvt.s32.f32 %v947
  %v1012 = vcvt.s32.f32 %v948
  %v1013 = vcvt.s32.f32 %v949
  %v1014 = vcvt.s32.f32 %v950
  %v1015 = vcvt.s32.f32 %v951
  %v1016 = vcvt.s32.f32 %v952
  %v1017 = vcvt.s32.f32 %v953
  %v1018 = vcvt.s32.f32 %v954
  %v1019 = vcvt.s32.f32 %v955
  %v1020 = vcvt.s32.f32 %v956
  %v1021 = vcvt.s32.f32 %v957
  %v1022 = vcvt.s32.f32 %v958
  %v1023 = vcvt.s32.f32 %v959
  %v1024 = vcvt.s32.f32 %v960
  %v1025 = vcvt.s32.f32 %v961
  %v1026 = vcvt.s32.f32 %v962
  %v1027 = vcvt.s32.f32 %v963
  %v1028 = vcvt.s32.f32 %v964
  %v1029 = vcvt.s32.f32 %v965
  %v1030 = vcvt.s32.f32 %v966
  %v1031 = vcvt.s32.f32 %v967
  %v1032 = vcvt.s32.f32 %v968
  %v1033 = vcvt.s32.f32 %v969
  %v1034 = vcvt.s32.f32 %v970
  %v1035 = vcvt.s32.f32 %v971
  %v1036 = vcvt.s32.f32 %v972
  %v1037 = vcvt.s32.f32 %v973
  %v1038 = vmul.f32 %v590, %v974
  %v1039 = vmul.f32 %v593, %v975
  %v1040 = vmul.f32 %v596, %v976
  %v1041 = vmul.f32 %v599, %v977
  %v1042 = vmul.f32 %v602, %v978
  %v1043 = vmul.f32 %v605, %v979
  %v1044 = vmul.f32 %v608, %v980
  %v1045 = vmul.f32 %v611, %v981
  %v1046 = vmul.f32 %v614, %v982
  %v1047 = vmul.f32 %v617, %v983
  %v1048 = vmul.f32 %v620, %v984
  %v1049 = vmul.f32 %v623, %v985
  %v1050 = vmul.f32 %v626, %v986
  %v1051 = vmul.f32 %v629, %v987
  %v1052 = vmul.f32 %v632, %v988
  %v1053 = vmul.f32 %v635, %v989
  %v1054 = vmul.f32 %v638, %v990
  %v1055 = vmul.f32 %v641, %v991
  %v1056 = vmul.f32 %v644, %v992
  %v1057 = vmul.f32 %v647, %v993
  %v1058 = vmul.f32 %v650, %v994
  %v1059 = vmul.f32 %v653, %v995
  %v1060 = vmul.f32 %v656, %v996
  %v1061 = vmul.f32 %v659, %v997
  %v1062 = vmul.f32 %v662, %v998
  %v1063 = vmul.f32 %v665, %v999
  %v1064 = vmul.f32 %v668, %v1000
  %v1065 = vmul.f32 %v671, %v1001
  %v1066 = vmul.f32 %v674, %v1002
  %v1067 = vmul.f32 %v677, %v1003
  %v1068 = vmul.f32 %v680, %v1004
  %v1069 = vmul.f32 %v683, %v1005
  %v1070 = vmul.f32 %v686, %v1006
  %v1071 = vmul.f32 %v689, %v1007
  %v1072 = vmul.f32 %v692, %v1008
  %v1073 = vmul.f32 %v695, %v1009
  %v1074 = vmul.f32 %v698, %v1010
  %v1075 = vmul.f32 %v701, %v1011
  %v1076 = vmul.f32 %v704, %v1012
  %v1077 = vmul.f32 %v707, %v1013
  %v1078 = vmul.f32 %v710, %v1014
  %v1079 = vmul.f32 %v713, %v1015
  %v1080 = vmul.f32 %v716, %v1016
  %v1081 = vmul.f32 %v719, %v1017
  %v1082 = vmul.f32 %v722, %v1018
  %v1083 = vmul.f32 %v725, %v1019
  %v1084 = vmul.f32 %v728, %v1020
  %v1085 = vmul.f32 %v731, %v1021
  %v1086 = vmul.f32 %v734, %v1022
  %v1087 = vmul.f32 %v737, %v1023
  %v1088 = vmul.f32 %v740, %v1024
  %v1089 = vmul.f32 %v743, %v1025
  %v1090 = vmul.f32 %v746, %v1026
  %v1091 = vmul.f32 %v749, %v1027
  %v1092 = vmul.f32 %v752, %v1028
  %v1093 = vmul.f32 %v755, %v1029
  %v1094 = vmul.f32 %v758, %v1030
  %v1095 = vmul.f32 %v761, %v1031
  %v1096 = vmul.f32 %v764, %v1032
  %v1097 = vmul.f32 %v767, %v1033
  %v1098 = vmul.f32 %v770, %v1034
  %v1099 = vmul.f32 %v773, %v1035
  %v1100 = vmul.f32 %v776, %v1036
  %v1101 = vmul.f32 %v779, %v1037
  %v1102 = vadd.f32 %v1038, %v1039
  %v1103 = vadd.f32 %v1102, %v1040
  %v1104 = vadd.f32 %v1103, %v1041
  %v1105 = vadd.f32 %v1104, %v1042
  %v1106 = vadd.f32 %v1105, %v1043
  %v1107 = vadd.f32 %v1106, %v1044
  %v1108 = vadd.f32 %v1107, %v1045
  %v1109 = vadd.f32 %v1108, %v1046
  %v1110 = vadd.f32 %v1109, %v1047
  %v1111 = vadd.f32 %v1110, %v1048
  %v1112 = vadd.f32 %v1111, %v1049
  %v1113 = vadd.f32 %v1112, %v1050
  %v1114 = vadd.f32 %v1113, %v1051
  %v1115 = vadd.f32 %v1114, %v1052
  %v1116 = vadd.f32 %v1115, %v1053
  %v1117 = vadd.f32 %v1116, %v1054
  %v1118 = vadd.f32 %v1117, %v1055
  %v1119 = vadd.f32 %v1118, %v1056
  %v1120 = vadd.f32 %v1119, %v1057
  %v1121 = vadd.f32 %v1120, %v1058
  %v1122 = vadd.f32 %v1121, %v1059
  %v1123 = vadd.f32 %v1122, %v1060
  %v1124 = vadd.f32 %v1123, %v1061
  %v1125 = vadd.f32 %v1124, %v1062
  %v1126 = vadd.f32 %v1125, %v1063
  %v1127 = vadd.f32 %v1126, %v1064
  %v1128 = vadd.f32 %v1127, %v1065
  %v1129 = vadd.f32 %v1128, %v1066
  %v1130 = vadd.f32 %v1129, %v1067
  %v1131 = vadd.f32 %v1130, %v1068
  %v1132 = vadd.f32 %v1131, %v1069
  %v1133 = vadd.f32 %v1132, %v1070
  %v1134 = vadd.f32 %v1133, %v1071
  %v1135 = vadd.f32 %v1134, %v1072
  %v1136 = vadd.f32 %v1135, %v1073
  %v1137 = vadd.f32 %v1136, %v1074
  %v1138 = vadd.f32 %v1137, %v1075
  %v1139 = vadd.f32 %v1138, %v1076
  %v1140 = vadd.f32 %v1139, %v1077
  %v1141 = vadd.f32 %v1140, %v1078
  %v1142 = vadd.f32 %v1141, %v1079
  %v1143 = vadd.f32 %v1142, %v1080
  %v1144 = vadd.f32 %v1143, %v1081
  %v1145 = vadd.f32 %v1144, %v1082
  %v1146 = vadd.f32 %v1145, %v1083
  %v1147 = vadd.f32 %v1146, %v1084
  %v1148 = vadd.f32 %v1147, %v1085
  %v1149 = vadd.f32 %v1148, %v1086
  %v1150 = vadd.f32 %v1149, %v1087
  %v1151 = vadd.f32 %v1150, %v1088
  %v1152 = vadd.f32 %v1151, %v1089
  %v1153 = vadd.f32 %v1152, %v1090
  %v1154 = vadd.f32 %v1153, %v1091
  %v1155 = vadd.f32 %v1154, %v1092
  %v1156 = vadd.f32 %v1155, %v1093
  %v1157 = vadd.f32 %v1156, %v1094
  %v1158 = vadd.f32 %v1157, %v1095
  %v1159 = vadd.f32 %v1158, %v1096
  %v1160 = vadd.f32 %v1159, %v1097
  %v1161 = vadd.f32 %v1160, %v1098
  %v1162 = vadd.f32 %v1161, %v1099
  %v1163 = vadd.f32 %v1162, %v1100
  %v1164 = vadd.f32 %v1163, %v1101
  %v1165 = vrot.slane %v1164, 4
  %v1166 = vadd.f32 %v1164, %v1165
  %v1167 = vrot.slane %v1166, 2
  %v1168 = vadd.f32 %v1166, %v1167
  %v1169 = vrot.slane %v1168, 1
  %v1170 = vadd.f32 %v1168, %v1169
  %v1171 = vmul.f32 %v1170, 0.001953125
  %v1172 = vmul.f32 %v1038, %v1038
  %v1173 = vmul.f32 %v1039, %v1039
  %v1174 = vmul.f32 %v1040, %v1040
  %v1175 = vmul.f32 %v1041, %v1041
  %v1176 = vmul.f32 %v1042, %v1042
  %v1177 = vmul.f32 %v1043, %v1043
  %v1178 = vmul.f32 %v1044, %v1044
  %v1179 = vmul.f32 %v1045, %v1045
  %v1180 = vmul.f32 %v1046, %v1046
  %v1181 = vmul.f32 %v1047, %v1047
  %v1182 = vmul.f32 %v1048, %v1048
  %v1183 = vmul.f32 %v1049, %v1049
  %v1184 = vmul.f32 %v1050, %v1050
  %v1185 = vmul.f32 %v1051, %v1051
  %v1186 = vmul.f32 %v1052, %v1052
  %v1187 = vmul.f32 %v1053, %v1053
  %v1188 = vmul.f32 %v1054, %v1054
  %v1189 = vmul.f32 %v1055, %v1055
  %v1190 = vmul.f32 %v1056, %v1056
  %v1191 = vmul.f32 %v1057, %v1057
  %v1192 = vmul.f32 %v1058, %v1058
  %v1193 = vmul.f32 %v1059, %v1059
  %v1194 = vmul.f32 %v1060, %v1060
  %v1195 = vmul.f32 %v1061, %v1061
  %v1196 = vmul.f32 %v1062, %v1062
  %v1197 = vmul.f32 %v1063, %v1063
  %v1198 = vmul.f32 %v1064, %v1064
  %v1199 = vmul.f32 %v1065, %v1065
  %v1200 = vmul.f32 %v1066, %v1066
  %v1201 = vmul.f32 %v1067, %v1067
  %v1202 = vmul.f32 %v1068, %v1068
  %v1203 = vmul.f32 %v1069, %v1069
  %v1204 = vmul.f32 %v1070, %v1070
  %v1205 = vmul.f32 %v1071, %v1071
  %v1206 = vmul.f32 %v1072, %v1072
  %v1207 = vmul.f32 %v1073, %v1073
  %v1208 = vmul.f32 %v1074, %v1074
  %v1209 = vmul.f32 %v1075, %v1075
  %v1210 = vmul.f32 %v1076, %v1076
  %v1211 = vmul.f32 %v1077, %v1077
  %v1212 = vmul.f32 %v1078, %v1078
  %v1213 = vmul.f32 %v1079, %v1079
  %v1214 = vmul.f32 %v1080, %v1080
  %v1215 = vmul.f32 %v1081, %v1081
  %v1216 = vmul.f32 %v1082, %v1082
  %v1217 = vmul.f32 %v1083, %v1083
  %v1218 = vmul.f32 %v1084, %v1084
  %v1219 = vmul.f32 %v1085, %v1085
  %v1220 = vmul.f32 %v1086, %v1086
  %v1221 = vmul.f32 %v1087, %v1087
  %v1222 = vmul.f32 %v1088, %v1088
  %v1223 = vmul.f32 %v1089, %v1089
  %v1224 = vmul.f32 %v1090, %v1090
  %v1225 = vmul.f32 %v1091, %v1091
  %v1226 = vmul.f32 %v1092, %v1092
  %v1227 = vmul.f32 %v1093, %v1093
  %v1228 = vmul.f32 %v1094, %v1094
  %v1229 = vmul.f32 %v1095, %v1095
  %v1230 = vmul.f32 %v1096, %v1096
  %v1231 = vmul.f32 %v1097, %v1097
  %v1232 = vmul.f32 %v1098, %v1098
  %v1233 = vmul.f32 %v1099, %v1099
  %v1234 = vmul.f32 %v1100, %v1100
  %v1235 = vmul.f32 %v1101, %v1101
  %v1236 = vadd.f32 %v1172, %v1173
  %v1237 = vadd.f32 %v1236, %v1174
  %v1238 = vadd.f32 %v1237, %v1175
  %v1239 = vadd.f32 %v1238, %v1176
  %v1240 = vadd.f32 %v1239, %v1177
  %v1241 = vadd.f32 %v1240, %v1178
  %v1242 = vadd.f32 %v1241, %v1179
  %v1243 = vadd.f32 %v1242, %v1180
  %v1244 = vadd.f32 %v1243, %v1181
  %v1245 = vadd.f32 %v1244, %v1182
  %v1246 = vadd.f32 %v1245, %v1183
  %v1247 = vadd.f32 %v1246, %v1184
  %v1248 = vadd.f32 %v1247, %v1185
  %v1249 = vadd.f32 %v1248, %v1186
  %v1250 = vadd.f32 %v1249, %v1187
  %v1251 = vadd.f32 %v1250, %v1188
  %v1252 = vadd.f32 %v1251, %v1189
  %v1253 = vadd.f32 %v1252, %v1190
  %v1254 = vadd.f32 %v1253, %v1191
  %v1255 = vadd.f32 %v1254, %v1192
  %v1256 = vadd.f32 %v1255, %v1193
  %v1257 = vadd.f32 %v1256, %v1194
  %v1258 = vadd.f32 %v1257, %v1195
  %v1259 = vadd.f32 %v1258, %v1196
  %v1260 = vadd.f32 %v1259, %v1197
  %v1261 = vadd.f32 %v1260, %v1198
  %v1262 = vadd.f32 %v1261, %v1199
  %v1263 = vadd.f32 %v1262, %v1200
  %v1264 = vadd.f32 %v1263, %v1201
  %v1265 = vadd.f32 %v1264, %v1202
  %v1266 = vadd.f32 %v1265, %v1203
  %v1267 = vadd.f32 %v1266, %v1204
  %v1268 = vadd.f32 %v1267, %v1205
  %v1269 = vadd.f32 %v1268, %v1206
  %v1270 = vadd.f32 %v1269, %v1207
  %v1271 = vadd.f32 %v1270, %v1208
  %v1272 = vadd.f32 %v1271, %v1209
  %v1273 = vadd.f32 %v1272, %v1210
  %v1274 = vadd.f32 %v1273, %v1211
  %v1275 = vadd.f32 %v1274, %v1212
  %v1276 = vadd.f32 %v1275, %v1213
  %v1277 = vadd.f32 %v1276, %v1214
  %v1278 = vadd.f32 %v1277, %v1215
  %v1279 = vadd.f32 %v1278, %v1216
  %v1280 = vadd.f32 %v1279, %v1217
  %v1281 = vadd.f32 %v1280, %v1218
  %v1282 = vadd.f32 %v1281, %v1219
  %v1283 = vadd.f32 %v1282, %v1220
  %v1284 = vadd.f32 %v1283, %v1221
  %v1285 = vadd.f32 %v1284, %v1222
  %v1286 = vadd.f32 %v1285, %v1223
  %v1287 = vadd.f32 %v1286, %v1224
  %v1288 = vadd.f32 %v1287, %v1225
  %v1289 = vadd.f32 %v1288, %v1226
  %v1290 = vadd.f32 %v1289, %v1227
  %v1291 = vadd.f32 %v1290, %v1228
  %v1292 = vadd.f32 %v1291, %v1229
  %v1293 = vadd.f32 %v1292, %v1230
  %v1294 = vadd.f32 %v1293, %v1231
  %v1295 = vadd.f32 %v1294, %v1232
  %v1296 = vadd.f32 %v1295, %v1233
  %v1297 = vadd.f32 %v1296, %v1234
  %v1298 = vadd.f32 %v1297, %v1235
  %v1299 = vrot.slane %v1298, 4
  %v1300 = vadd.f32 %v1298, %v1299
  %v1301 = vrot.slane %v1300, 2
  %v1302 = vadd.f32 %v1300, %v1301
  %v1303 = vrot.slane %v1302, 1
  %v1304 = vadd.f32 %v1302, %v1303
  %v1305 = vmul.f32 %v1304, 0.001953125
  %v1306 = vmul.f32 %v1171, %v1171
  %v1307 = vsub.f32 %v1305, %v1306
  %v1308 = vld [vmem:[%s3] sm:$0x1]
  %v1309 = vadd.f32 %v1307, 1e-05
  %v1310 = vrsqrt.pop %v1309
  %v1311 = vmul.f32 %v1310, %v1309
  %v1312 = vmul.f32 %v1311, %v1310
  %v1313 = vmul.f32 0.5, %v1312
  %v1314 = vsub.f32 1.5, %v1313
  %v1315 = vmul.f32 %v1310, %v1314
  %vm1316 = vweird.f32 %v1309
  %vm1317 = vweird.f32 %v1310
  %vm1318 = vmor %vm1316, %vm1317
  %v1319 = vsel %vm1318, %v1310, %v1315
  %v1320 = vmul.f32 %v1308, %v1319
  %v1321 = vld [vmem:[%s4] sm:$0x1]
  %v1322 = vmul.f32 %v1171, %v1320
  %v1323 = vsub.f32 %v1321, %v1322
  %v1325 = vperm.slane %v1320, 0
  %v1327 = vmul.f32 %v590, %v1325
  %v1328 = vmul.f32 %v593, %v1325
  %v1329 = vmul.f32 %v596, %v1325
  %v1330 = vmul.f32 %v599, %v1325
  %v1331 = vmul.f32 %v602, %v1325
  %v1332 = vmul.f32 %v605, %v1325
  %v1333 = vmul.f32 %v608, %v1325
  %v1334 = vmul.f32 %v611, %v1325
  %v1335 = vmul.f32 %v614, %v1325
  %v1336 = vmul.f32 %v617, %v1325
  %v1337 = vmul.f32 %v620, %v1325
  %v1338 = vmul.f32 %v623, %v1325
  %v1339 = vmul.f32 %v626, %v1325
  %v1340 = vmul.f32 %v629, %v1325
  %v1341 = vmul.f32 %v632, %v1325
  %v1342 = vmul.f32 %v635, %v1325
  %v1343 = vmul.f32 %v638, %v1325
  %v1344 = vmul.f32 %v641, %v1325
  %v1345 = vmul.f32 %v644, %v1325
  %v1346 = vmul.f32 %v647, %v1325
  %v1347 = vmul.f32 %v650, %v1325
  %v1348 = vmul.f32 %v653, %v1325
  %v1349 = vmul.f32 %v656, %v1325
  %v1350 = vmul.f32 %v659, %v1325
  %v1351 = vmul.f32 %v662, %v1325
  %v1352 = vmul.f32 %v665, %v1325
  %v1353 = vmul.f32 %v668, %v1325
  %v1354 = vmul.f32 %v671, %v1325
  %v1355 = vmul.f32 %v674, %v1325
  %v1356 = vmul.f32 %v677, %v1325
  %v1357 = vmul.f32 %v680, %v1325
  %v1358 = vmul.f32 %v683, %v1325
  %v1359 = vmul.f32 %v686, %v1325
  %v1360 = vmul.f32 %v689, %v1325
  %v1361 = vmul.f32 %v692, %v1325
  %v1362 = vmul.f32 %v695, %v1325
  %v1363 = vmul.f32 %v698, %v1325
  %v1364 = vmul.f32 %v701, %v1325
  %v1365 = vmul.f32 %v704, %v1325
  %v1366 = vmul.f32 %v707, %v1325
  %v1367 = vmul.f32 %v710, %v1325
  %v1368 = vmul.f32 %v713, %v1325
  %v1369 = vmul.f32 %v716, %v1325
  %v1370 = vmul.f32 %v719, %v1325
  %v1371 = vmul.f32 %v722, %v1325
  %v1372 = vmul.f32 %v725, %v1325
  %v1373 = vmul.f32 %v728, %v1325
  %v1374 = vmul.f32 %v731, %v1325
  %v1375 = vmul.f32 %v734, %v1325
  %v1376 = vmul.f32 %v737, %v1325
  %v1377 = vmul.f32 %v740, %v1325
  %v1378 = vmul.f32 %v743, %v1325
  %v1379 = vmul.f32 %v746, %v1325
  %v1380 = vmul.f32 %v749, %v1325
  %v1381 = vmul.f32 %v752, %v1325
  %v1382 = vmul.f32 %v755, %v1325
  %v1383 = vmul.f32 %v758, %v1325
  %v1384 = vmul.f32 %v761, %v1325
  %v1385 = vmul.f32 %v764, %v1325
  %v1386 = vmul.f32 %v767, %v1325
  %v1387 = vmul.f32 %v770, %v1325
  %v1388 = vmul.f32 %v773, %v1325
  %v1389 = vmul.f32 %v776, %v1325
  %v1390 = vmul.f32 %v779, %v1325
  %v1392 = vperm.slane %v1323, 0
  %v1394 = vadd.f32 %v1327, %v1392
  %v1395 = vadd.f32 %v1328, %v1392
  %v1396 = vadd.f32 %v1329, %v1392
  %v1397 = vadd.f32 %v1330, %v1392
  %v1398 = vadd.f32 %v1331, %v1392
  %v1399 = vadd.f32 %v1332, %v1392
  %v1400 = vadd.f32 %v1333, %v1392
  %v1401 = vadd.f32 %v1334, %v1392
  %v1402 = vadd.f32 %v1335, %v1392
  %v1403 = vadd.f32 %v1336, %v1392
  %v1404 = vadd.f32 %v1337, %v1392
  %v1405 = vadd.f32 %v1338, %v1392
  %v1406 = vadd.f32 %v1339, %v1392
  %v1407 = vadd.f32 %v1340, %v1392
  %v1408 = vadd.f32 %v1341, %v1392
  %v1409 = vadd.f32 %v1342, %v1392
  %v1410 = vadd.f32 %v1343, %v1392
  %v1411 = vadd.f32 %v1344, %v1392
  %v1412 = vadd.f32 %v1345, %v1392
  %v1413 = vadd.f32 %v1346, %v1392
  %v1414 = vadd.f32 %v1347, %v1392
  %v1415 = vadd.f32 %v1348, %v1392
  %v1416 = vadd.f32 %v1349, %v1392
  %v1417 = vadd.f32 %v1350, %v1392
  %v1418 = vadd.f32 %v1351, %v1392
  %v1419 = vadd.f32 %v1352, %v1392
  %v1420 = vadd.f32 %v1353, %v1392
  %v1421 = vadd.f32 %v1354, %v1392
  %v1422 = vadd.f32 %v1355, %v1392
  %v1423 = vadd.f32 %v1356, %v1392
  %v1424 = vadd.f32 %v1357, %v1392
  %v1425 = vadd.f32 %v1358, %v1392
  %v1426 = vadd.f32 %v1359, %v1392
  %v1427 = vadd.f32 %v1360, %v1392
  %v1428 = vadd.f32 %v1361, %v1392
  %v1429 = vadd.f32 %v1362, %v1392
  %v1430 = vadd.f32 %v1363, %v1392
  %v1431 = vadd.f32 %v1364, %v1392
  %v1432 = vadd.f32 %v1365, %v1392
  %v1433 = vadd.f32 %v1366, %v1392
  %v1434 = vadd.f32 %v1367, %v1392
  %v1435 = vadd.f32 %v1368, %v1392
  %v1436 = vadd.f32 %v1369, %v1392
  %v1437 = vadd.f32 %v1370, %v1392
  %v1438 = vadd.f32 %v1371, %v1392
  %v1439 = vadd.f32 %v1372, %v1392
  %v1440 = vadd.f32 %v1373, %v1392
  %v1441 = vadd.f32 %v1374, %v1392
  %v1442 = vadd.f32 %v1375, %v1392
  %v1443 = vadd.f32 %v1376, %v1392
  %v1444 = vadd.f32 %v1377, %v1392
  %v1445 = vadd.f32 %v1378, %v1392
  %v1446 = vadd.f32 %v1379, %v1392
  %v1447 = vadd.f32 %v1380, %v1392
  %v1448 = vadd.f32 %v1381, %v1392
  %v1449 = vadd.f32 %v1382, %v1392
  %v1450 = vadd.f32 %v1383, %v1392
  %v1451 = vadd.f32 %v1384, %v1392
  %v1452 = vadd.f32 %v1385, %v1392
  %v1453 = vadd.f32 %v1386, %v1392
  %v1454 = vadd.f32 %v1387, %v1392
  %v1455 = vadd.f32 %v1388, %v1392
  %v1456 = vadd.f32 %v1389, %v1392
  %v1457 = vadd.f32 %v1390, %v1392
  %vm1458 = vcmp.ge.f32.partialorder %v1394, 0.0
  %vm1459 = vcmp.ge.f32.partialorder %v1395, 0.0
  %vm1460 = vcmp.ge.f32.partialorder %v1396, 0.0
  %vm1461 = vcmp.ge.f32.partialorder %v1397, 0.0
  %vm1462 = vcmp.ge.f32.partialorder %v1398, 0.0
  %vm1463 = vcmp.ge.f32.partialorder %v1399, 0.0
  %vm1464 = vcmp.ge.f32.partialorder %v1400, 0.0
  %vm1465 = vcmp.ge.f32.partialorder %v1401, 0.0
  %vm1466 = vcmp.ge.f32.partialorder %v1402, 0.0
  %vm1467 = vcmp.ge.f32.partialorder %v1403, 0.0
  %vm1468 = vcmp.ge.f32.partialorder %v1404, 0.0
  %vm1469 = vcmp.ge.f32.partialorder %v1405, 0.0
  %vm1470 = vcmp.ge.f32.partialorder %v1406, 0.0
  %vm1471 = vcmp.ge.f32.partialorder %v1407, 0.0
  %vm1472 = vcmp.ge.f32.partialorder %v1408, 0.0
  %vm1473 = vcmp.ge.f32.partialorder %v1409, 0.0
  %vm1474 = vcmp.ge.f32.partialorder %v1410, 0.0
  %vm1475 = vcmp.ge.f32.partialorder %v1411, 0.0
  %vm1476 = vcmp.ge.f32.partialorder %v1412, 0.0
  %vm1477 = vcmp.ge.f32.partialorder %v1413, 0.0
  %vm1478 = vcmp.ge.f32.partialorder %v1414, 0.0
  %vm1479 = vcmp.ge.f32.partialorder %v1415, 0.0
  %vm1480 = vcmp.ge.f32.partialorder %v1416, 0.0
  %vm1481 = vcmp.ge.f32.partialorder %v1417, 0.0
  %vm1482 = vcmp.ge.f32.partialorder %v1418, 0.0
  %vm1483 = vcmp.ge.f32.partialorder %v1419, 0.0
  %vm1484 = vcmp.ge.f32.partialorder %v1420, 0.0
  %vm1485 = vcmp.ge.f32.partialorder %v1421, 0.0
  %vm1486 = vcmp.ge.f32.partialorder %v1422, 0.0
  %vm1487 = vcmp.ge.f32.partialorder %v1423, 0.0
  %vm1488 = vcmp.ge.f32.partialorder %v1424, 0.0
  %vm1489 = vcmp.ge.f32.partialorder %v1425, 0.0
  %vm1490 = vcmp.ge.f32.partialorder %v1426, 0.0
  %vm1491 = vcmp.ge.f32.partialorder %v1427, 0.0
  %vm1492 = vcmp.ge.f32.partialorder %v1428, 0.0
  %vm1493 = vcmp.ge.f32.partialorder %v1429, 0.0
  %vm1494 = vcmp.ge.f32.partialorder %v1430, 0.0
  %vm1495 = vcmp.ge.f32.partialorder %v1431, 0.0
  %vm1496 = vcmp.ge.f32.partialorder %v1432, 0.0
  %vm1497 = vcmp.ge.f32.partialorder %v1433, 0.0
  %vm1498 = vcmp.ge.f32.partialorder %v1434, 0.0
  %vm1499 = vcmp.ge.f32.partialorder %v1435, 0.0
  %vm1500 = vcmp.ge.f32.partialorder %v1436, 0.0
  %vm1501 = vcmp.ge.f32.partialorder %v1437, 0.0
  %vm1502 = vcmp.ge.f32.partialorder %v1438, 0.0
  %vm1503 = vcmp.ge.f32.partialorder %v1439, 0.0
  %vm1504 = vcmp.ge.f32.partialorder %v1440, 0.0
  %vm1505 = vcmp.ge.f32.partialorder %v1441, 0.0
  %vm1506 = vcmp.ge.f32.partialorder %v1442, 0.0
  %vm1507 = vcmp.ge.f32.partialorder %v1443, 0.0
  %vm1508 = vcmp.ge.f32.partialorder %v1444, 0.0
  %vm1509 = vcmp.ge.f32.partialorder %v1445, 0.0
  %vm1510 = vcmp.ge.f32.partialorder %v1446, 0.0
  %vm1511 = vcmp.ge.f32.partialorder %v1447, 0.0
  %vm1512 = vcmp.ge.f32.partialorder %v1448, 0.0
  %vm1513 = vcmp.ge.f32.partialorder %v1449, 0.0
  %vm1514 = vcmp.ge.f32.partialorder %v1450, 0.0
  %vm1515 = vcmp.ge.f32.partialorder %v1451, 0.0
  %vm1516 = vcmp.ge.f32.partialorder %v1452, 0.0
  %vm1517 = vcmp.ge.f32.partialorder %v1453, 0.0
  %vm1518 = vcmp.ge.f32.partialorder %v1454, 0.0
  %vm1519 = vcmp.ge.f32.partialorder %v1455, 0.0
  %vm1520 = vcmp.ge.f32.partialorder %v1456, 0.0
  %vm1521 = vcmp.ge.f32.partialorder %v1457, 0.0
  %v1522 = vmul.f32 %v1394, 0.1
  %v1523 = vmul.f32 %v1395, 0.1
  %v1524 = vmul.f32 %v1396, 0.1
  %v1525 = vmul.f32 %v1397, 0.1
  %v1526 = vmul.f32 %v1398, 0.1
  %v1527 = vmul.f32 %v1399, 0.1
  %v1528 = vmul.f32 %v1400, 0.1
  %v1529 = vmul.f32 %v1401, 0.1
  %v1530 = vmul.f32 %v1402, 0.1
  %v1531 = vmul.f32 %v1403, 0.1
  %v1532 = vmul.f32 %v1404, 0.1
  %v1533 = vmul.f32 %v1405, 0.1
  %v1534 = vmul.f32 %v1406, 0.1
  %v1535 = vmul.f32 %v1407, 0.1
  %v1536 = vmul.f32 %v1408, 0.1
  %v1537 = vmul.f32 %v1409, 0.1
  %v1538 = vmul.f32 %v1410, 0.1
  %v1539 = vmul.f32 %v1411, 0.1
  %v1540 = vmul.f32 %v1412, 0.1
  %v1541 = vmul.f32 %v1413, 0.1
  %v1542 = vmul.f32 %v1414, 0.1
  %v1543 = vmul.f32 %v1415, 0.1
  %v1544 = vmul.f32 %v1416, 0.1
  %v1545 = vmul.f32 %v1417, 0.1
  %v1546 = vmul.f32 %v1418, 0.1
  %v1547 = vmul.f32 %v1419, 0.1
  %v1548 = vmul.f32 %v1420, 0.1
  %v1549 = vmul.f32 %v1421, 0.1
  %v1550 = vmul.f32 %v1422, 0.1
  %v1551 = vmul.f32 %v1423, 0.1
  %v1552 = vmul.f32 %v1424, 0.1
  %v1553 = vmul.f32 %v1425, 0.1
  %v1554 = vmul.f32 %v1426, 0.1
  %v1555 = vmul.f32 %v1427, 0.1
  %v1556 = vmul.f32 %v1428, 0.1
  %v1557 = vmul.f32 %v1429, 0.1
  %v1558 = vmul.f32 %v1430, 0.1
  %v1559 = vmul.f32 %v1431, 0.1
  %v1560 = vmul.f32 %v1432, 0.1
  %v1561 = vmul.f32 %v1433, 0.1
  %v1562 = vmul.f32 %v1434, 0.1
  %v1563 = vmul.f32 %v1435, 0.1
  %v1564 = vmul.f32 %v1436, 0.1
  %v1565 = vmul.f32 %v1437, 0.1
  %v1566 = vmul.f32 %v1438, 0.1
  %v1567 = vmul.f32 %v1439, 0.1
  %v1568 = vmul.f32 %v1440, 0.1
  %v1569 = vmul.f32 %v1441, 0.1
  %v1570 = vmul.f32 %v1442, 0.1
  %v1571 = vmul.f32 %v1443, 0.1
  %v1572 = vmul.f32 %v1444, 0.1
  %v1573 = vmul.f32 %v1445, 0.1
  %v1574 = vmul.f32 %v1446, 0.1
  %v1575 = vmul.f32 %v1447, 0.1
  %v1576 = vmul.f32 %v1448, 0.1
  %v1577 = vmul.f32 %v1449, 0.1
  %v1578 = vmul.f32 %v1450, 0.1
  %v1579 = vmul.f32 %v1451, 0.1
  %v1580 = vmul.f32 %v1452, 0.1
  %v1581 = vmul.f32 %v1453, 0.1
  %v1582 = vmul.f32 %v1454, 0.1
  %v1583 = vmul.f32 %v1455, 0.1
  %v1584 = vmul.f32 %v1456, 0.1
  %v1585 = vmul.f32 %v1457, 0.1
  %v1586 = vsel %vm1458, %v1394, %v1522
  %v1587 = vsel %vm1459, %v1395, %v1523
  %v1588 = vsel %vm1460, %v1396, %v1524
  %v1589 = vsel %vm1461, %v1397, %v1525
  %v1590 = vsel %vm1462, %v1398, %v1526
  %v1591 = vsel %vm1463, %v1399, %v1527
  %v1592 = vsel %vm1464, %v1400, %v1528
  %v1593 = vsel %vm1465, %v1401, %v1529
  %v1594 = vsel %vm1466, %v1402, %v1530
  %v1595 = vsel %vm1467, %v1403, %v1531
  %v1596 = vsel %vm1468, %v1404, %v1532
  %v1597 = vsel %vm1469, %v1405, %v1533
  %v1598 = vsel %vm1470, %v1406, %v1534
  %v1599 = vsel %vm1471, %v1407, %v1535
  %v1600 = vsel %vm1472, %v1408, %v1536
  %v1601 = vsel %vm1473, %v1409, %v1537
  %v1602 = vsel %vm1474, %v1410, %v1538
  %v1603 = vsel %vm1475, %v1411, %v1539
  %v1604 = vsel %vm1476, %v1412, %v1540
  %v1605 = vsel %vm1477, %v1413, %v1541
  %v1606 = vsel %vm1478, %v1414, %v1542
  %v1607 = vsel %vm1479, %v1415, %v1543
  %v1608 = vsel %vm1480, %v1416, %v1544
  %v1609 = vsel %vm1481, %v1417, %v1545
  %v1610 = vsel %vm1482, %v1418, %v1546
  %v1611 = vsel %vm1483, %v1419, %v1547
  %v1612 = vsel %vm1484, %v1420, %v1548
  %v1613 = vsel %vm1485, %v1421, %v1549
  %v1614 = vsel %vm1486, %v1422, %v1550
  %v1615 = vsel %vm1487, %v1423, %v1551
  %v1616 = vsel %vm1488, %v1424, %v1552
  %v1617 = vsel %vm1489, %v1425, %v1553
  %v1618 = vsel %vm1490, %v1426, %v1554
  %v1619 = vsel %vm1491, %v1427, %v1555
  %v1620 = vsel %vm1492, %v1428, %v1556
  %v1621 = vsel %vm1493, %v1429, %v1557
  %v1622 = vsel %vm1494, %v1430, %v1558
  %v1623 = vsel %vm1495, %v1431, %v1559
  %v1624 = vsel %vm1496, %v1432, %v1560
  %v1625 = vsel %vm1497, %v1433, %v1561
  %v1626 = vsel %vm1498, %v1434, %v1562
  %v1627 = vsel %vm1499, %v1435, %v1563
  %v1628 = vsel %vm1500, %v1436, %v1564
  %v1629 = vsel %vm1501, %v1437, %v1565
  %v1630 = vsel %vm1502, %v1438, %v1566
  %v1631 = vsel %vm1503, %v1439, %v1567
  %v1632 = vsel %vm1504, %v1440, %v1568
  %v1633 = vsel %vm1505, %v1441, %v1569
  %v1634 = vsel %vm1506, %v1442, %v1570
  %v1635 = vsel %vm1507, %v1443, %v1571
  %v1636 = vsel %vm1508, %v1444, %v1572
  %v1637 = vsel %vm1509, %v1445, %v1573
  %v1638 = vsel %vm1510, %v1446, %v1574
  %v1639 = vsel %vm1511, %v1447, %v1575
  %v1640 = vsel %vm1512, %v1448, %v1576
  %v1641 = vsel %vm1513, %v1449, %v1577
  %v1642 = vsel %vm1514, %v1450, %v1578
  %v1643 = vsel %vm1515, %v1451, %v1579
  %v1644 = vsel %vm1516, %v1452, %v1580
  %v1645 = vsel %vm1517, %v1453, %v1581
  %v1646 = vsel %vm1518, %v1454, %v1582
  %v1647 = vsel %vm1519, %v1455, %v1583
  %v1648 = vsel %vm1520, %v1456, %v1584
  %v1649 = vsel %vm1521, %v1457, %v1585
  %1650 = vst [vmem:[%s5] sm:$0xff] %v1586
  %1651 = vst [vmem:[%s5 + $0x8] sm:$0xff] %v1587
  %1652 = vst [vmem:[%s5 + $0x10] sm:$0xff] %v1588
  %1653 = vst [vmem:[%s5 + $0x18] sm:$0xff] %v1589
  %1654 = vst [vmem:[%s5 + $0x20] sm:$0xff] %v1590
  %1655 = vst [vmem:[%s5 + $0x28] sm:$0xff] %v1591
  %1656 = vst [vmem:[%s5 + $0x30] sm:$0xff] %v1592
  %1657 = vst [vmem:[%s5 + $0x38] sm:$0xff] %v1593
  %1658 = vst [vmem:[%s5 + $0x40] sm:$0xff] %v1594
  %1659 = vst [vmem:[%s5 + $0x48] sm:$0xff] %v1595
  %1660 = vst [vmem:[%s5 + $0x50] sm:$0xff] %v1596
  %1661 = vst [vmem:[%s5 + $0x58] sm:$0xff] %v1597
  %1662 = vst [vmem:[%s5 + $0x60] sm:$0xff] %v1598
  %1663 = vst [vmem:[%s5 + $0x68] sm:$0xff] %v1599
  %1664 = vst [vmem:[%s5 + $0x70] sm:$0xff] %v1600
  %1665 = vst [vmem:[%s5 + $0x78] sm:$0xff] %v1601
  %1666 = vst [vmem:[%s5 + $0x80] sm:$0xff] %v1602
  %1667 = vst [vmem:[%s5 + $0x88] sm:$0xff] %v1603
  %1668 = vst [vmem:[%s5 + $0x90] sm:$0xff] %v1604
  %1669 = vst [vmem:[%s5 + $0x98] sm:$0xff] %v1605
  %1670 = vst [vmem:[%s5 + $0xa0] sm:$0xff] %v1606
  %1671 = vst [vmem:[%s5 + $0xa8] sm:$0xff] %v1607
  %1672 = vst [vmem:[%s5 + $0xb0] sm:$0xff] %v1608
  %1673 = vst [vmem:[%s5 + $0xb8] sm:$0xff] %v1609
  %1674 = vst [vmem:[%s5 + $0xc0] sm:$0xff] %v1610
  %1675 = vst [vmem:[%s5 + $0xc8] sm:$0xff] %v1611
  %1676 = vst [vmem:[%s5 + $0xd0] sm:$0xff] %v1612
  %1677 = vst [vmem:[%s5 + $0xd8] sm:$0xff] %v1613
  %1678 = vst [vmem:[%s5 + $0xe0] sm:$0xff] %v1614
  %1679 = vst [vmem:[%s5 + $0xe8] sm:$0xff] %v1615
  %1680 = vst [vmem:[%s5 + $0xf0] sm:$0xff] %v1616
  %1681 = vst [vmem:[%s5 + $0xf8] sm:$0xff] %v1617
  %1682 = vst [vmem:[%s5 + $0x100] sm:$0xff] %v1618
  %1683 = vst [vmem:[%s5 + $0x108] sm:$0xff] %v1619
  %1684 = vst [vmem:[%s5 + $0x110] sm:$0xff] %v1620
  %1685 = vst [vmem:[%s5 + $0x118] sm:$0xff] %v1621
  %1686 = vst [vmem:[%s5 + $0x120] sm:$0xff] %v1622
  %1687 = vst [vmem:[%s5 + $0x128] sm:$0xff] %v1623
  %1688 = vst [vmem:[%s5 + $0x130] sm:$0xff] %v1624
  %1689 = vst [vmem:[%s5 + $0x138] sm:$0xff] %v1625
  %1690 = vst [vmem:[%s5 + $0x140] sm:$0xff] %v1626
  %1691 = vst [vmem:[%s5 + $0x148] sm:$0xff] %v1627
  %1692 = vst [vmem:[%s5 + $0x150] sm:$0xff] %v1628
  %1693 = vst [vmem:[%s5 + $0x158] sm:$0xff] %v1629
  %1694 = vst [vmem:[%s5 + $0x160] sm:$0xff] %v1630
  %1695 = vst [vmem:[%s5 + $0x168] sm:$0xff] %v1631
  %1696 = vst [vmem:[%s5 + $0x170] sm:$0xff] %v1632
  %1697 = vst [vmem:[%s5 + $0x178] sm:$0xff] %v1633
  %1698 = vst [vmem:[%s5 + $0x180] sm:$0xff] %v1634
  %1699 = vst [vmem:[%s5 + $0x188] sm:$0xff] %v1635
  %1700 = vst [vmem:[%s5 + $0x190] sm:$0xff] %v1636
  %1701 = vst [vmem:[%s5 + $0x198] sm:$0xff] %v1637
  %1702 = vst [vmem:[%s5 + $0x1a0] sm:$0xff] %v1638
  %1703 = vst [vmem:[%s5 + $0x1a8] sm:$0xff] %v1639
  %1704 = vst [vmem:[%s5 + $0x1b0] sm:$0xff] %v1640
  %1705 = vst [vmem:[%s5 + $0x1b8] sm:$0xff] %v1641
  %1706 = vst [vmem:[%s5 + $0x1c0] sm:$0xff] %v1642
  %1707 = vst [vmem:[%s5 + $0x1c8] sm:$0xff] %v1643
  %1708 = vst [vmem:[%s5 + $0x1d0] sm:$0xff] %v1644
  %1709 = vst [vmem:[%s5 + $0x1d8] sm:$0xff] %v1645
  %1710 = vst [vmem:[%s5 + $0x1e0] sm:$0xff] %v1646
  %1711 = vst [vmem:[%s5 + $0x1e8] sm:$0xff] %v1647
  %1712 = vst [vmem:[%s5 + $0x1f0] sm:$0xff] %v1648
  %1713 = vst [vmem:[%s5 + $0x1f8] sm:$0xff] %v1649
  // Predicated region
  $region22: #{vqvae_forward.12} parent=0 // pred_check
    _
  $region23: #{vqvae_forward.12} parent=0 // pred_check_branch
    %1715 = sbr.rel (0) target = $region25
  $region24: #{vqvae_forward.12} parent=0 // pred_region
    _
  $region25: #{vqvae_forward.12} parent=0 // pred_fallthru
    _
  // Predicated region
  $region26: #{vqvae_forward.12} parent=0 // pred_check
    _
  $region27: #{vqvae_forward.12} parent=0 // pred_check_branch
    %1717 = sbr.rel (0) target = $region29
  $region28: #{vqvae_forward.12} parent=0 // pred_region
    _
  $region29: #{vqvae_forward.12} parent=0 // pred_fallthru
    _

// kernel: vqvae_forward.13
$region0: #{vqvae_forward.13}
  #allocation0 [shape = 'u32[]', space=smem, size = 0x4, offset = 0x4, fixed_abs, tag = 'smem constant byte address 0x4 - core index']
  #allocation1 [shape = 'u32[72,128]{1,0:T(1,128)}', space=vmem, size = 0x9000, scoped, tag = 'internal scratch']
  %s0 = inlined_call_operand.vmem [shape: f32[512,288], index: 0, kind: input, shape index: {}]
  %s1 = inlined_call_operand.vmem [shape: f32[288,128], index: 1, kind: input, shape index: {}]
  %s2 = inlined_call_operand.vmem [shape: f32[1,128], index: 2, kind: input, shape index: {}]
  %s3 = inlined_call_operand.vmem [shape: f32[512,128], index: 3, kind: output, shape index: {}]
  %s4 = sld [smem:[#allocation0]]
  $region45: #{vqvae_forward.13} parent=0
    _
  %s6 = ssub.s32 1, %s4
  %s7 = scalar_select 0, %s6, %s4
  loop: start=0, step=1, limit=4
  $region2: #{vqvae_forward.13} parent=0 // loop_pre_header
    _
  $region3: #{vqvae_forward.13} parent=0 // loop_header
    %s9 = sphi 0, %s13
    %p10 = scmp.ge.s32.totalorder %s9, 4
    %s19 = sphi 0, %s21
    %s22 = sphi 0, %s19
    %s23 = sphi 0, %s22
    %s39 = sphi 0, %s23
    %s43 = sphi 0, %s43
    %s45 = sphi 0, %s43
    %s46 = sphi 0, %s45
    %s60 = sphi 0, %s46
    %s64 = sphi 0, %s64
    %s66 = sphi 0, %s64
    %s67 = sphi 0, %s66
    %s81 = sphi 0, %s67
    %s87 = sphi 0, %s89
    %s90 = sphi 0, %s87
    %s91 = sphi 0, %s90
    %s107 = sphi 0, %s91
  $region4: #{vqvae_forward.13} parent=0 // loop_header_branch
    %12 = sbr.rel (%p10) target = $region8
  $region5: #{vqvae_forward.13} parent=0 // loop_body
    %s14 = ssub.s32 %s9, 1
    %s15 = ssub.s32 %s9, 2
    %s16 = sadd.s32 %s9, 1
    %s17 = ssub.s32 %s9, %s16
    %p18 = scmp.eq.s32.totalorder %s17, 0
    %s20 = sadd.s32 %s19, 1
    %s21 = scalar_select %p18, %s19, %s20
    %p24 = pneg %p18
    %p25 = scmp.eq.s32.totalorder %s9, 1
    %p26 = por %p24, %p25
    %p27 = scmp.ne.s32.totalorder %s19, %s22
    %p28 = scmp.eq.s32.totalorder %s9, 0
    %p29 = por %p27, %p28
    %p30 = scmp.ne.s32.totalorder %s19, %s22
    %p31 = scmp.eq.s32.totalorder %s14, 1
    %p32 = por %p30, %p31
    %p33 = scmp.ne.s32.totalorder %s22, %s23
    %p34 = scmp.eq.s32.totalorder %s14, 0
    %p35 = por %p33, %p34
    %p36 = scmp.ne.s32.totalorder %s22, %s23
    %p37 = scmp.eq.s32.totalorder %s15, 1
    %p38 = por %p36, %p37
    %p40 = scmp.ne.s32.totalorder %s23, %s39
    %p41 = scmp.eq.s32.totalorder %s15, 0
    %p42 = por %p40, %p41
    %s44 = sadd.s32 %s43, 1
    %p47 = scmp.eq.s32.totalorder %s9, 1
    %p48 = scmp.ne.s32.totalorder %s43, %s45
    %p49 = scmp.eq.s32.totalorder %s9, 0
    %p50 = por %p48, %p49
    %p51 = scmp.ne.s32.totalorder %s43, %s45
    %p52 = scmp.eq.s32.totalorder %s14, 1
    %p53 = por %p51, %p52
    %p54 = scmp.ne.s32.totalorder %s45, %s46
    %p55 = scmp.eq.s32.totalorder %s14, 0
    %p56 = por %p54, %p55
    %p57 = scmp.ne.s32.totalorder %s45, %s46
    %p58 = scmp.eq.s32.totalorder %s15, 1
    %p59 = por %p57, %p58
    %p61 = scmp.ne.s32.totalorder %s46, %s60
    %p62 = scmp.eq.s32.totalorder %s15, 0
    %p63 = por %p61, %p62
    %s65 = sadd.s32 %s64, 1
    %p68 = scmp.eq.s32.totalorder %s9, 1
    %p69 = scmp.ne.s32.totalorder %s64, %s66
    %p70 = scmp.eq.s32.totalorder %s9, 0
    %p71 = por %p69, %p70
    %p72 = scmp.ne.s32.totalorder %s64, %s66
    %p73 = scmp.eq.s32.totalorder %s14, 1
    %p74 = por %p72, %p73
    %p75 = scmp.ne.s32.totalorder %s66, %s67
    %p76 = scmp.eq.s32.totalorder %s14, 0
    %p77 = por %p75, %p76
    %p78 = scmp.ne.s32.totalorder %s66, %s67
    %p79 = scmp.eq.s32.totalorder %s15, 1
    %p80 = por %p78, %p79
    %p82 = scmp.ne.s32.totalorder %s67, %s81
    %p83 = scmp.eq.s32.totalorder %s15, 0
    %p84 = por %p82, %p83
    %s85 = ssub.s32 %s9, %s16
    %p86 = scmp.eq.s32.totalorder %s85, 0
    %s88 = sadd.s32 %s87, 1
    %s89 = scalar_select %p86, %s87, %s88
    %p92 = pneg %p86
    %p93 = scmp.eq.s32.totalorder %s9, 1
    %p94 = por %p92, %p93
    %p95 = scmp.ne.s32.totalorder %s87, %s90
    %p96 = scmp.eq.s32.totalorder %s9, 0
    %p97 = por %p95, %p96
    %p98 = scmp.ne.s32.totalorder %s87, %s90
    %p99 = scmp.eq.s32.totalorder %s14, 1
    %p100 = por %p98, %p99
    %p101 = scmp.ne.s32.totalorder %s90, %s91
    %p102 = scmp.eq.s32.totalorder %s14, 0
    %p103 = por %p101, %p102
    %p104 = scmp.ne.s32.totalorder %s90, %s91
    %p105 = scmp.eq.s32.totalorder %s15, 1
    %p106 = por %p104, %p105
    %p108 = scmp.ne.s32.totalorder %s91, %s107
    %p109 = scmp.eq.s32.totalorder %s15, 0
    %p110 = por %p108, %p109
    %p111 = scmp.le.s32.totalorder 1, %s9
    %p112 = scmp.lt.s32.totalorder %s9, 3
    %p113 = pnand %p111, %p112
    %p114 = pneg %p113
    // Predicated region
    $region9: #{vqvae_forward.13} parent=5 // pred_check
      _
    $region10: #{vqvae_forward.13} parent=5 // pred_check_branch
      %116 = sbr.rel (%p113) target = $region12
    $region11: #{vqvae_forward.13} parent=5 // pred_region
      %s117 = ssub.s32 %s9, 1
      // Predicated region
      $region13: #{vqvae_forward.13} parent=11 // pred_check
        %p118 = pneg %p56
      $region14: #{vqvae_forward.13} parent=11 // pred_check_branch
        %120 = sbr.rel (%p118) target = $region16
      $region15: #{vqvae_forward.13} parent=11 // pred_region
        _
      $region16: #{vqvae_forward.13} parent=11 // pred_fallthru
        _
      // Predicated region
      $region17: #{vqvae_forward.13} parent=11 // pred_check
        %p121 = pneg %p77
      $region18: #{vqvae_forward.13} parent=11 // pred_check_branch
        %123 = sbr.rel (%p121) target = $region20
      $region19: #{vqvae_forward.13} parent=11 // pred_region
        _
      $region20: #{vqvae_forward.13} parent=11 // pred_fallthru
        _
    $region12: #{vqvae_forward.13} parent=5 // pred_fallthru
      _
    %p124 = scmp.lt.s32.totalorder %s9, 2
    // Predicated region
    $region21: #{vqvae_forward.13} parent=5 // pred_check
      %p125 = pneg %p124
    $region22: #{vqvae_forward.13} parent=5 // pred_check_branch
      %127 = sbr.rel (%p125) target = $region24
    $region23: #{vqvae_forward.13} parent=5 // pred_region
      // Predicated region
      $region25: #{vqvae_forward.13} parent=23 // pred_check
        %p128 = pneg %p29
      $region26: #{vqvae_forward.13} parent=23 // pred_check_branch
        %130 = sbr.rel (%p128) target = $region28
      $region27: #{vqvae_forward.13} parent=23 // pred_region
        %s131 = smul.u32 32, %s9
        %p132 = scmp.lt.s32.totalorder %s131, 63
        %s133 = scalar_select %p132, %s131, 63
        %s134 = smul.addr %s133, 3
        %s135 = smul.addr %s134, 8
        %s136 = scalar_lea.vmem %s0, %s135
        %s137 = smul.u32 32, %s9
      $region28: #{vqvae_forward.13} parent=23 // pred_fallthru
        _
    $region24: #{vqvae_forward.13} parent=5 // pred_fallthru
      _
    %p138 = scmp.le.s32.totalorder 1, %s9
    %p139 = scmp.lt.s32.totalorder %s9, 3
    %p140 = pnand %p138, %p139
    %p141 = pneg %p140
    // Predicated region
    $region29: #{vqvae_forward.13} parent=5 // pred_check
      _
    $region30: #{vqvae_forward.13} parent=5 // pred_check_branch
      %143 = sbr.rel (%p140) target = $region32
    $region31: #{vqvae_forward.13} parent=5 // pred_region
      %s144 = ssub.s32 %s9, 1
      %s145 = smul.u32 32, %s14
      %p146 = scmp.lt.s32.totalorder %s145, 63
      %s147 = scalar_select %p146, %s145, 63
      %s148 = smul.addr %s147, 3
      %s149 = smul.addr %s148, 8
      %s150 = scalar_lea.vmem %s0, %s149
      %p151 = pneg %p35
      %p152 = pneg %p32
      %p153 = pneg %p56
      %p154 = pneg %p53
      %p155 = pneg %p77
      %p156 = pneg %p74
      %p157 = pneg %p103
      %p158 = pneg %p100
      %s159 = smul.u32 32, %s14
      %p160 = scmp.lt.s32.totalorder %s159, 63
      %s161 = scalar_select %p160, %s159, 63
      %s162 = smul.addr %s161, 8
      %s163 = scalar_lea.vmem %s3, %s162
      %s164 = smul.u32 32, %s14
      %p165 = scmp.lt.s32.totalorder %s164, 63
      %s166 = scalar_select %p165, %s164, 63
      %s167 = smul.addr %s166, 3
      %s168 = smul.addr %s167, 8
      %s169 = scalar_lea.vmem %s0, %s168
      %s170 = smul.u32 32, %s14
      %s171 = smul.u32 32, %s14
      %p172 = scmp.lt.s32.totalorder %s171, 63
      %s173 = scalar_select %p172, %s171, 63
      %s174 = smul.addr %s173, 8
      %s175 = scalar_lea.vmem %s3, %s174
      %s176 = smul.u32 32, %s14
      %v177 = vld [vmem:[%s169] sm:$0xff]
      %v178 = vld [vmem:[%s169 + $0x8] sm:$0xff]
      %v179 = vld [vmem:[%s169 + $0x10] sm:$0xff]
      %v180 = vld [vmem:[%s169 + $0x18] sm:$0xff]
      %v181 = vld [vmem:[%s169 + $0x20] sm:$0xff]
      %v182 = vld [vmem:[%s169 + $0x28] sm:$0xff]
      %v183 = vld [vmem:[%s169 + $0x30] sm:$0xff]
      %v184 = vld [vmem:[%s169 + $0x38] sm:$0xff]
      %v185 = vld [vmem:[%s169 + $0x40] sm:$0xff]
      %v186 = vld [vmem:[%s169 + $0x48] sm:$0xff]
      %v187 = vld [vmem:[%s169 + $0x50] sm:$0xff]
      %v188 = vld [vmem:[%s169 + $0x58] sm:$0xff]
      %v189 = vld [vmem:[%s169 + $0x60] sm:$0xff]
      %v190 = vld [vmem:[%s169 + $0x68] sm:$0xff]
      %v191 = vld [vmem:[%s169 + $0x70] sm:$0xff]
      %v192 = vld [vmem:[%s169 + $0x78] sm:$0xff]
      %v193 = vld [vmem:[%s169 + $0x80] sm:$0xff]
      %v194 = vld [vmem:[%s169 + $0x88] sm:$0xff]
      %v195 = vld [vmem:[%s169 + $0x90] sm:$0xff]
      %v196 = vld [vmem:[%s169 + $0x98] sm:$0xff]
      %v197 = vld [vmem:[%s169 + $0xa0] sm:$0xff]
      %v198 = vld [vmem:[%s169 + $0xa8] sm:$0xff]
      %v199 = vld [vmem:[%s169 + $0xb0] sm:$0xff]
      %v200 = vld [vmem:[%s169 + $0xb8] sm:$0xff]
      %v201 = vld [vmem:[%s169 + $0xc0] sm:$0xff]
      %v202 = vld [vmem:[%s169 + $0xc8] sm:$0xff]
      %v203 = vld [vmem:[%s169 + $0xd0] sm:$0xff]
      %v204 = vld [vmem:[%s169 + $0xd8] sm:$0xff]
      %v205 = vld [vmem:[%s169 + $0xe0] sm:$0xff]
      %v206 = vld [vmem:[%s169 + $0xe8] sm:$0xff]
      %v207 = vld [vmem:[%s169 + $0xf0] sm:$0xff]
      %v208 = vld [vmem:[%s169 + $0xf8] sm:$0xff]
      %v209 = vld [vmem:[%s169 + $0x100] sm:$0xff]
      %v210 = vld [vmem:[%s169 + $0x108] sm:$0xff]
      %v211 = vld [vmem:[%s169 + $0x110] sm:$0xff]
      %v212 = vld [vmem:[%s169 + $0x118] sm:$0xff]
      %v213 = vld [vmem:[%s169 + $0x120] sm:$0xff]
      %v214 = vld [vmem:[%s169 + $0x128] sm:$0xff]
      %v215 = vld [vmem:[%s169 + $0x130] sm:$0xff]
      %v216 = vld [vmem:[%s169 + $0x138] sm:$0xff]
      %v217 = vld [vmem:[%s169 + $0x140] sm:$0xff]
      %v218 = vld [vmem:[%s169 + $0x148] sm:$0xff]
      %v219 = vld [vmem:[%s169 + $0x150] sm:$0xff]
      %v220 = vld [vmem:[%s169 + $0x158] sm:$0xff]
      %v221 = vld [vmem:[%s169 + $0x160] sm:$0xff]
      %v222 = vld [vmem:[%s169 + $0x168] sm:$0xff]
      %v223 = vld [vmem:[%s169 + $0x170] sm:$0xff]
      %v224 = vld [vmem:[%s169 + $0x178] sm:$0xff]
      %v225 = vld [vmem:[%s169 + $0x180] sm:$0xff]
      %v226 = vld [vmem:[%s169 + $0x188] sm:$0xff]
      %v227 = vld [vmem:[%s169 + $0x190] sm:$0xff]
      %v228 = vld [vmem:[%s169 + $0x198] sm:$0xff]
      %v229 = vld [vmem:[%s169 + $0x1a0] sm:$0xff]
      %v230 = vld [vmem:[%s169 + $0x1a8] sm:$0xff]
      %v231 = vld [vmem:[%s169 + $0x1b0] sm:$0xff]
      %v232 = vld [vmem:[%s169 + $0x1b8] sm:$0xff]
      %v233 = vld [vmem:[%s169 + $0x1c0] sm:$0xff]
      %v234 = vld [vmem:[%s169 + $0x1c8] sm:$0xff]
      %v235 = vld [vmem:[%s169 + $0x1d0] sm:$0xff]
      %v236 = vld [vmem:[%s169 + $0x1d8] sm:$0xff]
      %v237 = vld [vmem:[%s169 + $0x1e0] sm:$0xff]
      %v238 = vld [vmem:[%s169 + $0x1e8] sm:$0xff]
      %v239 = vld [vmem:[%s169 + $0x1f0] sm:$0xff]
      %v240 = vld [vmem:[%s169 + $0x1f8] sm:$0xff]
      %v241 = vld [vmem:[%s169 + $0x200] sm:$0xff]
      %v242 = vld [vmem:[%s169 + $0x208] sm:$0xff]
      %v243 = vld [vmem:[%s169 + $0x210] sm:$0xff]
      %v244 = vld [vmem:[%s169 + $0x218] sm:$0xff]
      %v245 = vld [vmem:[%s169 + $0x220] sm:$0xff]
      %v246 = vld [vmem:[%s169 + $0x228] sm:$0xff]
      %v247 = vld [vmem:[%s169 + $0x230] sm:$0xff]
      %v248 = vld [vmem:[%s169 + $0x238] sm:$0xff]
      %v249 = vld [vmem:[%s169 + $0x240] sm:$0xff]
      %v250 = vld [vmem:[%s169 + $0x248] sm:$0xff]
      %v251 = vld [vmem:[%s169 + $0x250] sm:$0xff]
      %v252 = vld [vmem:[%s169 + $0x258] sm:$0xff]
      %v253 = vld [vmem:[%s169 + $0x260] sm:$0xff]
      %v254 = vld [vmem:[%s169 + $0x268] sm:$0xff]
      %v255 = vld [vmem:[%s169 + $0x270] sm:$0xff]
      %v256 = vld [vmem:[%s169 + $0x278] sm:$0xff]
      %v257 = vld [vmem:[%s169 + $0x280] sm:$0xff]
      %v258 = vld [vmem:[%s169 + $0x288] sm:$0xff]
      %v259 = vld [vmem:[%s169 + $0x290] sm:$0xff]
      %v260 = vld [vmem:[%s169 + $0x298] sm:$0xff]
      %v261 = vld [vmem:[%s169 + $0x2a0] sm:$0xff]
      %v262 = vld [vmem:[%s169 + $0x2a8] sm:$0xff]
      %v263 = vld [vmem:[%s169 + $0x2b0] sm:$0xff]
      %v264 = vld [vmem:[%s169 + $0x2b8] sm:$0xff]
      %v265 = vld [vmem:[%s169 + $0x2c0] sm:$0xff]
      %v266 = vld [vmem:[%s169 + $0x2c8] sm:$0xff]
      %v267 = vld [vmem:[%s169 + $0x2d0] sm:$0xff]
      %v268 = vld [vmem:[%s169 + $0x2d8] sm:$0xff]
      %v269 = vld [vmem:[%s169 + $0x2e0] sm:$0xff]
      %v270 = vld [vmem:[%s169 + $0x2e8] sm:$0xff]
      %v271 = vld [vmem:[%s169 + $0x2f0] sm:$0xff]
      %v272 = vld [vmem:[%s169 + $0x2f8] sm:$0xff]
      %v273 = vld [vmem:[%s1] sm:$0xff]
      %v274 = vld [vmem:[%s1 + $0x8] sm:$0xff]
      %v275 = vld [vmem:[%s1 + $0x10] sm:$0xff]
      %v276 = vld [vmem:[%s1 + $0x18] sm:$0xff]
      %v277 = vld [vmem:[%s1 + $0x20] sm:$0xff]
      %v278 = vld [vmem:[%s1 + $0x28] sm:$0xff]
      %v279 = vld [vmem:[%s1 + $0x30] sm:$0xff]
      %v280 = vld [vmem:[%s1 + $0x38] sm:$0xff]
      %v281 = vld [vmem:[%s1 + $0x40] sm:$0xff]
      %v282 = vld [vmem:[%s1 + $0x48] sm:$0xff]
      %v283 = vld [vmem:[%s1 + $0x50] sm:$0xff]
      %v284 = vld [vmem:[%s1 + $0x58] sm:$0xff]
      %v285 = vld [vmem:[%s1 + $0x60] sm:$0xff]
      %v286 = vld [vmem:[%s1 + $0x68] sm:$0xff]
      %v287 = vld [vmem:[%s1 + $0x70] sm:$0xff]
      %v288 = vld [vmem:[%s1 + $0x78] sm:$0xff]
      %v289 = vld [vmem:[%s1 + $0x80] sm:$0xff]
      %v290 = vld [vmem:[%s1 + $0x88] sm:$0xff]
      %v291 = vld [vmem:[%s1 + $0x90] sm:$0xff]
      %v292 = vld [vmem:[%s1 + $0x98] sm:$0xff]
      %v293 = vld [vmem:[%s1 + $0xa0] sm:$0xff]
      %v294 = vld [vmem:[%s1 + $0xa8] sm:$0xff]
      %v295 = vld [vmem:[%s1 + $0xb0] sm:$0xff]
      %v296 = vld [vmem:[%s1 + $0xb8] sm:$0xff]
      %v297 = vld [vmem:[%s1 + $0xc0] sm:$0xff]
      %v298 = vld [vmem:[%s1 + $0xc8] sm:$0xff]
      %v299 = vld [vmem:[%s1 + $0xd0] sm:$0xff]
      %v300 = vld [vmem:[%s1 + $0xd8] sm:$0xff]
      %v301 = vld [vmem:[%s1 + $0xe0] sm:$0xff]
      %v302 = vld [vmem:[%s1 + $0xe8] sm:$0xff]
      %v303 = vld [vmem:[%s1 + $0xf0] sm:$0xff]
      %v304 = vld [vmem:[%s1 + $0xf8] sm:$0xff]
      %v305 = vld [vmem:[%s1 + $0x100] sm:$0xff]
      %v306 = vld [vmem:[%s1 + $0x108] sm:$0xff]
      %v307 = vld [vmem:[%s1 + $0x110] sm:$0xff]
      %v308 = vld [vmem:[%s1 + $0x118] sm:$0xff]
      %v309 = vld [vmem:[%s2] sm:$0x1]
      %v311 = vperm.slane %v309, 0
      %vm313 = vcmask 261120
      %v315 = vsel %vm313, %v179, 0
      %v318 = vsel %vm313, %v182, 0
      %v321 = vsel %vm313, %v185, 0
      %v324 = vsel %vm313, %v188, 0
      %v327 = vsel %vm313, %v191, 0
      %v330 = vsel %vm313, %v194, 0
      %v333 = vsel %vm313, %v197, 0
      %v336 = vsel %vm313, %v200, 0
      %v339 = vsel %vm313, %v203, 0
      %v342 = vsel %vm313, %v206, 0
      %v345 = vsel %vm313, %v209, 0
      %v348 = vsel %vm313, %v212, 0
      %v351 = vsel %vm313, %v215, 0
      %v354 = vsel %vm313, %v218, 0
      %v357 = vsel %vm313, %v221, 0
      %v360 = vsel %vm313, %v224, 0
      %v363 = vsel %vm313, %v227, 0
      %v366 = vsel %vm313, %v230, 0
      %v369 = vsel %vm313, %v233, 0
      %v372 = vsel %vm313, %v236, 0
      %v375 = vsel %vm313, %v239, 0
      %v378 = vsel %vm313, %v242, 0
      %v381 = vsel %vm313, %v245, 0
      %v384 = vsel %vm313, %v248, 0
      %v387 = vsel %vm313, %v251, 0
      %v390 = vsel %vm313, %v254, 0
      %v393 = vsel %vm313, %v257, 0
      %v396 = vsel %vm313, %v260, 0
      %v399 = vsel %vm313, %v263, 0
      %v402 = vsel %vm313, %v266, 0
      %v405 = vsel %vm313, %v269, 0
      %v408 = vsel %vm313, %v272, 0
      %410 = vmatpush.msra.mxu0 %v288
      %411 = vmatpush.msra.mxu0 %v287
      %412 = vmatpush.msra.mxu0 %v286
      %413 = vmatpush.msra.mxu0 %v285
      %414 = vmatpush.msra.mxu0 %v284
      %415 = vmatpush.msra.mxu0 %v283
      %416 = vmatpush.msra.mxu0 %v282
      %417 = vmatpush.msra.mxu0 %v281
      %418 = vmatpush.msra.mxu0 %v280
      %419 = vmatpush.msra.mxu0 %v279
      %420 = vmatpush.msra.mxu0 %v278
      %421 = vmatpush.msra.mxu0 %v277
      %422 = vmatpush.msra.mxu0 %v276
      %423 = vmatpush.msra.mxu0 %v275
      %424 = vmatpush.msra.mxu0 %v274
      %425 = vmatpush.msra.mxu0 %v273
      %426 = vmatmul.f32.gmra.mxu0 %v177
      %v427 = vpop.f32.mrf.mxu0
      %v428 = vadd.f32 %v311, %v427
      %429 = vmatmul.f32.gmra.mxu0 %v180
      %v430 = vpop.f32.mrf.mxu0
      %v431 = vadd.f32 %v311, %v430
      %432 = vmatmul.f32.gmra.mxu0 %v183
      %v433 = vpop.f32.mrf.mxu0
      %v434 = vadd.f32 %v311, %v433
      %435 = vmatmul.f32.gmra.mxu0 %v186
      %v436 = vpop.f32.mrf.mxu0
      %v437 = vadd.f32 %v311, %v436
      %438 = vmatmul.f32.gmra.mxu0 %v189
      %v439 = vpop.f32.mrf.mxu0
      %v440 = vadd.f32 %v311, %v439
      %441 = vmatmul.f32.gmra.mxu0 %v192
      %v442 = vpop.f32.mrf.mxu0
      %v443 = vadd.f32 %v311, %v442
      %444 = vmatmul.f32.gmra.mxu0 %v195
      %v445 = vpop.f32.mrf.mxu0
      %v446 = vadd.f32 %v311, %v445
      %447 = vmatmul.f32.gmra.mxu0 %v198
      %v448 = vpop.f32.mrf.mxu0
      %v449 = vadd.f32 %v311, %v448
      %450 = vmatmul.f32.gmra.mxu0 %v201
      %v451 = vpop.f32.mrf.mxu0
      %v452 = vadd.f32 %v311, %v451
      %453 = vmatmul.f32.gmra.mxu0 %v204
      %v454 = vpop.f32.mrf.mxu0
      %v455 = vadd.f32 %v311, %v454
      %456 = vmatmul.f32.gmra.mxu0 %v207
      %v457 = vpop.f32.mrf.mxu0
      %v458 = vadd.f32 %v311, %v457
      %459 = vmatmul.f32.gmra.mxu0 %v210
      %v460 = vpop.f32.mrf.mxu0
      %v461 = vadd.f32 %v311, %v460
      %462 = vmatmul.f32.gmra.mxu0 %v213
      %v463 = vpop.f32.mrf.mxu0
      %v464 = vadd.f32 %v311, %v463
      %465 = vmatmul.f32.gmra.mxu0 %v216
      %v466 = vpop.f32.mrf.mxu0
      %v467 = vadd.f32 %v311, %v466
      %468 = vmatmul.f32.gmra.mxu0 %v219
      %v469 = vpop.f32.mrf.mxu0
      %v470 = vadd.f32 %v311, %v469
      %471 = vmatmul.f32.gmra.mxu0 %v222
      %v472 = vpop.f32.mrf.mxu0
      %v473 = vadd.f32 %v311, %v472
      %474 = vmatmul.f32.gmra.mxu0 %v225
      %v475 = vpop.f32.mrf.mxu0
      %v476 = vadd.f32 %v311, %v475
      %477 = vmatmul.f32.gmra.mxu0 %v228
      %v478 = vpop.f32.mrf.mxu0
      %v479 = vadd.f32 %v311, %v478
      %480 = vmatmul.f32.gmra.mxu0 %v231
      %v481 = vpop.f32.mrf.mxu0
      %v482 = vadd.f32 %v311, %v481
      %483 = vmatmul.f32.gmra.mxu0 %v234
      %v484 = vpop.f32.mrf.mxu0
      %v485 = vadd.f32 %v311, %v484
      %486 = vmatmul.f32.gmra.mxu0 %v237
      %v487 = vpop.f32.mrf.mxu0
      %v488 = vadd.f32 %v311, %v487
      %489 = vmatmul.f32.gmra.mxu0 %v240
      %v490 = vpop.f32.mrf.mxu0
      %v491 = vadd.f32 %v311, %v490
      %492 = vmatmul.f32.gmra.mxu0 %v243
      %v493 = vpop.f32.mrf.mxu0
      %v494 = vadd.f32 %v311, %v493
      %495 = vmatmul.f32.gmra.mxu0 %v246
      %v496 = vpop.f32.mrf.mxu0
      %v497 = vadd.f32 %v311, %v496
      %498 = vmatmul.f32.gmra.mxu0 %v249
      %v499 = vpop.f32.mrf.mxu0
      %v500 = vadd.f32 %v311, %v499
      %501 = vmatmul.f32.gmra.mxu0 %v252
      %v502 = vpop.f32.mrf.mxu0
      %v503 = vadd.f32 %v311, %v502
      %504 = vmatmul.f32.gmra.mxu0 %v255
      %v505 = vpop.f32.mrf.mxu0
      %v506 = vadd.f32 %v311, %v505
      %507 = vmatmul.f32.gmra.mxu0 %v258
      %v508 = vpop.f32.mrf.mxu0
      %v509 = vadd.f32 %v311, %v508
      %510 = vmatmul.f32.gmra.mxu0 %v261
      %v511 = vpop.f32.mrf.mxu0
      %v512 = vadd.f32 %v311, %v511
      %513 = vmatmul.f32.gmra.mxu0 %v264
      %v514 = vpop.f32.mrf.mxu0
      %v515 = vadd.f32 %v311, %v514
      %516 = vmatmul.f32.gmra.mxu0 %v267
      %v517 = vpop.f32.mrf.mxu0
      %v518 = vadd.f32 %v311, %v517
      %519 = vmatmul.f32.gmra.mxu0 %v270
      %v520 = vpop.f32.mrf.mxu0
      %v521 = vadd.f32 %v311, %v520
      %522 = vdwg.mxu0
      %523 = vmatpush.msra.mxu0 %v304
      %524 = vmatpush.msra.mxu0 %v303
      %525 = vmatpush.msra.mxu0 %v302
      %526 = vmatpush.msra.mxu0 %v301
      %527 = vmatpush.msra.mxu0 %v300
      %528 = vmatpush.msra.mxu0 %v299
      %529 = vmatpush.msra.mxu0 %v298
      %530 = vmatpush.msra.mxu0 %v297
      %531 = vmatpush.msra.mxu0 %v296
      %532 = vmatpush.msra.mxu0 %v295
      %533 = vmatpush.msra.mxu0 %v294
      %534 = vmatpush.msra.mxu0 %v293
      %535 = vmatpush.msra.mxu0 %v292
      %536 = vmatpush.msra.mxu0 %v291
      %537 = vmatpush.msra.mxu0 %v290
      %538 = vmatpush.msra.mxu0 %v289
      %539 = vmatmul.f32.gmra.mxu0 %v178
      %v540 = vpop.f32.mrf.mxu0
      %v541 = vadd.f32 %v428, %v540
      %542 = vmatmul.f32.gmra.mxu0 %v181
      %v543 = vpop.f32.mrf.mxu0
      %v544 = vadd.f32 %v431, %v543
      %545 = vmatmul.f32.gmra.mxu0 %v184
      %v546 = vpop.f32.mrf.mxu0
      %v547 = vadd.f32 %v434, %v546
      %548 = vmatmul.f32.gmra.mxu0 %v187
      %v549 = vpop.f32.mrf.mxu0
      %v550 = vadd.f32 %v437, %v549
      %551 = vmatmul.f32.gmra.mxu0 %v190
      %v552 = vpop.f32.mrf.mxu0
      %v553 = vadd.f32 %v440, %v552
      %554 = vmatmul.f32.gmra.mxu0 %v193
      %v555 = vpop.f32.mrf.mxu0
      %v556 = vadd.f32 %v443, %v555
      %557 = vmatmul.f32.gmra.mxu0 %v196
      %v558 = vpop.f32.mrf.mxu0
      %v559 = vadd.f32 %v446, %v558
      %560 = vmatmul.f32.gmra.mxu0 %v199
      %v561 = vpop.f32.mrf.mxu0
      %v562 = vadd.f32 %v449, %v561
      %563 = vmatmul.f32.gmra.mxu0 %v202
      %v564 = vpop.f32.mrf.mxu0
      %v565 = vadd.f32 %v452, %v564
      %566 = vmatmul.f32.gmra.mxu0 %v205
      %v567 = vpop.f32.mrf.mxu0
      %v568 = vadd.f32 %v455, %v567
      %569 = vmatmul.f32.gmra.mxu0 %v208
      %v570 = vpop.f32.mrf.mxu0
      %v571 = vadd.f32 %v458, %v570
      %572 = vmatmul.f32.gmra.mxu0 %v211
      %v573 = vpop.f32.mrf.mxu0
      %v574 = vadd.f32 %v461, %v573
      %575 = vmatmul.f32.gmra.mxu0 %v214
      %v576 = vpop.f32.mrf.mxu0
      %v577 = vadd.f32 %v464, %v576
      %578 = vmatmul.f32.gmra.mxu0 %v217
      %v579 = vpop.f32.mrf.mxu0
      %v580 = vadd.f32 %v467, %v579
      %581 = vmatmul.f32.gmra.mxu0 %v220
      %v582 = vpop.f32.mrf.mxu0
      %v583 = vadd.f32 %v470, %v582
      %584 = vmatmul.f32.gmra.mxu0 %v223
      %v585 = vpop.f32.mrf.mxu0
      %v586 = vadd.f32 %v473, %v585
      %587 = vmatmul.f32.gmra.mxu0 %v226
      %v588 = vpop.f32.mrf.mxu0
      %v589 = vadd.f32 %v476, %v588
      %590 = vmatmul.f32.gmra.mxu0 %v229
      %v591 = vpop.f32.mrf.mxu0
      %v592 = vadd.f32 %v479, %v591
      %593 = vmatmul.f32.gmra.mxu0 %v232
      %v594 = vpop.f32.mrf.mxu0
      %v595 = vadd.f32 %v482, %v594
      %596 = vmatmul.f32.gmra.mxu0 %v235
      %v597 = vpop.f32.mrf.mxu0
      %v598 = vadd.f32 %v485, %v597
      %599 = vmatmul.f32.gmra.mxu0 %v238
      %v600 = vpop.f32.mrf.mxu0
      %v601 = vadd.f32 %v488, %v600
      %602 = vmatmul.f32.gmra.mxu0 %v241
      %v603 = vpop.f32.mrf.mxu0
      %v604 = vadd.f32 %v491, %v603
      %605 = vmatmul.f32.gmra.mxu0 %v244
      %v606 = vpop.f32.mrf.mxu0
      %v607 = vadd.f32 %v494, %v606
      %608 = vmatmul.f32.gmra.mxu0 %v247
      %v609 = vpop.f32.mrf.mxu0
      %v610 = vadd.f32 %v497, %v609
      %611 = vmatmul.f32.gmra.mxu0 %v250
      %v612 = vpop.f32.mrf.mxu0
      %v613 = vadd.f32 %v500, %v612
      %614 = vmatmul.f32.gmra.mxu0 %v253
      %v615 = vpop.f32.mrf.mxu0
      %v616 = vadd.f32 %v503, %v615
      %617 = vmatmul.f32.gmra.mxu0 %v256
      %v618 = vpop.f32.mrf.mxu0
      %v619 = vadd.f32 %v506, %v618
      %620 = vmatmul.f32.gmra.mxu0 %v259
      %v621 = vpop.f32.mrf.mxu0
      %v622 = vadd.f32 %v509, %v621
      %623 = vmatmul.f32.gmra.mxu0 %v262
      %v624 = vpop.f32.mrf.mxu0
      %v625 = vadd.f32 %v512, %v624
      %626 = vmatmul.f32.gmra.mxu0 %v265
      %v627 = vpop.f32.mrf.mxu0
      %v628 = vadd.f32 %v515, %v627
      %629 = vmatmul.f32.gmra.mxu0 %v268
      %v630 = vpop.f32.mrf.mxu0
      %v631 = vadd.f32 %v518, %v630
      %632 = vmatmul.f32.gmra.mxu0 %v271
      %v633 = vpop.f32.mrf.mxu0
      %v634 = vadd.f32 %v521, %v633
      %635 = vdwg.mxu0
      %636 = vmatpush.msra.mxu0 0.0
      %637 = vmatpush.msra.mxu0 0.0
      %638 = vmatpush.msra.mxu0 0.0
      %639 = vmatpush.msra.mxu0 0.0
      %640 = vmatpush.msra.mxu0 0.0
      %641 = vmatpush.msra.mxu0 0.0
      %642 = vmatpush.msra.mxu0 0.0
      %643 = vmatpush.msra.mxu0 0.0
      %644 = vmatpush.msra.mxu0 0.0
      %645 = vmatpush.msra.mxu0 0.0
      %646 = vmatpush.msra.mxu0 0.0
      %647 = vmatpush.msra.mxu0 0.0
      %648 = vmatpush.msra.mxu0 %v308
      %649 = vmatpush.msra.mxu0 %v307
      %650 = vmatpush.msra.mxu0 %v306
      %651 = vmatpush.msra.mxu0 %v305
      %652 = vmatmul.f32.gmra.mxu0 %v315
      %v653 = vpop.f32.mrf.mxu0
      %v654 = vadd.f32 %v541, %v653
      %655 = vmatmul.f32.gmra.mxu0 %v318
      %v656 = vpop.f32.mrf.mxu0
      %v657 = vadd.f32 %v544, %v656
      %658 = vmatmul.f32.gmra.mxu0 %v321
      %v659 = vpop.f32.mrf.mxu0
      %v660 = vadd.f32 %v547, %v659
      %661 = vmatmul.f32.gmra.mxu0 %v324
      %v662 = vpop.f32.mrf.mxu0
      %v663 = vadd.f32 %v550, %v662
      %664 = vmatmul.f32.gmra.mxu0 %v327
      %v665 = vpop.f32.mrf.mxu0
      %v666 = vadd.f32 %v553, %v665
      %667 = vmatmul.f32.gmra.mxu0 %v330
      %v668 = vpop.f32.mrf.mxu0
      %v669 = vadd.f32 %v556, %v668
      %670 = vmatmul.f32.gmra.mxu0 %v333
      %v671 = vpop.f32.mrf.mxu0
      %v672 = vadd.f32 %v559, %v671
      %673 = vmatmul.f32.gmra.mxu0 %v336
      %v674 = vpop.f32.mrf.mxu0
      %v675 = vadd.f32 %v562, %v674
      %676 = vmatmul.f32.gmra.mxu0 %v339
      %v677 = vpop.f32.mrf.mxu0
      %v678 = vadd.f32 %v565, %v677
      %679 = vmatmul.f32.gmra.mxu0 %v342
      %v680 = vpop.f32.mrf.mxu0
      %v681 = vadd.f32 %v568, %v680
      %682 = vmatmul.f32.gmra.mxu0 %v345
      %v683 = vpop.f32.mrf.mxu0
      %v684 = vadd.f32 %v571, %v683
      %685 = vmatmul.f32.gmra.mxu0 %v348
      %v686 = vpop.f32.mrf.mxu0
      %v687 = vadd.f32 %v574, %v686
      %688 = vmatmul.f32.gmra.mxu0 %v351
      %v689 = vpop.f32.mrf.mxu0
      %v690 = vadd.f32 %v577, %v689
      %691 = vmatmul.f32.gmra.mxu0 %v354
      %v692 = vpop.f32.mrf.mxu0
      %v693 = vadd.f32 %v580, %v692
      %694 = vmatmul.f32.gmra.mxu0 %v357
      %v695 = vpop.f32.mrf.mxu0
      %v696 = vadd.f32 %v583, %v695
      %697 = vmatmul.f32.gmra.mxu0 %v360
      %v698 = vpop.f32.mrf.mxu0
      %v699 = vadd.f32 %v586, %v698
      %700 = vmatmul.f32.gmra.mxu0 %v363
      %v701 = vpop.f32.mrf.mxu0
      %v702 = vadd.f32 %v589, %v701
      %703 = vmatmul.f32.gmra.mxu0 %v366
      %v704 = vpop.f32.mrf.mxu0
      %v705 = vadd.f32 %v592, %v704
      %706 = vmatmul.f32.gmra.mxu0 %v369
      %v707 = vpop.f32.mrf.mxu0
      %v708 = vadd.f32 %v595, %v707
      %709 = vmatmul.f32.gmra.mxu0 %v372
      %v710 = vpop.f32.mrf.mxu0
      %v711 = vadd.f32 %v598, %v710
      %712 = vmatmul.f32.gmra.mxu0 %v375
      %v713 = vpop.f32.mrf.mxu0
      %v714 = vadd.f32 %v601, %v713
      %715 = vmatmul.f32.gmra.mxu0 %v378
      %v716 = vpop.f32.mrf.mxu0
      %v717 = vadd.f32 %v604, %v716
      %718 = vmatmul.f32.gmra.mxu0 %v381
      %v719 = vpop.f32.mrf.mxu0
      %v720 = vadd.f32 %v607, %v719
      %721 = vmatmul.f32.gmra.mxu0 %v384
      %v722 = vpop.f32.mrf.mxu0
      %v723 = vadd.f32 %v610, %v722
      %724 = vmatmul.f32.gmra.mxu0 %v387
      %v725 = vpop.f32.mrf.mxu0
      %v726 = vadd.f32 %v613, %v725
      %727 = vmatmul.f32.gmra.mxu0 %v390
      %v728 = vpop.f32.mrf.mxu0
      %v729 = vadd.f32 %v616, %v728
      %730 = vmatmul.f32.gmra.mxu0 %v393
      %v731 = vpop.f32.mrf.mxu0
      %v732 = vadd.f32 %v619, %v731
      %733 = vmatmul.f32.gmra.mxu0 %v396
      %v734 = vpop.f32.mrf.mxu0
      %v735 = vadd.f32 %v622, %v734
      %736 = vmatmul.f32.gmra.mxu0 %v399
      %v737 = vpop.f32.mrf.mxu0
      %v738 = vadd.f32 %v625, %v737
      %739 = vmatmul.f32.gmra.mxu0 %v402
      %v740 = vpop.f32.mrf.mxu0
      %v741 = vadd.f32 %v628, %v740
      %742 = vmatmul.f32.gmra.mxu0 %v405
      %v743 = vpop.f32.mrf.mxu0
      %v744 = vadd.f32 %v631, %v743
      %745 = vmatmul.f32.gmra.mxu0 %v408
      %v746 = vpop.f32.mrf.mxu0
      %v747 = vadd.f32 %v634, %v746
      %748 = vdwg.mxu0
      %v749 = vtanh.pop %v654
      %v750 = vtanh.pop %v657
      %v751 = vtanh.pop %v660
      %v752 = vtanh.pop %v663
      %v753 = vtanh.pop %v666
      %v754 = vtanh.pop %v669
      %v755 = vtanh.pop %v672
      %v756 = vtanh.pop %v675
      %v757 = vtanh.pop %v678
      %v758 = vtanh.pop %v681
      %v759 = vtanh.pop %v684
      %v760 = vtanh.pop %v687
      %v761 = vtanh.pop %v690
      %v762 = vtanh.pop %v693
      %v763 = vtanh.pop %v696
      %v764 = vtanh.pop %v699
      %v765 = vtanh.pop %v702
      %v766 = vtanh.pop %v705
      %v767 = vtanh.pop %v708
      %v768 = vtanh.pop %v711
      %v769 = vtanh.pop %v714
      %v770 = vtanh.pop %v717
      %v771 = vtanh.pop %v720
      %v772 = vtanh.pop %v723
      %v773 = vtanh.pop %v726
      %v774 = vtanh.pop %v729
      %v775 = vtanh.pop %v732
      %v776 = vtanh.pop %v735
      %v777 = vtanh.pop %v738
      %v778 = vtanh.pop %v741
      %v779 = vtanh.pop %v744
      %v780 = vtanh.pop %v747
      %781 = vst [vmem:[%s175] sm:$0xff] %v749
      %782 = vst [vmem:[%s175 + $0x8] sm:$0xff] %v750
      %783 = vst [vmem:[%s175 + $0x10] sm:$0xff] %v751
      %784 = vst [vmem:[%s175 + $0x18] sm:$0xff] %v752
      %785 = vst [vmem:[%s175 + $0x20] sm:$0xff] %v753
      %786 = vst [vmem:[%s175 + $0x28] sm:$0xff] %v754
      %787 = vst [vmem:[%s175 + $0x30] sm:$0xff] %v755
      %788 = vst [vmem:[%s175 + $0x38] sm:$0xff] %v756
      %789 = vst [vmem:[%s175 + $0x40] sm:$0xff] %v757
      %790 = vst [vmem:[%s175 + $0x48] sm:$0xff] %v758
      %791 = vst [vmem:[%s175 + $0x50] sm:$0xff] %v759
      %792 = vst [vmem:[%s175 + $0x58] sm:$0xff] %v760
      %793 = vst [vmem:[%s175 + $0x60] sm:$0xff] %v761
      %794 = vst [vmem:[%s175 + $0x68] sm:$0xff] %v762
      %795 = vst [vmem:[%s175 + $0x70] sm:$0xff] %v763
      %796 = vst [vmem:[%s175 + $0x78] sm:$0xff] %v764
      %797 = vst [vmem:[%s175 + $0x80] sm:$0xff] %v765
      %798 = vst [vmem:[%s175 + $0x88] sm:$0xff] %v766
      %799 = vst [vmem:[%s175 + $0x90] sm:$0xff] %v767
      %800 = vst [vmem:[%s175 + $0x98] sm:$0xff] %v768
      %801 = vst [vmem:[%s175 + $0xa0] sm:$0xff] %v769
      %802 = vst [vmem:[%s175 + $0xa8] sm:$0xff] %v770
      %803 = vst [vmem:[%s175 + $0xb0] sm:$0xff] %v771
      %804 = vst [vmem:[%s175 + $0xb8] sm:$0xff] %v772
      %805 = vst [vmem:[%s175 + $0xc0] sm:$0xff] %v773
      %806 = vst [vmem:[%s175 + $0xc8] sm:$0xff] %v774
      %807 = vst [vmem:[%s175 + $0xd0] sm:$0xff] %v775
      %808 = vst [vmem:[%s175 + $0xd8] sm:$0xff] %v776
      %809 = vst [vmem:[%s175 + $0xe0] sm:$0xff] %v777
      %810 = vst [vmem:[%s175 + $0xe8] sm:$0xff] %v778
      %811 = vst [vmem:[%s175 + $0xf0] sm:$0xff] %v779
      %812 = vst [vmem:[%s175 + $0xf8] sm:$0xff] %v780
      %s813 = smul.u32 32, %s14
      %p814 = scmp.lt.s32.totalorder %s813, 63
      %s815 = scalar_select %p814, %s813, 63
      %s816 = smul.addr %s815, 8
      %s817 = scalar_lea.vmem %s3, %s816
      // Predicated region
      $region33: #{vqvae_forward.13} parent=31 // pred_check
        %p818 = pneg %p100
      $region34: #{vqvae_forward.13} parent=31 // pred_check_branch
        %820 = sbr.rel (%p818) target = $region36
      $region35: #{vqvae_forward.13} parent=31 // pred_region
        %s821 = smul.u32 32, %s14
      $region36: #{vqvae_forward.13} parent=31 // pred_fallthru
        _
    $region32: #{vqvae_forward.13} parent=5 // pred_fallthru
      _
    %p822 = scmp.le.s32.totalorder 2, %s9
    // Predicated region
    $region37: #{vqvae_forward.13} parent=5 // pred_check
      %p823 = pneg %p822
    $region38: #{vqvae_forward.13} parent=5 // pred_check_branch
      %825 = sbr.rel (%p823) target = $region40
    $region39: #{vqvae_forward.13} parent=5 // pred_region
      %s826 = ssub.s32 %s9, 2
      // Predicated region
      $region41: #{vqvae_forward.13} parent=39 // pred_check
        %p827 = pneg %p106
      $region42: #{vqvae_forward.13} parent=39 // pred_check_branch
        %829 = sbr.rel (%p827) target = $region44
      $region43: #{vqvae_forward.13} parent=39 // pred_region
        %s830 = smul.u32 32, %s15
        %p831 = scmp.lt.s32.totalorder %s830, 63
        %s832 = scalar_select %p831, %s830, 63
        %s833 = smul.addr %s832, 8
        %s834 = scalar_lea.vmem %s3, %s833
      $region44: #{vqvae_forward.13} parent=39 // pred_fallthru
        _
    $region40: #{vqvae_forward.13} parent=5 // pred_fallthru
      _
  $region6: #{vqvae_forward.13} parent=0 // loop_footer
    %s13 = sadd.s32 1, %s9
  $region7: #{vqvae_forward.13} parent=0 // loop_footer_branch
    %8 = sbr.rel target = $region3
  $region8: #{vqvae_forward.13} parent=0 // loop_exit
    _

</llo_original>
